<compile_context>
chip_gen: v7x
topology: tpu7x:2x2x1
jax: 0.10.0
libtpu: 0.0.40
codegen_flags: <defaults>
</compile_context>

<pallas_src>
import functools

import jax
import jax.numpy as jnp
from jax.experimental import pallas as pl
from jax.experimental.pallas import tpu as pltpu


def bottleneck_kernel(xc_ref, xt_ref, xb_ref,
                      w1_ref, s1_ref, b1_ref,
                      w2_ref, s2_ref, b2_ref,
                      w3_ref, s3_ref, b3_ref,
                      o_ref, *, tile_h, width_w):
    """One (image, row-tile) step of the fused Bottleneck.

    xc_ref: (1, tile_h, W, Cp) core rows (also the residual identity)
    xt_ref/xb_ref: (1, 1, W, Cp) halo rows above / below the tile
    w1: (Cp, Wp) bf16   w2: (3, 3, Wp, Wp) bf16 (HWIO)   w3: (Wp, Cp) bf16
    s*/b*: (1, C) f32 folded BN scale / bias
    o_ref: (1, tile_h, W, Cp)
    """
    W = width_w
    TH = tile_h
    Mout = TH * W
    PAD = 8  # zero rows so every 3x3 tap window is a static in-range slice

    Cp = xc_ref.shape[-1]
    Wp = w1_ref.shape[-1]

    t = pl.program_id(1)
    nt = pl.num_programs(1)
    top_gate = jnp.where(t == 0, 0.0, 1.0)        # zero-pad above first tile
    bot_gate = jnp.where(t == nt - 1, 0.0, 1.0)   # zero-pad below last tile

    xc = xc_ref[...].reshape(Mout, Cp)            # f32, residual + conv1 core
    xt = xt_ref[...].reshape(W, Cp)
    xb = xb_ref[...].reshape(W, Cp)

    w1 = w1_ref[...]
    s1 = s1_ref[...]
    b1 = b1_ref[...]

    def conv1_bn_relu(x2d):
        h = jnp.dot(x2d.astype(jnp.bfloat16), w1,
                    preferred_element_type=jnp.float32)
        return jnp.maximum(h * s1 + b1, 0.0)

    # --- conv1 (1x1) + bn1 + relu (core rows and the two halo rows) ---------
    h1_core = conv1_bn_relu(xc)                   # (Mout, Wp) f32
    h1_top = conv1_bn_relu(xt) * top_gate         # (W, Wp), 0 at image top
    h1_bot = conv1_bn_relu(xb) * bot_gate         # (W, Wp), 0 at image bottom

    # Flattened (row, col) layout with row halo + PAD zero rows on both ends.
    zpad = jnp.zeros((PAD, Wp), jnp.bfloat16)
    h1e = jnp.concatenate(
        [zpad,
         h1_top.astype(jnp.bfloat16),
         h1_core.astype(jnp.bfloat16),
         h1_bot.astype(jnp.bfloat16),
         zpad], axis=0)                           # (Mout + 2*W + 2*PAD, Wp)

    # --- conv2 (3x3, stride=1, pad=1) = 9 shifted bf16 matmuls --------------
    # Tap (dy, dx) for output flat index m reads h1e[PAD + m + dy*W + dx - 1].
    # The dx = 0 / 2 groups mask out the column that falls outside the image.
    col = jax.lax.broadcasted_iota(jnp.int32, (Mout, 1), 0) % W
    acc = jnp.zeros((Mout, Wp), jnp.float32)
    for dx in range(3):
        part = jnp.zeros((Mout, Wp), jnp.float32)
        for dy in range(3):
            start = PAD + dy * W + dx - 1
            src = h1e[start:start + Mout]
            part = part + jnp.dot(src, w2_ref[dy, dx],
                                  preferred_element_type=jnp.float32)
        if dx == 0:
            part = jnp.where(col == 0, 0.0, part)
        elif dx == 2:
            part = jnp.where(col == W - 1, 0.0, part)
        acc = acc + part
    h2 = jnp.maximum(acc * s2_ref[...] + b2_ref[...], 0.0)

    # --- conv3 (1x1) + bn3 + identity residual + relu -----------------------
    h3 = jnp.dot(h2.astype(jnp.bfloat16), w3_ref[...],
                 preferred_element_type=jnp.float32)
    out = jnp.maximum(h3 * s3_ref[...] + b3_ref[...] + xc, 0.0)
    o_ref[...] = out.reshape(1, TH, W, Cp)


def _round_up(x, m):
    return (x + m - 1) // m * m


def _pick_tile_h(H):
    for cand in (8, 4, 2, 1):
        if H % cand == 0:
            return cand
    return 1


def bottleneck_forward(x_nchw, params):
    """Bottleneck forward.  x_nchw: (N, Cin, H, W) float32 (PyTorch layout)."""
    N, Cin, H, W = x_nchw.shape
    width = params["w1"].shape[1]
    Cout = params["w3"].shape[1]
    assert Cin == Cout, "stride=1 / identity shortcut requires Cin == Cout"

    Cp = _round_up(Cin, 128)      # lane-dense channel padding
    Wp = _round_up(width, 128)
    tile_h = _pick_tile_h(H)
    nt = H // tile_h

    # NCHW -> NHWC, pad channels with zeros (zero-padded weights/BN keep the
    # extra channels identically zero, they are sliced off at the end).
    # TODO(synk): keep the whole network NHWC to avoid per-block transposes.
    x = jnp.transpose(x_nchw, (0, 2, 3, 1)).astype(jnp.float32)
    x = jnp.pad(x, ((0, 0), (0, 0), (0, 0), (0, Cp - Cin)))

    def pad_to(a, shape):
        return jnp.pad(a, [(0, tgt - s) for s, tgt in zip(a.shape, shape)])

    w1 = pad_to(params["w1"], (Cp, Wp)).astype(jnp.bfloat16)
    w2 = pad_to(params["w2"], (3, 3, Wp, Wp)).astype(jnp.bfloat16)
    w3 = pad_to(params["w3"], (Wp, Cp)).astype(jnp.bfloat16)
    s1 = pad_to(params["s1"], (1, Wp)).astype(jnp.float32)
    b1 = pad_to(params["b1"], (1, Wp)).astype(jnp.float32)
    s2 = pad_to(params["s2"], (1, Wp)).astype(jnp.float32)
    b2 = pad_to(params["b2"], (1, Wp)).astype(jnp.float32)
    s3 = pad_to(params["s3"], (1, Cp)).astype(jnp.float32)
    b3 = pad_to(params["b3"], (1, Cp)).astype(jnp.float32)

    kernel = functools.partial(bottleneck_kernel, tile_h=tile_h, width_w=W)

    core_spec = pl.BlockSpec((1, tile_h, W, Cp), lambda n, t: (n, t, 0, 0))
    top_spec = pl.BlockSpec(
        (1, 1, W, Cp),
        lambda n, t: (n, jnp.maximum(t * tile_h - 1, 0), 0, 0))
    bot_spec = pl.BlockSpec(
        (1, 1, W, Cp),
        lambda n, t: (n, jnp.minimum((t + 1) * tile_h, H - 1), 0, 0))
    w1_spec = pl.BlockSpec((Cp, Wp), lambda n, t: (0, 0))
    w2_spec = pl.BlockSpec((3, 3, Wp, Wp), lambda n, t: (0, 0, 0, 0))
    w3_spec = pl.BlockSpec((Wp, Cp), lambda n, t: (0, 0))
    vec_w = pl.BlockSpec((1, Wp), lambda n, t: (0, 0))
    vec_c = pl.BlockSpec((1, Cp), lambda n, t: (0, 0))
    out_spec = pl.BlockSpec((1, tile_h, W, Cp), lambda n, t: (n, t, 0, 0))

    out = pl.pallas_call(
        kernel,
        out_shape=jax.ShapeDtypeStruct((N, H, W, Cp), jnp.float32),
        grid=(N, nt),
        in_specs=[core_spec, top_spec, bot_spec,
                  w1_spec, vec_w, vec_w,
                  w2_spec, vec_w, vec_w,
                  w3_spec, vec_c, vec_c],
        out_specs=out_spec,
        compiler_params=pltpu.CompilerParams(
            dimension_semantics=("parallel", "parallel"),
            vmem_limit_bytes=48 * 1024 * 1024),
    )(x, x, x, w1, s1, b1, w2, s2, b2, w3, s3, b3)

    out = out[..., :Cout]                      # drop padded channels
    return jnp.transpose(out, (0, 3, 1, 2))    # NHWC -> NCHW


def _fold_bn(gamma, beta, mean, var, eps=1e-5):
    scale = gamma / jnp.sqrt(var + eps)
    bias = beta - mean * scale
    return scale.reshape(1, -1), bias.reshape(1, -1)


def make_params(key, inplanes, planes, base_width=64, groups=1):
    width = int(planes * (base_width / 64.0)) * groups
    cout = planes * 4  # Bottleneck.expansion
    ks = jax.random.split(key, 15)
    p = {}
    p["w1"] = 0.1 * jax.random.normal(ks[0], (inplanes, width), jnp.float32)
    p["w2"] = 0.1 * jax.random.normal(ks[1], (3, 3, width, width), jnp.float32)
    p["w3"] = 0.1 * jax.random.normal(ks[2], (width, cout), jnp.float32)
    for i, (name, c) in enumerate([("1", width), ("2", width), ("3", cout)]):
        g = 1.0 + 0.1 * jax.random.normal(ks[3 + 4 * i], (c,), jnp.float32)
        b = 0.1 * jax.random.normal(ks[4 + 4 * i], (c,), jnp.float32)
        m = 0.1 * jax.random.normal(ks[5 + 4 * i], (c,), jnp.float32)
        v = jax.random.uniform(ks[6 + 4 * i], (c,), jnp.float32, 0.5, 1.5)
        p["s" + name], p["b" + name] = _fold_bn(g, b, m, v)
    return p


def reference_forward(x_nchw, p):
    """Pure-JAX f32 reference (lax conv) for correctness checking."""
    x = jnp.transpose(x_nchw, (0, 2, 3, 1))  # NHWC
    dn = ("NHWC", "HWIO", "NHWC")

    def bn_relu(h, s, b, relu=True):
        h = h * s.reshape(1, 1, 1, -1) + b.reshape(1, 1, 1, -1)
        return jnp.maximum(h, 0.0) if relu else h

    w1 = p["w1"].reshape(1, 1, *p["w1"].shape)
    w3 = p["w3"].reshape(1, 1, *p["w3"].shape)
    h = jax.lax.conv_general_dilated(x, w1, (1, 1), "VALID",
                                     dimension_numbers=dn,
                                     precision=jax.lax.Precision.HIGHEST)
    h = bn_relu(h, p["s1"], p["b1"])
    h = jax.lax.conv_general_dilated(h, p["w2"], (1, 1), ((1, 1), (1, 1)),
                                     dimension_numbers=dn,
                                     precision=jax.lax.Precision.HIGHEST)
    h = bn_relu(h, p["s2"], p["b2"])
    h = jax.lax.conv_general_dilated(h, w3, (1, 1), "VALID",
                                     dimension_numbers=dn,
                                     precision=jax.lax.Precision.HIGHEST)
    h = bn_relu(h, p["s3"], p["b3"], relu=False)
    out = jnp.maximum(h + x, 0.0)
    return jnp.transpose(out, (0, 3, 1, 2))


if __name__ == "__main__":
    # Small shapes consistent with Bottleneck(inplanes=16, planes=4):
    # width = 4, expansion*planes = 16, stride=1, downsample=None.
    N, Cin, H, W = 2, 16, 16, 16
    planes = 4

    key = jax.random.PRNGKey(0)
    kx, kp = jax.random.split(key)
    x = jax.random.normal(kx, (N, Cin, H, W), jnp.float32)
    params = make_params(kp, Cin, planes)

    fwd = jax.jit(bottleneck_forward)
    out = jax.block_until_ready(fwd(x, params))

    ref = reference_forward(x, params)
    assert out.shape == (N, planes * 4, H, W)
    max_err = float(jnp.max(jnp.abs(out - ref)))
    # bf16 MXU matmuls vs f32 reference -> loosened tolerance.
    assert max_err < 5e-2, f"mismatch vs reference: max abs err {max_err}"

    print("KERNEL_OK")
</pallas_src>

<mosaic_0001>
module attributes {stable_mosaic.version = 11 : i64} {
  func.func @bottleneck_kernel(%arg0: i32, %arg1: i32, %arg2: memref<1x8x16x128xf32, #tpu.memory_space<vmem>>, %arg3: memref<1x1x16x128xf32, #tpu.memory_space<vmem>>, %arg4: memref<1x1x16x128xf32, #tpu.memory_space<vmem>>, %arg5: memref<128x128xbf16, #tpu.memory_space<vmem>>, %arg6: memref<1x128xf32, #tpu.memory_space<vmem>>, %arg7: memref<1x128xf32, #tpu.memory_space<vmem>>, %arg8: memref<3x3x128x128xbf16, #tpu.memory_space<vmem>>, %arg9: memref<1x128xf32, #tpu.memory_space<vmem>>, %arg10: memref<1x128xf32, #tpu.memory_space<vmem>>, %arg11: memref<128x128xbf16, #tpu.memory_space<vmem>>, %arg12: memref<1x128xf32, #tpu.memory_space<vmem>>, %arg13: memref<1x128xf32, #tpu.memory_space<vmem>>, %arg14: memref<1x8x16x128xf32, #tpu.memory_space<vmem>>) attributes {dimension_semantics = [#tpu.dimension_semantics<parallel>, #tpu.dimension_semantics<parallel>], iteration_bounds = array<i64: 2, 2>, scalar_prefetch = 0 : i64, scratch_operands = 0 : i64, tpu.core_type = #tpu.core_type<tc>, window_params = [{transform_indices = @transform_0, window_bounds = array<i64: 1, 8, 16, 128>}, {transform_indices = @transform_1, window_bounds = array<i64: 1, 1, 16, 128>}, {transform_indices = @transform_2, window_bounds = array<i64: 1, 1, 16, 128>}, {pipeline_mode = #tpu.pipeline_mode<synchronous>, transform_indices = @transform_3, window_bounds = array<i64: 128, 128>}, {pipeline_mode = #tpu.pipeline_mode<synchronous>, transform_indices = @transform_4, window_bounds = array<i64: 1, 128>}, {pipeline_mode = #tpu.pipeline_mode<synchronous>, transform_indices = @transform_5, window_bounds = array<i64: 1, 128>}, {pipeline_mode = #tpu.pipeline_mode<synchronous>, transform_indices = @transform_6, window_bounds = array<i64: 3, 3, 128, 128>}, {pipeline_mode = #tpu.pipeline_mode<synchronous>, transform_indices = @transform_7, window_bounds = array<i64: 1, 128>}, {pipeline_mode = #tpu.pipeline_mode<synchronous>, transform_indices = @transform_8, window_bounds = array<i64: 1, 128>}, {pipeline_mode = #tpu.pipeline_mode<synchronous>, transform_indices = @transform_9, window_bounds = array<i64: 128, 128>}, {pipeline_mode = #tpu.pipeline_mode<synchronous>, transform_indices = @transform_10, window_bounds = array<i64: 1, 128>}, {pipeline_mode = #tpu.pipeline_mode<synchronous>, transform_indices = @transform_11, window_bounds = array<i64: 1, 128>}, {transform_indices = @transform_12, window_bounds = array<i64: 1, 8, 16, 128>}]} {
    %c0_i32 = arith.constant 0 : i32
    %0 = arith.cmpi eq, %arg1, %c0_i32 : i32
    %cst = arith.constant 0.000000e+00 : f32
    %cst_0 = arith.constant 1.000000e+00 : f32
    %1 = arith.select %0, %cst, %cst_0 : f32
    %c1_i32 = arith.constant 1 : i32
    %2 = arith.cmpi eq, %arg1, %c1_i32 : i32
    %cst_1 = arith.constant 0.000000e+00 : f32
    %cst_2 = arith.constant 1.000000e+00 : f32
    %3 = arith.select %2, %cst_1, %cst_2 : f32
    %c0 = arith.constant 0 : index
    %c0_3 = arith.constant 0 : index
    %c0_4 = arith.constant 0 : index
    %c0_5 = arith.constant 0 : index
    %4 = vector.load %arg2[%c0, %c0_3, %c0_4, %c0_5] : memref<1x8x16x128xf32, #tpu.memory_space<vmem>>, vector<1x8x16x128xf32>
    %5 = vector.shape_cast %4 : vector<1x8x16x128xf32> to vector<128x128xf32>
    %c0_6 = arith.constant 0 : index
    %c0_7 = arith.constant 0 : index
    %c0_8 = arith.constant 0 : index
    %c0_9 = arith.constant 0 : index
    %6 = vector.load %arg3[%c0_6, %c0_7, %c0_8, %c0_9] : memref<1x1x16x128xf32, #tpu.memory_space<vmem>>, vector<1x1x16x128xf32>
    %7 = vector.shape_cast %6 : vector<1x1x16x128xf32> to vector<16x128xf32>
    %c0_10 = arith.constant 0 : index
    %c0_11 = arith.constant 0 : index
    %c0_12 = arith.constant 0 : index
    %c0_13 = arith.constant 0 : index
    %8 = vector.load %arg4[%c0_10, %c0_11, %c0_12, %c0_13] : memref<1x1x16x128xf32, #tpu.memory_space<vmem>>, vector<1x1x16x128xf32>
    %9 = vector.shape_cast %8 : vector<1x1x16x128xf32> to vector<16x128xf32>
    %c0_14 = arith.constant 0 : index
    %c0_15 = arith.constant 0 : index
    %10 = vector.load %arg5[%c0_14, %c0_15] : memref<128x128xbf16, #tpu.memory_space<vmem>>, vector<128x128xbf16>
    %c0_16 = arith.constant 0 : index
    %c0_17 = arith.constant 0 : index
    %11 = vector.load %arg6[%c0_16, %c0_17] : memref<1x128xf32, #tpu.memory_space<vmem>>, vector<1x128xf32>
    %c0_18 = arith.constant 0 : index
    %c0_19 = arith.constant 0 : index
    %12 = vector.load %arg7[%c0_18, %c0_19] : memref<1x128xf32, #tpu.memory_space<vmem>>, vector<1x128xf32>
    %13 = arith.truncf %5 : vector<128x128xf32> to vector<128x128xbf16>
    %cst_20 = arith.constant dense<0.000000e+00> : vector<128x128xf32>
    %14 = tpu.matmul %13, %10, %cst_20 {dimension_numbers = #tpu.dot_dimension_numbers<[1], [0], [0], [1], [0, 0, 1, 1], [], []>} : vector<128x128xbf16>, vector<128x128xbf16>, vector<128x128xf32> -> vector<128x128xf32>
    %15 = vector.broadcast %11 : vector<1x128xf32> to vector<128x128xf32>
    %16 = arith.mulf %14, %15 : vector<128x128xf32>
    %17 = vector.broadcast %12 : vector<1x128xf32> to vector<128x128xf32>
    %18 = arith.addf %16, %17 : vector<128x128xf32>
    %cst_21 = arith.constant 0.000000e+00 : f32
    %19 = vector.broadcast %cst_21 : f32 to vector<128x128xf32>
    %20 = arith.maximumf %18, %19 : vector<128x128xf32>
    %21 = arith.truncf %7 : vector<16x128xf32> to vector<16x128xbf16>
    %cst_22 = arith.constant dense<0.000000e+00> : vector<16x128xf32>
    %22 = tpu.matmul %21, %10, %cst_22 {dimension_numbers = #tpu.dot_dimension_numbers<[1], [0], [0], [1], [0, 0, 1, 1], [], []>} : vector<16x128xbf16>, vector<128x128xbf16>, vector<16x128xf32> -> vector<16x128xf32>
    %23 = vector.broadcast %11 : vector<1x128xf32> to vector<16x128xf32>
    %24 = arith.mulf %22, %23 : vector<16x128xf32>
    %25 = vector.broadcast %12 : vector<1x128xf32> to vector<16x128xf32>
    %26 = arith.addf %24, %25 : vector<16x128xf32>
    %cst_23 = arith.constant 0.000000e+00 : f32
    %27 = vector.broadcast %cst_23 : f32 to vector<16x128xf32>
    %28 = arith.maximumf %26, %27 : vector<16x128xf32>
    %29 = vector.broadcast %1 : f32 to vector<16x128xf32>
    %30 = arith.mulf %28, %29 : vector<16x128xf32>
    %31 = arith.truncf %9 : vector<16x128xf32> to vector<16x128xbf16>
    %cst_24 = arith.constant dense<0.000000e+00> : vector<16x128xf32>
    %32 = tpu.matmul %31, %10, %cst_24 {dimension_numbers = #tpu.dot_dimension_numbers<[1], [0], [0], [1], [0, 0, 1, 1], [], []>} : vector<16x128xbf16>, vector<128x128xbf16>, vector<16x128xf32> -> vector<16x128xf32>
    %33 = vector.broadcast %11 : vector<1x128xf32> to vector<16x128xf32>
    %34 = arith.mulf %32, %33 : vector<16x128xf32>
    %35 = vector.broadcast %12 : vector<1x128xf32> to vector<16x128xf32>
    %36 = arith.addf %34, %35 : vector<16x128xf32>
    %cst_25 = arith.constant 0.000000e+00 : f32
    %37 = vector.broadcast %cst_25 : f32 to vector<16x128xf32>
    %38 = arith.maximumf %36, %37 : vector<16x128xf32>
    %39 = vector.broadcast %3 : f32 to vector<16x128xf32>
    %40 = arith.mulf %38, %39 : vector<16x128xf32>
    %cst_26 = arith.constant 0.000000e+00 : bf16
    %41 = vector.broadcast %cst_26 : bf16 to vector<8x128xbf16>
    %42 = arith.truncf %30 : vector<16x128xf32> to vector<16x128xbf16>
    %43 = arith.truncf %20 : vector<128x128xf32> to vector<128x128xbf16>
    %44 = arith.truncf %40 : vector<16x128xf32> to vector<16x128xbf16>
    %45 = tpu.concatenate %41, %42, %43, %44, %41 in 0 : vector<8x128xbf16>, vector<16x128xbf16>, vector<128x128xbf16>, vector<16x128xbf16>, vector<8x128xbf16> -> vector<176x128xbf16>
    %46 = tpu.iota {dimensions = array<i32: 0>} : vector<128x1xi32>
    %c16_i32 = arith.constant 16 : i32
    %c0_i32_27 = arith.constant 0 : i32
    %47 = arith.cmpi eq, %c16_i32, %c0_i32_27 : i32
    %c1_i32_28 = arith.constant 1 : i32
    %48 = arith.select %47, %c1_i32_28, %c16_i32 : i32
    %49 = vector.broadcast %48 : i32 to vector<128x1xi32>
    %50 = arith.remsi %46, %49 : vector<128x1xi32>
    %c0_i32_29 = arith.constant 0 : i32
    %51 = vector.broadcast %c0_i32_29 : i32 to vector<128x1xi32>
    %52 = arith.cmpi ne, %50, %51 : vector<128x1xi32>
    %c0_i32_30 = arith.constant 0 : i32
    %53 = vector.broadcast %c0_i32_30 : i32 to vector<128x1xi32>
    %54 = arith.cmpi slt, %50, %53 : vector<128x1xi32>
    %c0_i32_31 = arith.constant 0 : i32
    %55 = arith.cmpi slt, %48, %c0_i32_31 : i32
    %56 = vector.broadcast %55 : i1 to vector<128x1xi1>
    %57 = vector.broadcast %56 : vector<128x1xi1> to vector<128x1xi1>
    %58 = arith.xori %54, %57 : vector<128x1xi1>
    %59 = arith.andi %58, %52 : vector<128x1xi1>
    %60 = vector.broadcast %48 : i32 to vector<128x1xi32>
    %61 = arith.addi %50, %60 : vector<128x1xi32>
    %62 = arith.select %59, %61, %50 : vector<128x1xi1>, vector<128x1xi32>
    %cst_32 = arith.constant 0.000000e+00 : f32
    %63 = vector.broadcast %cst_32 : f32 to vector<128x128xf32>
    %cst_33 = arith.constant 0.000000e+00 : f32
    %64 = vector.broadcast %cst_33 : f32 to vector<128x128xf32>
    %65 = vector.extract_strided_slice %45 {offsets = [7, 0], sizes = [128, 128], strides = [1, 1]} : vector<176x128xbf16> to vector<128x128xbf16>
    %c0_34 = arith.constant 0 : index
    %c0_35 = arith.constant 0 : index
    %c0_36 = arith.constant 0 : index
    %c0_37 = arith.constant 0 : index
    %66 = vector.load %arg8[%c0_34, %c0_35, %c0_36, %c0_37] : memref<3x3x128x128xbf16, #tpu.memory_space<vmem>>, vector<1x1x128x128xbf16>
    %67 = vector.shape_cast %66 : vector<1x1x128x128xbf16> to vector<128x128xbf16>
    %cst_38 = arith.constant dense<0.000000e+00> : vector<128x128xf32>
    %68 = tpu.matmul %65, %67, %cst_38 {dimension_numbers = #tpu.dot_dimension_numbers<[1], [0], [0], [1], [0, 0, 1, 1], [], []>} : vector<128x128xbf16>, vector<128x128xbf16>, vector<128x128xf32> -> vector<128x128xf32>
    %69 = arith.addf %64, %68 : vector<128x128xf32>
    %70 = vector.extract_strided_slice %45 {offsets = [23, 0], sizes = [128, 128], strides = [1, 1]} : vector<176x128xbf16> to vector<128x128xbf16>
    %c1 = arith.constant 1 : index
    %c0_39 = arith.constant 0 : index
    %c0_40 = arith.constant 0 : index
    %c0_41 = arith.constant 0 : index
    %71 = vector.load %arg8[%c1, %c0_39, %c0_40, %c0_41] : memref<3x3x128x128xbf16, #tpu.memory_space<vmem>>, vector<1x1x128x128xbf16>
    %72 = vector.shape_cast %71 : vector<1x1x128x128xbf16> to vector<128x128xbf16>
    %cst_42 = arith.constant dense<0.000000e+00> : vector<128x128xf32>
    %73 = tpu.matmul %70, %72, %cst_42 {dimension_numbers = #tpu.dot_dimension_numbers<[1], [0], [0], [1], [0, 0, 1, 1], [], []>} : vector<128x128xbf16>, vector<128x128xbf16>, vector<128x128xf32> -> vector<128x128xf32>
    %74 = arith.addf %69, %73 : vector<128x128xf32>
    %75 = vector.extract_strided_slice %45 {offsets = [39, 0], sizes = [128, 128], strides = [1, 1]} : vector<176x128xbf16> to vector<128x128xbf16>
    %c2 = arith.constant 2 : index
    %c0_43 = arith.constant 0 : index
    %c0_44 = arith.constant 0 : index
    %c0_45 = arith.constant 0 : index
    %76 = vector.load %arg8[%c2, %c0_43, %c0_44, %c0_45] : memref<3x3x128x128xbf16, #tpu.memory_space<vmem>>, vector<1x1x128x128xbf16>
    %77 = vector.shape_cast %76 : vector<1x1x128x128xbf16> to vector<128x128xbf16>
    %cst_46 = arith.constant dense<0.000000e+00> : vector<128x128xf32>
    %78 = tpu.matmul %75, %77, %cst_46 {dimension_numbers = #tpu.dot_dimension_numbers<[1], [0], [0], [1], [0, 0, 1, 1], [], []>} : vector<128x128xbf16>, vector<128x128xbf16>, vector<128x128xf32> -> vector<128x128xf32>
    %79 = arith.addf %74, %78 : vector<128x128xf32>
    %c0_i32_47 = arith.constant 0 : i32
    %80 = vector.broadcast %c0_i32_47 : i32 to vector<128x1xi32>
    %81 = arith.cmpi eq, %62, %80 : vector<128x1xi32>
    %cst_48 = arith.constant 0.000000e+00 : f32
    %82 = vector.shape_cast %81 : vector<128x1xi1> to vector<128x1xi1>
    %83 = vector.broadcast %82 : vector<128x1xi1> to vector<128x128xi1>
    %84 = vector.broadcast %cst_48 : f32 to vector<128x128xf32>
    %85 = arith.select %83, %84, %79 : vector<128x128xi1>, vector<128x128xf32>
    %86 = arith.addf %63, %85 : vector<128x128xf32>
    %cst_49 = arith.constant 0.000000e+00 : f32
    %87 = vector.broadcast %cst_49 : f32 to vector<128x128xf32>
    %88 = vector.extract_strided_slice %45 {offsets = [8, 0], sizes = [128, 128], strides = [1, 1]} : vector<176x128xbf16> to vector<128x128xbf16>
    %c0_50 = arith.constant 0 : index
    %c1_51 = arith.constant 1 : index
    %c0_52 = arith.constant 0 : index
    %c0_53 = arith.constant 0 : index
    %89 = vector.load %arg8[%c0_50, %c1_51, %c0_52, %c0_53] : memref<3x3x128x128xbf16, #tpu.memory_space<vmem>>, vector<1x1x128x128xbf16>
    %90 = vector.shape_cast %89 : vector<1x1x128x128xbf16> to vector<128x128xbf16>
    %cst_54 = arith.constant dense<0.000000e+00> : vector<128x128xf32>
    %91 = tpu.matmul %88, %90, %cst_54 {dimension_numbers = #tpu.dot_dimension_numbers<[1], [0], [0], [1], [0, 0, 1, 1], [], []>} : vector<128x128xbf16>, vector<128x128xbf16>, vector<128x128xf32> -> vector<128x128xf32>
    %92 = arith.addf %87, %91 : vector<128x128xf32>
    %93 = vector.extract_strided_slice %45 {offsets = [24, 0], sizes = [128, 128], strides = [1, 1]} : vector<176x128xbf16> to vector<128x128xbf16>
    %c1_55 = arith.constant 1 : index
    %c1_56 = arith.constant 1 : index
    %c0_57 = arith.constant 0 : index
    %c0_58 = arith.constant 0 : index
    %94 = vector.load %arg8[%c1_55, %c1_56, %c0_57, %c0_58] : memref<3x3x128x128xbf16, #tpu.memory_space<vmem>>, vector<1x1x128x128xbf16>
    %95 = vector.shape_cast %94 : vector<1x1x128x128xbf16> to vector<128x128xbf16>
    %cst_59 = arith.constant dense<0.000000e+00> : vector<128x128xf32>
    %96 = tpu.matmul %93, %95, %cst_59 {dimension_numbers = #tpu.dot_dimension_numbers<[1], [0], [0], [1], [0, 0, 1, 1], [], []>} : vector<128x128xbf16>, vector<128x128xbf16>, vector<128x128xf32> -> vector<128x128xf32>
    %97 = arith.addf %92, %96 : vector<128x128xf32>
    %98 = vector.extract_strided_slice %45 {offsets = [40, 0], sizes = [128, 128], strides = [1, 1]} : vector<176x128xbf16> to vector<128x128xbf16>
    %c2_60 = arith.constant 2 : index
    %c1_61 = arith.constant 1 : index
    %c0_62 = arith.constant 0 : index
    %c0_63 = arith.constant 0 : index
    %99 = vector.load %arg8[%c2_60, %c1_61, %c0_62, %c0_63] : memref<3x3x128x128xbf16, #tpu.memory_space<vmem>>, vector<1x1x128x128xbf16>
    %100 = vector.shape_cast %99 : vector<1x1x128x128xbf16> to vector<128x128xbf16>
    %cst_64 = arith.constant dense<0.000000e+00> : vector<128x128xf32>
    %101 = tpu.matmul %98, %100, %cst_64 {dimension_numbers = #tpu.dot_dimension_numbers<[1], [0], [0], [1], [0, 0, 1, 1], [], []>} : vector<128x128xbf16>, vector<128x128xbf16>, vector<128x128xf32> -> vector<128x128xf32>
    %102 = arith.addf %97, %101 : vector<128x128xf32>
    %103 = arith.addf %86, %102 : vector<128x128xf32>
    %cst_65 = arith.constant 0.000000e+00 : f32
    %104 = vector.broadcast %cst_65 : f32 to vector<128x128xf32>
    %105 = vector.extract_strided_slice %45 {offsets = [9, 0], sizes = [128, 128], strides = [1, 1]} : vector<176x128xbf16> to vector<128x128xbf16>
    %c0_66 = arith.constant 0 : index
    %c2_67 = arith.constant 2 : index
    %c0_68 = arith.constant 0 : index
    %c0_69 = arith.constant 0 : index
    %106 = vector.load %arg8[%c0_66, %c2_67, %c0_68, %c0_69] : memref<3x3x128x128xbf16, #tpu.memory_space<vmem>>, vector<1x1x128x128xbf16>
    %107 = vector.shape_cast %106 : vector<1x1x128x128xbf16> to vector<128x128xbf16>
    %cst_70 = arith.constant dense<0.000000e+00> : vector<128x128xf32>
    %108 = tpu.matmul %105, %107, %cst_70 {dimension_numbers = #tpu.dot_dimension_numbers<[1], [0], [0], [1], [0, 0, 1, 1], [], []>} : vector<128x128xbf16>, vector<128x128xbf16>, vector<128x128xf32> -> vector<128x128xf32>
    %109 = arith.addf %104, %108 : vector<128x128xf32>
    %110 = vector.extract_strided_slice %45 {offsets = [25, 0], sizes = [128, 128], strides = [1, 1]} : vector<176x128xbf16> to vector<128x128xbf16>
    %c1_71 = arith.constant 1 : index
    %c2_72 = arith.constant 2 : index
    %c0_73 = arith.constant 0 : index
    %c0_74 = arith.constant 0 : index
    %111 = vector.load %arg8[%c1_71, %c2_72, %c0_73, %c0_74] : memref<3x3x128x128xbf16, #tpu.memory_space<vmem>>, vector<1x1x128x128xbf16>
    %112 = vector.shape_cast %111 : vector<1x1x128x128xbf16> to vector<128x128xbf16>
    %cst_75 = arith.constant dense<0.000000e+00> : vector<128x128xf32>
    %113 = tpu.matmul %110, %112, %cst_75 {dimension_numbers = #tpu.dot_dimension_numbers<[1], [0], [0], [1], [0, 0, 1, 1], [], []>} : vector<128x128xbf16>, vector<128x128xbf16>, vector<128x128xf32> -> vector<128x128xf32>
    %114 = arith.addf %109, %113 : vector<128x128xf32>
    %115 = vector.extract_strided_slice %45 {offsets = [41, 0], sizes = [128, 128], strides = [1, 1]} : vector<176x128xbf16> to vector<128x128xbf16>
    %c2_76 = arith.constant 2 : index
    %c2_77 = arith.constant 2 : index
    %c0_78 = arith.constant 0 : index
    %c0_79 = arith.constant 0 : index
    %116 = vector.load %arg8[%c2_76, %c2_77, %c0_78, %c0_79] : memref<3x3x128x128xbf16, #tpu.memory_space<vmem>>, vector<1x1x128x128xbf16>
    %117 = vector.shape_cast %116 : vector<1x1x128x128xbf16> to vector<128x128xbf16>
    %cst_80 = arith.constant dense<0.000000e+00> : vector<128x128xf32>
    %118 = tpu.matmul %115, %117, %cst_80 {dimension_numbers = #tpu.dot_dimension_numbers<[1], [0], [0], [1], [0, 0, 1, 1], [], []>} : vector<128x128xbf16>, vector<128x128xbf16>, vector<128x128xf32> -> vector<128x128xf32>
    %119 = arith.addf %114, %118 : vector<128x128xf32>
    %c15_i32 = arith.constant 15 : i32
    %120 = vector.broadcast %c15_i32 : i32 to vector<128x1xi32>
    %121 = arith.cmpi eq, %62, %120 : vector<128x1xi32>
    %cst_81 = arith.constant 0.000000e+00 : f32
    %122 = vector.shape_cast %121 : vector<128x1xi1> to vector<128x1xi1>
    %123 = vector.broadcast %122 : vector<128x1xi1> to vector<128x128xi1>
    %124 = vector.broadcast %cst_81 : f32 to vector<128x128xf32>
    %125 = arith.select %123, %124, %119 : vector<128x128xi1>, vector<128x128xf32>
    %126 = arith.addf %103, %125 : vector<128x128xf32>
    %c0_82 = arith.constant 0 : index
    %c0_83 = arith.constant 0 : index
    %127 = vector.load %arg9[%c0_82, %c0_83] : memref<1x128xf32, #tpu.memory_space<vmem>>, vector<1x128xf32>
    %128 = vector.broadcast %127 : vector<1x128xf32> to vector<128x128xf32>
    %129 = arith.mulf %126, %128 : vector<128x128xf32>
    %c0_84 = arith.constant 0 : index
    %c0_85 = arith.constant 0 : index
    %130 = vector.load %arg10[%c0_84, %c0_85] : memref<1x128xf32, #tpu.memory_space<vmem>>, vector<1x128xf32>
    %131 = vector.broadcast %130 : vector<1x128xf32> to vector<128x128xf32>
    %132 = arith.addf %129, %131 : vector<128x128xf32>
    %cst_86 = arith.constant 0.000000e+00 : f32
    %133 = vector.broadcast %cst_86 : f32 to vector<128x128xf32>
    %134 = arith.maximumf %132, %133 : vector<128x128xf32>
    %135 = arith.truncf %134 : vector<128x128xf32> to vector<128x128xbf16>
    %c0_87 = arith.constant 0 : index
    %c0_88 = arith.constant 0 : index
    %136 = vector.load %arg11[%c0_87, %c0_88] : memref<128x128xbf16, #tpu.memory_space<vmem>>, vector<128x128xbf16>
    %cst_89 = arith.constant dense<0.000000e+00> : vector<128x128xf32>
    %137 = tpu.matmul %135, %136, %cst_89 {dimension_numbers = #tpu.dot_dimension_numbers<[1], [0], [0], [1], [0, 0, 1, 1], [], []>} : vector<128x128xbf16>, vector<128x128xbf16>, vector<128x128xf32> -> vector<128x128xf32>
    %c0_90 = arith.constant 0 : index
    %c0_91 = arith.constant 0 : index
    %138 = vector.load %arg12[%c0_90, %c0_91] : memref<1x128xf32, #tpu.memory_space<vmem>>, vector<1x128xf32>
    %139 = vector.broadcast %138 : vector<1x128xf32> to vector<128x128xf32>
    %140 = arith.mulf %137, %139 : vector<128x128xf32>
    %c0_92 = arith.constant 0 : index
    %c0_93 = arith.constant 0 : index
    %141 = vector.load %arg13[%c0_92, %c0_93] : memref<1x128xf32, #tpu.memory_space<vmem>>, vector<1x128xf32>
    %142 = vector.broadcast %141 : vector<1x128xf32> to vector<128x128xf32>
    %143 = arith.addf %140, %142 : vector<128x128xf32>
    %144 = arith.addf %143, %5 : vector<128x128xf32>
    %cst_94 = arith.constant 0.000000e+00 : f32
    %145 = vector.broadcast %cst_94 : f32 to vector<128x128xf32>
    %146 = arith.maximumf %144, %145 : vector<128x128xf32>
    %147 = vector.shape_cast %146 : vector<128x128xf32> to vector<1x8x16x128xf32>
    %c0_95 = arith.constant 0 : index
    %c0_96 = arith.constant 0 : index
    %c0_97 = arith.constant 0 : index
    %c0_98 = arith.constant 0 : index
    %148 = vector.load %arg14[%c0_95, %c0_96, %c0_97, %c0_98] : memref<1x8x16x128xf32, #tpu.memory_space<vmem>>, vector<1x8x16x128xf32>
    tpu.vector_store %arg14[%c0_95, %c0_96, %c0_97, %c0_98], %147 {strides = array<i32>} : memref<1x8x16x128xf32, #tpu.memory_space<vmem>>, vector<1x8x16x128xf32>,
    return
  }
  func.func @transform_0(%arg0: i32, %arg1: i32) -> (i32, i32, i32, i32) {
    %c0_i32 = arith.constant 0 : i32
    %c0_i32_0 = arith.constant 0 : i32
    %c0_i32_1 = arith.constant 0 : i32
    return %arg0, %arg1, %c0_i32, %c0_i32_0 : i32, i32, i32, i32
  }
  func.func @transform_1(%arg0: i32, %arg1: i32) -> (i32, i32, i32, i32) {
    %c8_i32 = arith.constant 8 : i32
    %0 = arith.muli %arg1, %c8_i32 : i32
    %c1_i32 = arith.constant 1 : i32
    %1 = arith.subi %0, %c1_i32 : i32
    %c0_i32 = arith.constant 0 : i32
    %2 = arith.maxsi %1, %c0_i32 : i32
    %c0_i32_0 = arith.constant 0 : i32
    %c0_i32_1 = arith.constant 0 : i32
    %c0_i32_2 = arith.constant 0 : i32
    return %arg0, %2, %c0_i32_0, %c0_i32_1 : i32, i32, i32, i32
  }
  func.func @transform_2(%arg0: i32, %arg1: i32) -> (i32, i32, i32, i32) {
    %c1_i32 = arith.constant 1 : i32
    %0 = arith.addi %arg1, %c1_i32 : i32
    %c8_i32 = arith.constant 8 : i32
    %1 = arith.muli %0, %c8_i32 : i32
    %c15_i32 = arith.constant 15 : i32
    %2 = arith.minsi %1, %c15_i32 : i32
    %c0_i32 = arith.constant 0 : i32
    %c0_i32_0 = arith.constant 0 : i32
    %c0_i32_1 = arith.constant 0 : i32
    return %arg0, %2, %c0_i32, %c0_i32_0 : i32, i32, i32, i32
  }
  func.func @transform_3(%arg0: i32, %arg1: i32) -> (i32, i32) {
    %c0_i32 = arith.constant 0 : i32
    %c0_i32_0 = arith.constant 0 : i32
    %c0_i32_1 = arith.constant 0 : i32
    return %c0_i32, %c0_i32_0 : i32, i32
  }
  func.func @transform_4(%arg0: i32, %arg1: i32) -> (i32, i32) {
    %c0_i32 = arith.constant 0 : i32
    %c0_i32_0 = arith.constant 0 : i32
    %c0_i32_1 = arith.constant 0 : i32
    return %c0_i32, %c0_i32_0 : i32, i32
  }
  func.func @transform_5(%arg0: i32, %arg1: i32) -> (i32, i32) {
    %c0_i32 = arith.constant 0 : i32
    %c0_i32_0 = arith.constant 0 : i32
    %c0_i32_1 = arith.constant 0 : i32
    return %c0_i32, %c0_i32_0 : i32, i32
  }
  func.func @transform_6(%arg0: i32, %arg1: i32) -> (i32, i32, i32, i32) {
    %c0_i32 = arith.constant 0 : i32
    %c0_i32_0 = arith.constant 0 : i32
    %c0_i32_1 = arith.constant 0 : i32
    %c0_i32_2 = arith.constant 0 : i32
    %c0_i32_3 = arith.constant 0 : i32
    return %c0_i32, %c0_i32_0, %c0_i32_1, %c0_i32_2 : i32, i32, i32, i32
  }
  func.func @transform_7(%arg0: i32, %arg1: i32) -> (i32, i32) {
    %c0_i32 = arith.constant 0 : i32
    %c0_i32_0 = arith.constant 0 : i32
    %c0_i32_1 = arith.constant 0 : i32
    return %c0_i32, %c0_i32_0 : i32, i32
  }
  func.func @transform_8(%arg0: i32, %arg1: i32) -> (i32, i32) {
    %c0_i32 = arith.constant 0 : i32
    %c0_i32_0 = arith.constant 0 : i32
    %c0_i32_1 = arith.constant 0 : i32
    return %c0_i32, %c0_i32_0 : i32, i32
  }
  func.func @transform_9(%arg0: i32, %arg1: i32) -> (i32, i32) {
    %c0_i32 = arith.constant 0 : i32
    %c0_i32_0 = arith.constant 0 : i32
    %c0_i32_1 = arith.constant 0 : i32
    return %c0_i32, %c0_i32_0 : i32, i32
  }
  func.func @transform_10(%arg0: i32, %arg1: i32) -> (i32, i32) {
    %c0_i32 = arith.constant 0 : i32
    %c0_i32_0 = arith.constant 0 : i32
    %c0_i32_1 = arith.constant 0 : i32
    return %c0_i32, %c0_i32_0 : i32, i32
  }
  func.func @transform_11(%arg0: i32, %arg1: i32) -> (i32, i32) {
    %c0_i32 = arith.constant 0 : i32
    %c0_i32_0 = arith.constant 0 : i32
    %c0_i32_1 = arith.constant 0 : i32
    return %c0_i32, %c0_i32_0 : i32, i32
  }
  func.func @transform_12(%arg0: i32, %arg1: i32) -> (i32, i32, i32, i32) {
    %c0_i32 = arith.constant 0 : i32
    %c0_i32_0 = arith.constant 0 : i32
    %c0_i32_1 = arith.constant 0 : i32
    return %arg0, %arg1, %c0_i32, %c0_i32_0 : i32, i32, i32, i32
  }
}

</mosaic_0001>

<llo_original>
// kernel: bottleneck_forward.1
$region0: #{bottleneck_forward.1}
  #allocation0 [shape = 'u32[]', space=smem, size = 0x4, offset = 0x4, fixed_abs, tag = 'smem constant byte address 0x4 - core index']
  #allocation1 [shape = 'u32[144,128]{1,0:T(1,128)}', space=vmem, size = 0x12000, scoped, tag = 'internal scratch']
  %s0 = inlined_call_operand.vmem [shape: f32[2,16,16,128], index: 0, kind: input, shape index: {}, may-alias: {0,1,2}]
  %s1 = inlined_call_operand.vmem [shape: f32[2,16,16,128], index: 1, kind: input, shape index: {}, may-alias: {0,1,2}]
  %s2 = inlined_call_operand.vmem [shape: f32[2,16,16,128], index: 2, kind: input, shape index: {}, may-alias: {0,1,2}]
  %s3 = inlined_call_operand.vmem [shape: bf16[128,128], index: 3, kind: input, shape index: {}]
  %s4 = inlined_call_operand.vmem [shape: f32[1,128], index: 4, kind: input, shape index: {}]
  %s5 = inlined_call_operand.vmem [shape: f32[1,128], index: 5, kind: input, shape index: {}]
  %s6 = inlined_call_operand.vmem [shape: bf16[3,3,128,128], index: 6, kind: input, shape index: {}]
  %s7 = inlined_call_operand.vmem [shape: f32[1,128], index: 7, kind: input, shape index: {}]
  %s8 = inlined_call_operand.vmem [shape: f32[1,128], index: 8, kind: input, shape index: {}]
  %s9 = inlined_call_operand.vmem [shape: bf16[128,128], index: 9, kind: input, shape index: {}]
  %s10 = inlined_call_operand.vmem [shape: f32[1,128], index: 10, kind: input, shape index: {}]
  %s11 = inlined_call_operand.vmem [shape: f32[1,128], index: 11, kind: input, shape index: {}]
  %s12 = inlined_call_operand.vmem [shape: f32[2,16,16,128], index: 12, kind: output, shape index: {}]
  %s13 = sld [smem:[#allocation0]]
  $region81: #{bottleneck_forward.1} parent=0
    _
  %s15 = ssub.s32 1, %s13
  %s16 = scalar_select 0, %s15, %s13
  loop: start=0, step=1, limit=6
  $region2: #{bottleneck_forward.1} parent=0 // loop_pre_header
    _
  $region3: #{bottleneck_forward.1} parent=0 // loop_header
    %s18 = sphi 0, %s22
    %p19 = scmp.ge.s32.totalorder %s18, 6
    %s25 = sphi 0, %s37
    %s26 = sphi 0, %s33
    %s27 = sphi 0, %s25
    %s28 = sphi 0, %s26
    %s29 = sphi 0, %s27
    %s30 = sphi 0, %s28
    %s42 = sphi 0, %s44
    %s45 = sphi 0, %s42
    %s46 = sphi 0, %s45
    %s62 = sphi 0, %s46
    %s78 = sphi 0, %s80
    %s81 = sphi 0, %s78
    %s82 = sphi 0, %s81
    %s98 = sphi 0, %s82
    %s114 = sphi 0, %s116
    %s117 = sphi 0, %s114
    %s118 = sphi 0, %s117
    %s134 = sphi 0, %s118
    %s138 = sphi 0, %s138
    %s140 = sphi 0, %s138
    %s141 = sphi 0, %s140
    %s155 = sphi 0, %s141
    %s159 = sphi 0, %s159
    %s161 = sphi 0, %s159
    %s162 = sphi 0, %s161
    %s176 = sphi 0, %s162
    %s180 = sphi 0, %s180
    %s182 = sphi 0, %s180
    %s183 = sphi 0, %s182
    %s197 = sphi 0, %s183
    %s201 = sphi 0, %s201
    %s203 = sphi 0, %s201
    %s204 = sphi 0, %s203
    %s218 = sphi 0, %s204
    %s222 = sphi 0, %s222
    %s224 = sphi 0, %s222
    %s225 = sphi 0, %s224
    %s239 = sphi 0, %s225
    %s243 = sphi 0, %s243
    %s245 = sphi 0, %s243
    %s246 = sphi 0, %s245
    %s260 = sphi 0, %s246
    %s264 = sphi 0, %s264
    %s266 = sphi 0, %s264
    %s267 = sphi 0, %s266
    %s281 = sphi 0, %s267
    %s285 = sphi 0, %s285
    %s287 = sphi 0, %s285
    %s288 = sphi 0, %s287
    %s302 = sphi 0, %s288
    %s306 = sphi 0, %s306
    %s308 = sphi 0, %s306
    %s309 = sphi 0, %s308
    %s323 = sphi 0, %s309
    %s331 = sphi 0, %s333
    %s334 = sphi 0, %s331
    %s335 = sphi 0, %s334
    %s351 = sphi 0, %s335
  $region4: #{bottleneck_forward.1} parent=0 // loop_header_branch
    %21 = sbr.rel (%p19) target = $region8
  $region5: #{bottleneck_forward.1} parent=0 // loop_body
    %s23 = ssub.s32 %s18, 1
    %s24 = ssub.s32 %s18, 2
    %s31 = sadd.s32 1, %s26
    %p32 = scmp.ge.s32.totalorder %s31, 2
    %s33 = scalar_select %p32, 0, %s31
    %s34 = sadd.s32 1, %s25
    %s35 = scalar_select %p32, %s34, %s25
    %p36 = scmp.ge.s32.totalorder %s35, 2
    %s37 = scalar_select %p36, 0, %s35
    %s38 = ssub.s32 %s25, %s37
    %s39 = ssub.s32 %s26, %s33
    %s40 = sor.u32 %s38, %s39
    %p41 = scmp.eq.s32.totalorder %s40, 0
    %s43 = sadd.s32 %s42, 1
    %s44 = scalar_select %p41, %s42, %s43
    %p47 = pneg %p41
    %p48 = scmp.eq.s32.totalorder %s18, 3
    %p49 = por %p47, %p48
    %p50 = scmp.ne.s32.totalorder %s42, %s45
    %p51 = scmp.eq.s32.totalorder %s18, 0
    %p52 = por %p50, %p51
    %p53 = scmp.ne.s32.totalorder %s42, %s45
    %p54 = scmp.eq.s32.totalorder %s23, 3
    %p55 = por %p53, %p54
    %p56 = scmp.ne.s32.totalorder %s45, %s46
    %p57 = scmp.eq.s32.totalorder %s23, 0
    %p58 = por %p56, %p57
    %p59 = scmp.ne.s32.totalorder %s45, %s46
    %p60 = scmp.eq.s32.totalorder %s24, 3
    %p61 = por %p59, %p60
    %p63 = scmp.ne.s32.totalorder %s46, %s62
    %p64 = scmp.eq.s32.totalorder %s24, 0
    %p65 = por %p63, %p64
    %s66 = smul.u32 %s26, 8
    %s67 = ssub.s32 %s66, 1
    %p68 = scmp.gt.s32.totalorder %s67, 0
    %s69 = scalar_select %p68, %s67, 0
    %s70 = smul.u32 %s33, 8
    %s71 = ssub.s32 %s70, 1
    %p72 = scmp.gt.s32.totalorder %s71, 0
    %s73 = scalar_select %p72, %s71, 0
    %s74 = ssub.s32 %s25, %s37
    %s75 = ssub.s32 %s69, %s73
    %s76 = sor.u32 %s74, %s75
    %p77 = scmp.eq.s32.totalorder %s76, 0
    %s79 = sadd.s32 %s78, 1
    %s80 = scalar_select %p77, %s78, %s79
    %p83 = pneg %p77
    %p84 = scmp.eq.s32.totalorder %s18, 3
    %p85 = por %p83, %p84
    %p86 = scmp.ne.s32.totalorder %s78, %s81
    %p87 = scmp.eq.s32.totalorder %s18, 0
    %p88 = por %p86, %p87
    %p89 = scmp.ne.s32.totalorder %s78, %s81
    %p90 = scmp.eq.s32.totalorder %s23, 3
    %p91 = por %p89, %p90
    %p92 = scmp.ne.s32.totalorder %s81, %s82
    %p93 = scmp.eq.s32.totalorder %s23, 0
    %p94 = por %p92, %p93
    %p95 = scmp.ne.s32.totalorder %s81, %s82
    %p96 = scmp.eq.s32.totalorder %s24, 3
    %p97 = por %p95, %p96
    %p99 = scmp.ne.s32.totalorder %s82, %s98
    %p100 = scmp.eq.s32.totalorder %s24, 0
    %p101 = por %p99, %p100
    %s102 = sadd.s32 %s26, 1
    %s103 = smul.u32 %s102, 8
    %p104 = scmp.lt.s32.totalorder %s103, 15
    %s105 = scalar_select %p104, %s103, 15
    %s106 = sadd.s32 %s33, 1
    %s107 = smul.u32 %s106, 8
    %p108 = scmp.lt.s32.totalorder %s107, 15
    %s109 = scalar_select %p108, %s107, 15
    %s110 = ssub.s32 %s25, %s37
    %s111 = ssub.s32 %s105, %s109
    %s112 = sor.u32 %s110, %s111
    %p113 = scmp.eq.s32.totalorder %s112, 0
    %s115 = sadd.s32 %s114, 1
    %s116 = scalar_select %p113, %s114, %s115
    %p119 = pneg %p113
    %p120 = scmp.eq.s32.totalorder %s18, 3
    %p121 = por %p119, %p120
    %p122 = scmp.ne.s32.totalorder %s114, %s117
    %p123 = scmp.eq.s32.totalorder %s18, 0
    %p124 = por %p122, %p123
    %p125 = scmp.ne.s32.totalorder %s114, %s117
    %p126 = scmp.eq.s32.totalorder %s23, 3
    %p127 = por %p125, %p126
    %p128 = scmp.ne.s32.totalorder %s117, %s118
    %p129 = scmp.eq.s32.totalorder %s23, 0
    %p130 = por %p128, %p129
    %p131 = scmp.ne.s32.totalorder %s117, %s118
    %p132 = scmp.eq.s32.totalorder %s24, 3
    %p133 = por %p131, %p132
    %p135 = scmp.ne.s32.totalorder %s118, %s134
    %p136 = scmp.eq.s32.totalorder %s24, 0
    %p137 = por %p135, %p136
    %s139 = sadd.s32 %s138, 1
    %p142 = scmp.eq.s32.totalorder %s18, 3
    %p143 = scmp.ne.s32.totalorder %s138, %s140
    %p144 = scmp.eq.s32.totalorder %s18, 0
    %p145 = por %p143, %p144
    %p146 = scmp.ne.s32.totalorder %s138, %s140
    %p147 = scmp.eq.s32.totalorder %s23, 3
    %p148 = por %p146, %p147
    %p149 = scmp.ne.s32.totalorder %s140, %s141
    %p150 = scmp.eq.s32.totalorder %s23, 0
    %p151 = por %p149, %p150
    %p152 = scmp.ne.s32.totalorder %s140, %s141
    %p153 = scmp.eq.s32.totalorder %s24, 3
    %p154 = por %p152, %p153
    %p156 = scmp.ne.s32.totalorder %s141, %s155
    %p157 = scmp.eq.s32.totalorder %s24, 0
    %p158 = por %p156, %p157
    %s160 = sadd.s32 %s159, 1
    %p163 = scmp.eq.s32.totalorder %s18, 3
    %p164 = scmp.ne.s32.totalorder %s159, %s161
    %p165 = scmp.eq.s32.totalorder %s18, 0
    %p166 = por %p164, %p165
    %p167 = scmp.ne.s32.totalorder %s159, %s161
    %p168 = scmp.eq.s32.totalorder %s23, 3
    %p169 = por %p167, %p168
    %p170 = scmp.ne.s32.totalorder %s161, %s162
    %p171 = scmp.eq.s32.totalorder %s23, 0
    %p172 = por %p170, %p171
    %p173 = scmp.ne.s32.totalorder %s161, %s162
    %p174 = scmp.eq.s32.totalorder %s24, 3
    %p175 = por %p173, %p174
    %p177 = scmp.ne.s32.totalorder %s162, %s176
    %p178 = scmp.eq.s32.totalorder %s24, 0
    %p179 = por %p177, %p178
    %s181 = sadd.s32 %s180, 1
    %p184 = scmp.eq.s32.totalorder %s18, 3
    %p185 = scmp.ne.s32.totalorder %s180, %s182
    %p186 = scmp.eq.s32.totalorder %s18, 0
    %p187 = por %p185, %p186
    %p188 = scmp.ne.s32.totalorder %s180, %s182
    %p189 = scmp.eq.s32.totalorder %s23, 3
    %p190 = por %p188, %p189
    %p191 = scmp.ne.s32.totalorder %s182, %s183
    %p192 = scmp.eq.s32.totalorder %s23, 0
    %p193 = por %p191, %p192
    %p194 = scmp.ne.s32.totalorder %s182, %s183
    %p195 = scmp.eq.s32.totalorder %s24, 3
    %p196 = por %p194, %p195
    %p198 = scmp.ne.s32.totalorder %s183, %s197
    %p199 = scmp.eq.s32.totalorder %s24, 0
    %p200 = por %p198, %p199
    %s202 = sadd.s32 %s201, 1
    %p205 = scmp.eq.s32.totalorder %s18, 3
    %p206 = scmp.ne.s32.totalorder %s201, %s203
    %p207 = scmp.eq.s32.totalorder %s18, 0
    %p208 = por %p206, %p207
    %p209 = scmp.ne.s32.totalorder %s201, %s203
    %p210 = scmp.eq.s32.totalorder %s23, 3
    %p211 = por %p209, %p210
    %p212 = scmp.ne.s32.totalorder %s203, %s204
    %p213 = scmp.eq.s32.totalorder %s23, 0
    %p214 = por %p212, %p213
    %p215 = scmp.ne.s32.totalorder %s203, %s204
    %p216 = scmp.eq.s32.totalorder %s24, 3
    %p217 = por %p215, %p216
    %p219 = scmp.ne.s32.totalorder %s204, %s218
    %p220 = scmp.eq.s32.totalorder %s24, 0
    %p221 = por %p219, %p220
    %s223 = sadd.s32 %s222, 1
    %p226 = scmp.eq.s32.totalorder %s18, 3
    %p227 = scmp.ne.s32.totalorder %s222, %s224
    %p228 = scmp.eq.s32.totalorder %s18, 0
    %p229 = por %p227, %p228
    %p230 = scmp.ne.s32.totalorder %s222, %s224
    %p231 = scmp.eq.s32.totalorder %s23, 3
    %p232 = por %p230, %p231
    %p233 = scmp.ne.s32.totalorder %s224, %s225
    %p234 = scmp.eq.s32.totalorder %s23, 0
    %p235 = por %p233, %p234
    %p236 = scmp.ne.s32.totalorder %s224, %s225
    %p237 = scmp.eq.s32.totalorder %s24, 3
    %p238 = por %p236, %p237
    %p240 = scmp.ne.s32.totalorder %s225, %s239
    %p241 = scmp.eq.s32.totalorder %s24, 0
    %p242 = por %p240, %p241
    %s244 = sadd.s32 %s243, 1
    %p247 = scmp.eq.s32.totalorder %s18, 3
    %p248 = scmp.ne.s32.totalorder %s243, %s245
    %p249 = scmp.eq.s32.totalorder %s18, 0
    %p250 = por %p248, %p249
    %p251 = scmp.ne.s32.totalorder %s243, %s245
    %p252 = scmp.eq.s32.totalorder %s23, 3
    %p253 = por %p251, %p252
    %p254 = scmp.ne.s32.totalorder %s245, %s246
    %p255 = scmp.eq.s32.totalorder %s23, 0
    %p256 = por %p254, %p255
    %p257 = scmp.ne.s32.totalorder %s245, %s246
    %p258 = scmp.eq.s32.totalorder %s24, 3
    %p259 = por %p257, %p258
    %p261 = scmp.ne.s32.totalorder %s246, %s260
    %p262 = scmp.eq.s32.totalorder %s24, 0
    %p263 = por %p261, %p262
    %s265 = sadd.s32 %s264, 1
    %p268 = scmp.eq.s32.totalorder %s18, 3
    %p269 = scmp.ne.s32.totalorder %s264, %s266
    %p270 = scmp.eq.s32.totalorder %s18, 0
    %p271 = por %p269, %p270
    %p272 = scmp.ne.s32.totalorder %s264, %s266
    %p273 = scmp.eq.s32.totalorder %s23, 3
    %p274 = por %p272, %p273
    %p275 = scmp.ne.s32.totalorder %s266, %s267
    %p276 = scmp.eq.s32.totalorder %s23, 0
    %p277 = por %p275, %p276
    %p278 = scmp.ne.s32.totalorder %s266, %s267
    %p279 = scmp.eq.s32.totalorder %s24, 3
    %p280 = por %p278, %p279
    %p282 = scmp.ne.s32.totalorder %s267, %s281
    %p283 = scmp.eq.s32.totalorder %s24, 0
    %p284 = por %p282, %p283
    %s286 = sadd.s32 %s285, 1
    %p289 = scmp.eq.s32.totalorder %s18, 3
    %p290 = scmp.ne.s32.totalorder %s285, %s287
    %p291 = scmp.eq.s32.totalorder %s18, 0
    %p292 = por %p290, %p291
    %p293 = scmp.ne.s32.totalorder %s285, %s287
    %p294 = scmp.eq.s32.totalorder %s23, 3
    %p295 = por %p293, %p294
    %p296 = scmp.ne.s32.totalorder %s287, %s288
    %p297 = scmp.eq.s32.totalorder %s23, 0
    %p298 = por %p296, %p297
    %p299 = scmp.ne.s32.totalorder %s287, %s288
    %p300 = scmp.eq.s32.totalorder %s24, 3
    %p301 = por %p299, %p300
    %p303 = scmp.ne.s32.totalorder %s288, %s302
    %p304 = scmp.eq.s32.totalorder %s24, 0
    %p305 = por %p303, %p304
    %s307 = sadd.s32 %s306, 1
    %p310 = scmp.eq.s32.totalorder %s18, 3
    %p311 = scmp.ne.s32.totalorder %s306, %s308
    %p312 = scmp.eq.s32.totalorder %s18, 0
    %p313 = por %p311, %p312
    %p314 = scmp.ne.s32.totalorder %s306, %s308
    %p315 = scmp.eq.s32.totalorder %s23, 3
    %p316 = por %p314, %p315
    %p317 = scmp.ne.s32.totalorder %s308, %s309
    %p318 = scmp.eq.s32.totalorder %s23, 0
    %p319 = por %p317, %p318
    %p320 = scmp.ne.s32.totalorder %s308, %s309
    %p321 = scmp.eq.s32.totalorder %s24, 3
    %p322 = por %p320, %p321
    %p324 = scmp.ne.s32.totalorder %s309, %s323
    %p325 = scmp.eq.s32.totalorder %s24, 0
    %p326 = por %p324, %p325
    %s327 = ssub.s32 %s25, %s37
    %s328 = ssub.s32 %s26, %s33
    %s329 = sor.u32 %s327, %s328
    %p330 = scmp.eq.s32.totalorder %s329, 0
    %s332 = sadd.s32 %s331, 1
    %s333 = scalar_select %p330, %s331, %s332
    %p336 = pneg %p330
    %p337 = scmp.eq.s32.totalorder %s18, 3
    %p338 = por %p336, %p337
    %p339 = scmp.ne.s32.totalorder %s331, %s334
    %p340 = scmp.eq.s32.totalorder %s18, 0
    %p341 = por %p339, %p340
    %p342 = scmp.ne.s32.totalorder %s331, %s334
    %p343 = scmp.eq.s32.totalorder %s23, 3
    %p344 = por %p342, %p343
    %p345 = scmp.ne.s32.totalorder %s334, %s335
    %p346 = scmp.eq.s32.totalorder %s23, 0
    %p347 = por %p345, %p346
    %p348 = scmp.ne.s32.totalorder %s334, %s335
    %p349 = scmp.eq.s32.totalorder %s24, 3
    %p350 = por %p348, %p349
    %p352 = scmp.ne.s32.totalorder %s335, %s351
    %p353 = scmp.eq.s32.totalorder %s24, 0
    %p354 = por %p352, %p353
    %p355 = scmp.le.s32.totalorder 1, %s18
    %p356 = scmp.lt.s32.totalorder %s18, 5
    %p357 = pnand %p355, %p356
    %p358 = pneg %p357
    // Predicated region
    $region9: #{bottleneck_forward.1} parent=5 // pred_check
      _
    $region10: #{bottleneck_forward.1} parent=5 // pred_check_branch
      %360 = sbr.rel (%p357) target = $region12
    $region11: #{bottleneck_forward.1} parent=5 // pred_region
      %s361 = ssub.s32 %s18, 1
      // Predicated region
      $region13: #{bottleneck_forward.1} parent=11 // pred_check
        %p362 = pneg %p151
      $region14: #{bottleneck_forward.1} parent=11 // pred_check_branch
        %364 = sbr.rel (%p362) target = $region16
      $region15: #{bottleneck_forward.1} parent=11 // pred_region
        _
      $region16: #{bottleneck_forward.1} parent=11 // pred_fallthru
        _
      // Predicated region
      $region17: #{bottleneck_forward.1} parent=11 // pred_check
        %p365 = pneg %p172
      $region18: #{bottleneck_forward.1} parent=11 // pred_check_branch
        %367 = sbr.rel (%p365) target = $region20
      $region19: #{bottleneck_forward.1} parent=11 // pred_region
        _
      $region20: #{bottleneck_forward.1} parent=11 // pred_fallthru
        _
      // Predicated region
      $region21: #{bottleneck_forward.1} parent=11 // pred_check
        %p368 = pneg %p193
      $region22: #{bottleneck_forward.1} parent=11 // pred_check_branch
        %370 = sbr.rel (%p368) target = $region24
      $region23: #{bottleneck_forward.1} parent=11 // pred_region
        _
      $region24: #{bottleneck_forward.1} parent=11 // pred_fallthru
        _
      // Predicated region
      $region25: #{bottleneck_forward.1} parent=11 // pred_check
        %p371 = pneg %p214
      $region26: #{bottleneck_forward.1} parent=11 // pred_check_branch
        %373 = sbr.rel (%p371) target = $region28
      $region27: #{bottleneck_forward.1} parent=11 // pred_region
        _
      $region28: #{bottleneck_forward.1} parent=11 // pred_fallthru
        _
      // Predicated region
      $region29: #{bottleneck_forward.1} parent=11 // pred_check
        %p374 = pneg %p235
      $region30: #{bottleneck_forward.1} parent=11 // pred_check_branch
        %376 = sbr.rel (%p374) target = $region32
      $region31: #{bottleneck_forward.1} parent=11 // pred_region
        _
      $region32: #{bottleneck_forward.1} parent=11 // pred_fallthru
        _
      // Predicated region
      $region33: #{bottleneck_forward.1} parent=11 // pred_check
        %p377 = pneg %p256
      $region34: #{bottleneck_forward.1} parent=11 // pred_check_branch
        %379 = sbr.rel (%p377) target = $region36
      $region35: #{bottleneck_forward.1} parent=11 // pred_region
        _
      $region36: #{bottleneck_forward.1} parent=11 // pred_fallthru
        _
      // Predicated region
      $region37: #{bottleneck_forward.1} parent=11 // pred_check
        %p380 = pneg %p277
      $region38: #{bottleneck_forward.1} parent=11 // pred_check_branch
        %382 = sbr.rel (%p380) target = $region40
      $region39: #{bottleneck_forward.1} parent=11 // pred_region
        _
      $region40: #{bottleneck_forward.1} parent=11 // pred_fallthru
        _
      // Predicated region
      $region41: #{bottleneck_forward.1} parent=11 // pred_check
        %p383 = pneg %p298
      $region42: #{bottleneck_forward.1} parent=11 // pred_check_branch
        %385 = sbr.rel (%p383) target = $region44
      $region43: #{bottleneck_forward.1} parent=11 // pred_region
        _
      $region44: #{bottleneck_forward.1} parent=11 // pred_fallthru
        _
      // Predicated region
      $region45: #{bottleneck_forward.1} parent=11 // pred_check
        %p386 = pneg %p319
      $region46: #{bottleneck_forward.1} parent=11 // pred_check_branch
        %388 = sbr.rel (%p386) target = $region48
      $region47: #{bottleneck_forward.1} parent=11 // pred_region
        _
      $region48: #{bottleneck_forward.1} parent=11 // pred_fallthru
        _
    $region12: #{bottleneck_forward.1} parent=5 // pred_fallthru
      _
    %p389 = scmp.lt.s32.totalorder %s18, 4
    // Predicated region
    $region49: #{bottleneck_forward.1} parent=5 // pred_check
      %p390 = pneg %p389
    $region50: #{bottleneck_forward.1} parent=5 // pred_check_branch
      %392 = sbr.rel (%p390) target = $region52
    $region51: #{bottleneck_forward.1} parent=5 // pred_region
      // Predicated region
      $region53: #{bottleneck_forward.1} parent=51 // pred_check
        %p393 = pneg %p52
      $region54: #{bottleneck_forward.1} parent=51 // pred_check_branch
        %395 = sbr.rel (%p393) target = $region56
      $region55: #{bottleneck_forward.1} parent=51 // pred_region
        %s396 = smul.u32 8, %s26
        %p397 = scmp.lt.s32.totalorder %s25, 1
        %s398 = scalar_select %p397, %s25, 1
        %p399 = scmp.lt.s32.totalorder %s396, 15
        %s400 = scalar_select %p399, %s396, 15
        %s401 = smul.addr %s400, 2
        %s402 = smul.addr %s398, 32
        %s403 = sadd.s32 %s401, %s402
        %s404 = smul.addr %s403, 8
        %s405 = scalar_lea.vmem %s0, %s404
        %s406 = smul.u32 8, %s26
      $region56: #{bottleneck_forward.1} parent=51 // pred_fallthru
        _
      // Predicated region
      $region57: #{bottleneck_forward.1} parent=51 // pred_check
        %p407 = pneg %p88
      $region58: #{bottleneck_forward.1} parent=51 // pred_check_branch
        %409 = sbr.rel (%p407) target = $region60
      $region59: #{bottleneck_forward.1} parent=51 // pred_region
        %s410 = smul.u32 %s26, 8
        %s411 = ssub.s32 %s410, 1
        %p412 = scmp.gt.s32.totalorder %s411, 0
        %s413 = scalar_select %p412, %s411, 0
        %p414 = scmp.lt.s32.totalorder %s25, 1
        %s415 = scalar_select %p414, %s25, 1
        %p416 = scmp.lt.s32.totalorder %s413, 15
        %s417 = scalar_select %p416, %s413, 15
        %s418 = smul.addr %s417, 2
        %s419 = smul.addr %s415, 32
        %s420 = sadd.s32 %s418, %s419
        %s421 = smul.addr %s420, 8
        %s422 = scalar_lea.vmem %s1, %s421
        %s423 = smul.u32 %s26, 8
        %s424 = ssub.s32 %s423, 1
        %p425 = scmp.gt.s32.totalorder %s424, 0
        %s426 = scalar_select %p425, %s424, 0
      $region60: #{bottleneck_forward.1} parent=51 // pred_fallthru
        _
      // Predicated region
      $region61: #{bottleneck_forward.1} parent=51 // pred_check
        %p427 = pneg %p124
      $region62: #{bottleneck_forward.1} parent=51 // pred_check_branch
        %429 = sbr.rel (%p427) target = $region64
      $region63: #{bottleneck_forward.1} parent=51 // pred_region
        %s430 = sadd.s32 %s26, 1
        %s431 = smul.u32 %s430, 8
        %p432 = scmp.lt.s32.totalorder %s431, 15
        %s433 = scalar_select %p432, %s431, 15
        %p434 = scmp.lt.s32.totalorder %s25, 1
        %s435 = scalar_select %p434, %s25, 1
        %p436 = scmp.lt.s32.totalorder %s433, 15
        %s437 = scalar_select %p436, %s433, 15
        %s438 = smul.addr %s437, 2
        %s439 = smul.addr %s435, 32
        %s440 = sadd.s32 %s438, %s439
        %s441 = smul.addr %s440, 8
        %s442 = scalar_lea.vmem %s2, %s441
        %s443 = sadd.s32 %s26, 1
        %s444 = smul.u32 %s443, 8
        %p445 = scmp.lt.s32.totalorder %s444, 15
        %s446 = scalar_select %p445, %s444, 15
      $region64: #{bottleneck_forward.1} parent=51 // pred_fallthru
        _
    $region52: #{bottleneck_forward.1} parent=5 // pred_fallthru
      _
    %p447 = scmp.le.s32.totalorder 1, %s18
    %p448 = scmp.lt.s32.totalorder %s18, 5
    %p449 = pnand %p447, %p448
    %p450 = pneg %p449
    // Predicated region
    $region65: #{bottleneck_forward.1} parent=5 // pred_check
      _
    $region66: #{bottleneck_forward.1} parent=5 // pred_check_branch
      %452 = sbr.rel (%p449) target = $region68
    $region67: #{bottleneck_forward.1} parent=5 // pred_region
      %s453 = ssub.s32 %s18, 1
      %s454 = smul.u32 8, %s28
      %p455 = scmp.lt.s32.totalorder %s27, 1
      %s456 = scalar_select %p455, %s27, 1
      %p457 = scmp.lt.s32.totalorder %s454, 15
      %s458 = scalar_select %p457, %s454, 15
      %s459 = smul.addr %s458, 2
      %s460 = smul.addr %s456, 32
      %s461 = sadd.s32 %s459, %s460
      %s462 = smul.addr %s461, 8
      %s463 = scalar_lea.vmem %s0, %s462
      %p464 = pneg %p58
      %p465 = pneg %p55
      %s466 = smul.u32 %s28, 8
      %s467 = ssub.s32 %s466, 1
      %p468 = scmp.gt.s32.totalorder %s467, 0
      %s469 = scalar_select %p468, %s467, 0
      %p470 = scmp.lt.s32.totalorder %s27, 1
      %s471 = scalar_select %p470, %s27, 1
      %p472 = scmp.lt.s32.totalorder %s469, 15
      %s473 = scalar_select %p472, %s469, 15
      %s474 = smul.addr %s473, 2
      %s475 = smul.addr %s471, 32
      %s476 = sadd.s32 %s474, %s475
      %s477 = smul.addr %s476, 8
      %s478 = scalar_lea.vmem %s1, %s477
      %p479 = pneg %p94
      %p480 = pneg %p91
      %s481 = sadd.s32 %s28, 1
      %s482 = smul.u32 %s481, 8
      %p483 = scmp.lt.s32.totalorder %s482, 15
      %s484 = scalar_select %p483, %s482, 15
      %p485 = scmp.lt.s32.totalorder %s27, 1
      %s486 = scalar_select %p485, %s27, 1
      %p487 = scmp.lt.s32.totalorder %s484, 15
      %s488 = scalar_select %p487, %s484, 15
      %s489 = smul.addr %s488, 2
      %s490 = smul.addr %s486, 32
      %s491 = sadd.s32 %s489, %s490
      %s492 = smul.addr %s491, 8
      %s493 = scalar_lea.vmem %s2, %s492
      %p494 = pneg %p130
      %p495 = pneg %p127
      %p496 = pneg %p151
      %p497 = pneg %p148
      %p498 = pneg %p172
      %p499 = pneg %p169
      %p500 = pneg %p193
      %p501 = pneg %p190
      %p502 = pneg %p214
      %p503 = pneg %p211
      %p504 = pneg %p235
      %p505 = pneg %p232
      %p506 = pneg %p256
      %p507 = pneg %p253
      %p508 = pneg %p277
      %p509 = pneg %p274
      %p510 = pneg %p298
      %p511 = pneg %p295
      %p512 = pneg %p319
      %p513 = pneg %p316
      %p514 = pneg %p347
      %p515 = pneg %p344
      %s516 = smul.u32 8, %s28
      %p517 = scmp.lt.s32.totalorder %s27, 1
      %s518 = scalar_select %p517, %s27, 1
      %p519 = scmp.lt.s32.totalorder %s516, 15
      %s520 = scalar_select %p519, %s516, 15
      %s521 = smul.addr %s520, 2
      %s522 = smul.addr %s518, 32
      %s523 = sadd.s32 %s521, %s522
      %s524 = smul.addr %s523, 8
      %s525 = scalar_lea.vmem %s12, %s524
      %s526 = smul.u32 8, %s28
      %p527 = scmp.lt.s32.totalorder %s27, 1
      %s528 = scalar_select %p527, %s27, 1
      %p529 = scmp.lt.s32.totalorder %s526, 15
      %s530 = scalar_select %p529, %s526, 15
      %s531 = smul.addr %s530, 2
      %s532 = smul.addr %s528, 32
      %s533 = sadd.s32 %s531, %s532
      %s534 = smul.addr %s533, 8
      %s535 = scalar_lea.vmem %s0, %s534
      %s536 = smul.u32 8, %s28
      %s537 = smul.u32 %s28, 8
      %s538 = ssub.s32 %s537, 1
      %p539 = scmp.gt.s32.totalorder %s538, 0
      %s540 = scalar_select %p539, %s538, 0
      %p541 = scmp.lt.s32.totalorder %s27, 1
      %s542 = scalar_select %p541, %s27, 1
      %p543 = scmp.lt.s32.totalorder %s540, 15
      %s544 = scalar_select %p543, %s540, 15
      %s545 = smul.addr %s544, 2
      %s546 = smul.addr %s542, 32
      %s547 = sadd.s32 %s545, %s546
      %s548 = smul.addr %s547, 8
      %s549 = scalar_lea.vmem %s1, %s548
      %s550 = smul.u32 %s28, 8
      %s551 = ssub.s32 %s550, 1
      %p552 = scmp.gt.s32.totalorder %s551, 0
      %s553 = scalar_select %p552, %s551, 0
      %s554 = sadd.s32 %s28, 1
      %s555 = smul.u32 %s554, 8
      %p556 = scmp.lt.s32.totalorder %s555, 15
      %s557 = scalar_select %p556, %s555, 15
      %p558 = scmp.lt.s32.totalorder %s27, 1
      %s559 = scalar_select %p558, %s27, 1
      %p560 = scmp.lt.s32.totalorder %s557, 15
      %s561 = scalar_select %p560, %s557, 15
      %s562 = smul.addr %s561, 2
      %s563 = smul.addr %s559, 32
      %s564 = sadd.s32 %s562, %s563
      %s565 = smul.addr %s564, 8
      %s566 = scalar_lea.vmem %s2, %s565
      %s567 = sadd.s32 %s28, 1
      %s568 = smul.u32 %s567, 8
      %p569 = scmp.lt.s32.totalorder %s568, 15
      %s570 = scalar_select %p569, %s568, 15
      %s571 = smul.u32 8, %s28
      %p572 = scmp.lt.s32.totalorder %s27, 1
      %s573 = scalar_select %p572, %s27, 1
      %p574 = scmp.lt.s32.totalorder %s571, 15
      %s575 = scalar_select %p574, %s571, 15
      %s576 = smul.addr %s575, 2
      %s577 = smul.addr %s573, 32
      %s578 = sadd.s32 %s576, %s577
      %s579 = smul.addr %s578, 8
      %s580 = scalar_lea.vmem %s12, %s579
      %s581 = smul.u32 8, %s28
      %p583 = scmp.eq.s32.totalorder %s28, 0
      %s584 = scalar_select %p583, 0.0, 1.0
      %p585 = scmp.eq.s32.totalorder %s28, 1
      %s586 = scalar_select %p585, 0.0, 1.0
      %v587 = vld [vmem:[%s535] sm:$0xff]
      %v588 = vld [vmem:[%s535 + $0x8] sm:$0xff]
      %v589 = vld [vmem:[%s535 + $0x10] sm:$0xff]
      %v590 = vld [vmem:[%s535 + $0x18] sm:$0xff]
      %v591 = vld [vmem:[%s535 + $0x20] sm:$0xff]
      %v592 = vld [vmem:[%s535 + $0x28] sm:$0xff]
      %v593 = vld [vmem:[%s535 + $0x30] sm:$0xff]
      %v594 = vld [vmem:[%s535 + $0x38] sm:$0xff]
      %v595 = vld [vmem:[%s535 + $0x40] sm:$0xff]
      %v596 = vld [vmem:[%s535 + $0x48] sm:$0xff]
      %v597 = vld [vmem:[%s535 + $0x50] sm:$0xff]
      %v598 = vld [vmem:[%s535 + $0x58] sm:$0xff]
      %v599 = vld [vmem:[%s535 + $0x60] sm:$0xff]
      %v600 = vld [vmem:[%s535 + $0x68] sm:$0xff]
      %v601 = vld [vmem:[%s535 + $0x70] sm:$0xff]
      %v602 = vld [vmem:[%s535 + $0x78] sm:$0xff]
      %v603 = vld [vmem:[%s549] sm:$0xff]
      %v604 = vld [vmem:[%s549 + $0x8] sm:$0xff]
      %v605 = vld [vmem:[%s566] sm:$0xff]
      %v606 = vld [vmem:[%s566 + $0x8] sm:$0xff]
      %v607 = vld [vmem:[%s3] sm:$0xf]
      %v608 = vld [vmem:[%s3 + $0x4] sm:$0xf]
      %v609 = vld [vmem:[%s3 + $0x8] sm:$0xf]
      %v610 = vld [vmem:[%s3 + $0xc] sm:$0xf]
      %v611 = vld [vmem:[%s3 + $0x10] sm:$0xf]
      %v612 = vld [vmem:[%s3 + $0x14] sm:$0xf]
      %v613 = vld [vmem:[%s3 + $0x18] sm:$0xf]
      %v614 = vld [vmem:[%s3 + $0x1c] sm:$0xf]
      %v615 = vld [vmem:[%s3 + $0x20] sm:$0xf]
      %v616 = vld [vmem:[%s3 + $0x24] sm:$0xf]
      %v617 = vld [vmem:[%s3 + $0x28] sm:$0xf]
      %v618 = vld [vmem:[%s3 + $0x2c] sm:$0xf]
      %v619 = vld [vmem:[%s3 + $0x30] sm:$0xf]
      %v620 = vld [vmem:[%s3 + $0x34] sm:$0xf]
      %v621 = vld [vmem:[%s3 + $0x38] sm:$0xf]
      %v622 = vld [vmem:[%s3 + $0x3c] sm:$0xf]
      %v623 = vld [vmem:[%s4] sm:$0x1]
      %v624 = vld [vmem:[%s5] sm:$0x1]
      %v625 = vpack.c.bf16 %v588, %v587
      %v626 = vpack.c.bf16 %v590, %v589
      %v627 = vpack.c.bf16 %v592, %v591
      %v628 = vpack.c.bf16 %v594, %v593
      %v629 = vpack.c.bf16 %v596, %v595
      %v630 = vpack.c.bf16 %v598, %v597
      %v631 = vpack.c.bf16 %v600, %v599
      %v632 = vpack.c.bf16 %v602, %v601
      %v649 = vunpack.c.l.b16 %v607
      %v650 = vunpack.c.l.b16 %v608
      %v651 = vunpack.c.l.b16 %v609
      %v652 = vunpack.c.l.b16 %v610
      %v653 = vunpack.c.l.b16 %v611
      %v654 = vunpack.c.l.b16 %v612
      %v655 = vunpack.c.l.b16 %v613
      %v656 = vunpack.c.l.b16 %v614
      %v657 = vunpack.c.l.b16 %v615
      %v658 = vunpack.c.l.b16 %v616
      %v659 = vunpack.c.l.b16 %v617
      %v660 = vunpack.c.l.b16 %v618
      %v661 = vunpack.c.l.b16 %v619
      %v662 = vunpack.c.l.b16 %v620
      %v663 = vunpack.c.l.b16 %v621
      %v664 = vunpack.c.l.b16 %v622
      %v665 = vpack.c.b16 %v650, %v649
      %v666 = vpack.c.b16 %v652, %v651
      %v667 = vpack.c.b16 %v654, %v653
      %v668 = vpack.c.b16 %v656, %v655
      %v669 = vpack.c.b16 %v658, %v657
      %v670 = vpack.c.b16 %v660, %v659
      %v671 = vpack.c.b16 %v662, %v661
      %v672 = vpack.c.b16 %v664, %v663
      %681 = vmatprep.subr.bf16.mxu0 0
      %682 = vmatpush1.bf16.msra.mxu0 %v665
      %683 = vmatprep.subr.bf16.mxu0 0
      %684 = vmatpush1.bf16.msra.mxu0 %v666
      %685 = vmatprep.subr.bf16.mxu0 0
      %686 = vmatpush1.bf16.msra.mxu0 %v667
      %687 = vmatprep.subr.bf16.mxu0 0
      %688 = vmatpush1.bf16.msra.mxu0 %v668
      %689 = vmatprep.subr.bf16.mxu0 0
      %690 = vmatpush1.bf16.msra.mxu0 %v669
      %691 = vmatprep.subr.bf16.mxu0 0
      %692 = vmatpush1.bf16.msra.mxu0 %v670
      %693 = vmatprep.subr.bf16.mxu0 0
      %694 = vmatpush1.bf16.msra.mxu0 %v671
      %695 = vmatprep.subr.bf16.mxu0 0
      %696 = vmatpush1.bf16.msra.mxu0 %v672
      %697 = vmatprep.subr.bf16.mxu0 0
      %698 = vmatpush1.bf16.msra.mxu0 0
      %699 = vmatprep.subr.bf16.mxu0 0
      %700 = vmatpush1.bf16.msra.mxu0 0
      %701 = vmatprep.subr.bf16.mxu0 0
      %702 = vmatpush1.bf16.msra.mxu0 0
      %703 = vmatprep.subr.bf16.mxu0 0
      %704 = vmatpush1.bf16.msra.mxu0 0
      %705 = vmatprep.subr.bf16.mxu0 0
      %706 = vmatpush1.bf16.msra.mxu0 0
      %707 = vmatprep.subr.bf16.mxu0 0
      %708 = vmatpush1.bf16.msra.mxu0 0
      %709 = vmatprep.subr.bf16.mxu0 0
      %710 = vmatpush1.bf16.msra.mxu0 0
      %711 = vmatprep.subr.bf16.mxu0 0
      %712 = vmatpush1.bf16.msra.mxu0 0
      %713 = vmatprep.mubr.bf16.mxu0 0
      %714 = vmatmul.mubr.bf16.gmra.mrb[0].mxu0 %v625
      %v715 = vpop.f32.mrb[0].mxu0
      %v716 = vadd.f32 0.0, %v715
      %v717 = vpop.f32.mrb[0].mxu0
      %v718 = vpop.f32.mrb[0].mxu0
      %v719 = vadd.f32 0.0, %v718
      %v720 = vpop.f32.mrb[0].mxu0
      %721 = vmatprep.mubr.bf16.mxu0 0
      %722 = vmatmul.mubr.bf16.gmra.mrb[0].mxu0 %v626
      %v723 = vpop.f32.mrb[0].mxu0
      %v724 = vadd.f32 0.0, %v723
      %v725 = vpop.f32.mrb[0].mxu0
      %v726 = vpop.f32.mrb[0].mxu0
      %v727 = vadd.f32 0.0, %v726
      %v728 = vpop.f32.mrb[0].mxu0
      %729 = vmatprep.mubr.bf16.mxu0 0
      %730 = vmatmul.mubr.bf16.gmra.mrb[0].mxu0 %v627
      %v731 = vpop.f32.mrb[0].mxu0
      %v732 = vadd.f32 0.0, %v731
      %v733 = vpop.f32.mrb[0].mxu0
      %v734 = vpop.f32.mrb[0].mxu0
      %v735 = vadd.f32 0.0, %v734
      %v736 = vpop.f32.mrb[0].mxu0
      %737 = vmatprep.mubr.bf16.mxu0 0
      %738 = vmatmul.mubr.bf16.gmra.mrb[0].mxu0 %v628
      %v739 = vpop.f32.mrb[0].mxu0
      %v740 = vadd.f32 0.0, %v739
      %v741 = vpop.f32.mrb[0].mxu0
      %v742 = vpop.f32.mrb[0].mxu0
      %v743 = vadd.f32 0.0, %v742
      %v744 = vpop.f32.mrb[0].mxu0
      %745 = vmatprep.mubr.bf16.mxu0 0
      %746 = vmatmul.mubr.bf16.gmra.mrb[0].mxu0 %v629
      %v747 = vpop.f32.mrb[0].mxu0
      %v748 = vadd.f32 0.0, %v747
      %v749 = vpop.f32.mrb[0].mxu0
      %v750 = vpop.f32.mrb[0].mxu0
      %v751 = vadd.f32 0.0, %v750
      %v752 = vpop.f32.mrb[0].mxu0
      %753 = vmatprep.mubr.bf16.mxu0 0
      %754 = vmatmul.mubr.bf16.gmra.mrb[0].mxu0 %v630
      %v755 = vpop.f32.mrb[0].mxu0
      %v756 = vadd.f32 0.0, %v755
      %v757 = vpop.f32.mrb[0].mxu0
      %v758 = vpop.f32.mrb[0].mxu0
      %v759 = vadd.f32 0.0, %v758
      %v760 = vpop.f32.mrb[0].mxu0
      %761 = vmatprep.mubr.bf16.mxu0 0
      %762 = vmatmul.mubr.bf16.gmra.mrb[0].mxu0 %v631
      %v763 = vpop.f32.mrb[0].mxu0
      %v764 = vadd.f32 0.0, %v763
      %v765 = vpop.f32.mrb[0].mxu0
      %v766 = vpop.f32.mrb[0].mxu0
      %v767 = vadd.f32 0.0, %v766
      %v768 = vpop.f32.mrb[0].mxu0
      %769 = vmatprep.mubr.bf16.mxu0 0
      %770 = vmatmul.mubr.bf16.gmra.mrb[0].mxu0 %v632
      %v771 = vpop.f32.mrb[0].mxu0
      %v772 = vadd.f32 0.0, %v771
      %v773 = vpop.f32.mrb[0].mxu0
      %v774 = vpop.f32.mrb[0].mxu0
      %v775 = vadd.f32 0.0, %v774
      %v776 = vpop.f32.mrb[0].mxu0
      %777 = vdwg.mxu0
      %v779 = vlaneseq
      %v780 = vshrl.u32 %v779, 7
      %v781 = vsub.s32 0, %v780
      %v782 = vrot.slane %v623, %v781
      %v784 = vmul.f32 %v716, %v782
      %v785 = vmul.f32 %v719, %v782
      %v786 = vmul.f32 %v724, %v782
      %v787 = vmul.f32 %v727, %v782
      %v788 = vmul.f32 %v732, %v782
      %v789 = vmul.f32 %v735, %v782
      %v790 = vmul.f32 %v740, %v782
      %v791 = vmul.f32 %v743, %v782
      %v792 = vmul.f32 %v748, %v782
      %v793 = vmul.f32 %v751, %v782
      %v794 = vmul.f32 %v756, %v782
      %v795 = vmul.f32 %v759, %v782
      %v796 = vmul.f32 %v764, %v782
      %v797 = vmul.f32 %v767, %v782
      %v798 = vmul.f32 %v772, %v782
      %v799 = vmul.f32 %v775, %v782
      %v801 = vlaneseq
      %v802 = vshrl.u32 %v801, 7
      %v803 = vsub.s32 0, %v802
      %v804 = vrot.slane %v624, %v803
      %v806 = vadd.f32 %v784, %v804
      %v807 = vadd.f32 %v785, %v804
      %v808 = vadd.f32 %v786, %v804
      %v809 = vadd.f32 %v787, %v804
      %v810 = vadd.f32 %v788, %v804
      %v811 = vadd.f32 %v789, %v804
      %v812 = vadd.f32 %v790, %v804
      %v813 = vadd.f32 %v791, %v804
      %v814 = vadd.f32 %v792, %v804
      %v815 = vadd.f32 %v793, %v804
      %v816 = vadd.f32 %v794, %v804
      %v817 = vadd.f32 %v795, %v804
      %v818 = vadd.f32 %v796, %v804
      %v819 = vadd.f32 %v797, %v804
      %v820 = vadd.f32 %v798, %v804
      %v821 = vadd.f32 %v799, %v804
      %v822 = vmax.f32 %v806, 0.0
      %v823 = vmax.f32 %v807, 0.0
      %v824 = vmax.f32 %v808, 0.0
      %v825 = vmax.f32 %v809, 0.0
      %v826 = vmax.f32 %v810, 0.0
      %v827 = vmax.f32 %v811, 0.0
      %v828 = vmax.f32 %v812, 0.0
      %v829 = vmax.f32 %v813, 0.0
      %v830 = vmax.f32 %v814, 0.0
      %v831 = vmax.f32 %v815, 0.0
      %v832 = vmax.f32 %v816, 0.0
      %v833 = vmax.f32 %v817, 0.0
      %v834 = vmax.f32 %v818, 0.0
      %v835 = vmax.f32 %v819, 0.0
      %v836 = vmax.f32 %v820, 0.0
      %v837 = vmax.f32 %v821, 0.0
      %v838 = vpack.c.bf16 %v604, %v603
      %839 = vmatprep.subr.bf16.mxu0 0
      %840 = vmatpush1.bf16.msra.mxu0 %v665
      %841 = vmatprep.subr.bf16.mxu0 0
      %842 = vmatpush1.bf16.msra.mxu0 %v666
      %843 = vmatprep.subr.bf16.mxu0 0
      %844 = vmatpush1.bf16.msra.mxu0 %v667
      %845 = vmatprep.subr.bf16.mxu0 0
      %846 = vmatpush1.bf16.msra.mxu0 %v668
      %847 = vmatprep.subr.bf16.mxu0 0
      %848 = vmatpush1.bf16.msra.mxu0 %v669
      %849 = vmatprep.subr.bf16.mxu0 0
      %850 = vmatpush1.bf16.msra.mxu0 %v670
      %851 = vmatprep.subr.bf16.mxu0 0
      %852 = vmatpush1.bf16.msra.mxu0 %v671
      %853 = vmatprep.subr.bf16.mxu0 0
      %854 = vmatpush1.bf16.msra.mxu0 %v672
      %855 = vmatprep.subr.bf16.mxu0 0
      %856 = vmatpush1.bf16.msra.mxu0 0
      %857 = vmatprep.subr.bf16.mxu0 0
      %858 = vmatpush1.bf16.msra.mxu0 0
      %859 = vmatprep.subr.bf16.mxu0 0
      %860 = vmatpush1.bf16.msra.mxu0 0
      %861 = vmatprep.subr.bf16.mxu0 0
      %862 = vmatpush1.bf16.msra.mxu0 0
      %863 = vmatprep.subr.bf16.mxu0 0
      %864 = vmatpush1.bf16.msra.mxu0 0
      %865 = vmatprep.subr.bf16.mxu0 0
      %866 = vmatpush1.bf16.msra.mxu0 0
      %867 = vmatprep.subr.bf16.mxu0 0
      %868 = vmatpush1.bf16.msra.mxu0 0
      %869 = vmatprep.subr.bf16.mxu0 0
      %870 = vmatpush1.bf16.msra.mxu0 0
      %871 = vmatprep.mubr.bf16.mxu0 0
      %872 = vmatmul.mubr.bf16.gmra.mrb[0].mxu0 %v838
      %v873 = vpop.f32.mrb[0].mxu0
      %v874 = vadd.f32 0.0, %v873
      %v875 = vpop.f32.mrb[0].mxu0
      %v876 = vpop.f32.mrb[0].mxu0
      %v877 = vadd.f32 0.0, %v876
      %v878 = vpop.f32.mrb[0].mxu0
      %879 = vdwg.mxu0
      %v880 = vmul.f32 %v874, %v782
      %v881 = vmul.f32 %v877, %v782
      %v882 = vadd.f32 %v880, %v804
      %v883 = vadd.f32 %v881, %v804
      %v884 = vmax.f32 %v882, 0.0
      %v885 = vmax.f32 %v883, 0.0
      %v886 = vstv %s584
      %v887 = vmul.f32 %v884, %v886
      %v888 = vmul.f32 %v885, %v886
      %v889 = vpack.c.bf16 %v606, %v605
      %890 = vmatprep.subr.bf16.mxu0 0
      %891 = vmatpush1.bf16.msra.mxu0 %v665
      %892 = vmatprep.subr.bf16.mxu0 0
      %893 = vmatpush1.bf16.msra.mxu0 %v666
      %894 = vmatprep.subr.bf16.mxu0 0
      %895 = vmatpush1.bf16.msra.mxu0 %v667
      %896 = vmatprep.subr.bf16.mxu0 0
      %897 = vmatpush1.bf16.msra.mxu0 %v668
      %898 = vmatprep.subr.bf16.mxu0 0
      %899 = vmatpush1.bf16.msra.mxu0 %v669
      %900 = vmatprep.subr.bf16.mxu0 0
      %901 = vmatpush1.bf16.msra.mxu0 %v670
      %902 = vmatprep.subr.bf16.mxu0 0
      %903 = vmatpush1.bf16.msra.mxu0 %v671
      %904 = vmatprep.subr.bf16.mxu0 0
      %905 = vmatpush1.bf16.msra.mxu0 %v672
      %906 = vmatprep.subr.bf16.mxu0 0
      %907 = vmatpush1.bf16.msra.mxu0 0
      %908 = vmatprep.subr.bf16.mxu0 0
      %909 = vmatpush1.bf16.msra.mxu0 0
      %910 = vmatprep.subr.bf16.mxu0 0
      %911 = vmatpush1.bf16.msra.mxu0 0
      %912 = vmatprep.subr.bf16.mxu0 0
      %913 = vmatpush1.bf16.msra.mxu0 0
      %914 = vmatprep.subr.bf16.mxu0 0
      %915 = vmatpush1.bf16.msra.mxu0 0
      %916 = vmatprep.subr.bf16.mxu0 0
      %917 = vmatpush1.bf16.msra.mxu0 0
      %918 = vmatprep.subr.bf16.mxu0 0
      %919 = vmatpush1.bf16.msra.mxu0 0
      %920 = vmatprep.subr.bf16.mxu0 0
      %921 = vmatpush1.bf16.msra.mxu0 0
      %922 = vmatprep.mubr.bf16.mxu0 0
      %923 = vmatmul.mubr.bf16.gmra.mrb[0].mxu0 %v889
      %v924 = vpop.f32.mrb[0].mxu0
      %v925 = vadd.f32 0.0, %v924
      %v926 = vpop.f32.mrb[0].mxu0
      %v927 = vpop.f32.mrb[0].mxu0
      %v928 = vadd.f32 0.0, %v927
      %v929 = vpop.f32.mrb[0].mxu0
      %930 = vdwg.mxu0
      %v931 = vmul.f32 %v925, %v782
      %v932 = vmul.f32 %v928, %v782
      %v933 = vadd.f32 %v931, %v804
      %v934 = vadd.f32 %v932, %v804
      %v935 = vmax.f32 %v933, 0.0
      %v936 = vmax.f32 %v934, 0.0
      %v937 = vstv %s586
      %v938 = vmul.f32 %v935, %v937
      %v939 = vmul.f32 %v936, %v937
      %v940 = vpack.c.bf16 %v888, %v887
      %v941 = vpack.c.bf16 %v823, %v822
      %v942 = vpack.c.bf16 %v825, %v824
      %v943 = vpack.c.bf16 %v827, %v826
      %v944 = vpack.c.bf16 %v829, %v828
      %v945 = vpack.c.bf16 %v831, %v830
      %v946 = vpack.c.bf16 %v833, %v832
      %v947 = vpack.c.bf16 %v835, %v834
      %v948 = vpack.c.bf16 %v837, %v836
      %v949 = vpack.c.bf16 %v939, %v938
      %v951 = vrot.slane %v940, 4
      %vm960 = vcmask 1043456
      %v961 = vrot.slane %v941, 4
      %v962 = vrot.slane %v942, 4
      %v963 = vsel %vm960, %v961, %v962
      %v964 = vrot.slane %v943, 4
      %v965 = vsel %vm960, %v962, %v964
      %v966 = vrot.slane %v944, 4
      %v967 = vsel %vm960, %v964, %v966
      %v968 = vrot.slane %v945, 4
      %v969 = vsel %vm960, %v966, %v968
      %v970 = vrot.slane %v946, 4
      %v971 = vsel %vm960, %v968, %v970
      %v972 = vrot.slane %v947, 4
      %v973 = vsel %vm960, %v970, %v972
      %v974 = vrot.slane %v948, 4
      %v975 = vsel %vm960, %v972, %v974
      %v977 = vrot.slane %v949, 4
      %vm978 = vcmask 1043456
      %v981 = vsel %vm978, 0, %v951
      %v983 = vsel %vm978, %v951, %v961
      %v986 = vsel %vm978, %v974, %v977
      %v987 = vsel %vm978, %v977, 0
      %v988 = vlaneseq
      %v989 = vshrl.u32 %v988, 7
      %v990 = vadd.s32 %v989, 8
      %v991 = vadd.s32 %v989, 16
      %v992 = vadd.s32 %v989, 24
      %v993 = vadd.s32 %v989, 32
      %v994 = vadd.s32 %v989, 40
      %v995 = vadd.s32 %v989, 48
      %v996 = vadd.s32 %v989, 56
      %v997 = vadd.s32 %v989, 64
      %v998 = vadd.s32 %v989, 72
      %v999 = vadd.s32 %v989, 80
      %v1000 = vadd.s32 %v989, 88
      %v1001 = vadd.s32 %v989, 96
      %v1002 = vadd.s32 %v989, 104
      %v1003 = vadd.s32 %v989, 112
      %v1004 = vadd.s32 %v989, 120
      %vm1005 = vcmp.lt.s32.totalorder %v989, 0
      %v1006 = vsub.s32 0, %v989
      %v1007 = vsel %vm1005, %v1006, %v989
      %v1008 = vshrl.u32 %v1007, 4
      %v1009 = vand.u32 %v1007, 15
      %v1010 = vsub.s32 0, %v1009
      %v1011 = vsel %vm1005, %v1010, %v1009
      %vm1012 = vcmp.lt.s32.totalorder %v990, 0
      %v1013 = vsub.s32 0, %v990
      %v1014 = vsel %vm1012, %v1013, %v990
      %v1015 = vshrl.u32 %v1014, 4
      %v1016 = vand.u32 %v1014, 15
      %v1017 = vsub.s32 0, %v1016
      %v1018 = vsel %vm1012, %v1017, %v1016
      %vm1019 = vcmp.lt.s32.totalorder %v991, 0
      %v1020 = vsub.s32 0, %v991
      %v1021 = vsel %vm1019, %v1020, %v991
      %v1022 = vshrl.u32 %v1021, 4
      %v1023 = vand.u32 %v1021, 15
      %v1024 = vsub.s32 0, %v1023
      %v1025 = vsel %vm1019, %v1024, %v1023
      %vm1026 = vcmp.lt.s32.totalorder %v992, 0
      %v1027 = vsub.s32 0, %v992
      %v1028 = vsel %vm1026, %v1027, %v992
      %v1029 = vshrl.u32 %v1028, 4
      %v1030 = vand.u32 %v1028, 15
      %v1031 = vsub.s32 0, %v1030
      %v1032 = vsel %vm1026, %v1031, %v1030
      %vm1033 = vcmp.lt.s32.totalorder %v993, 0
      %v1034 = vsub.s32 0, %v993
      %v1035 = vsel %vm1033, %v1034, %v993
      %v1036 = vshrl.u32 %v1035, 4
      %v1037 = vand.u32 %v1035, 15
      %v1038 = vsub.s32 0, %v1037
      %v1039 = vsel %vm1033, %v1038, %v1037
      %vm1040 = vcmp.lt.s32.totalorder %v994, 0
      %v1041 = vsub.s32 0, %v994
      %v1042 = vsel %vm1040, %v1041, %v994
      %v1043 = vshrl.u32 %v1042, 4
      %v1044 = vand.u32 %v1042, 15
      %v1045 = vsub.s32 0, %v1044
      %v1046 = vsel %vm1040, %v1045, %v1044
      %vm1047 = vcmp.lt.s32.totalorder %v995, 0
      %v1048 = vsub.s32 0, %v995
      %v1049 = vsel %vm1047, %v1048, %v995
      %v1050 = vshrl.u32 %v1049, 4
      %v1051 = vand.u32 %v1049, 15
      %v1052 = vsub.s32 0, %v1051
      %v1053 = vsel %vm1047, %v1052, %v1051
      %vm1054 = vcmp.lt.s32.totalorder %v996, 0
      %v1055 = vsub.s32 0, %v996
      %v1056 = vsel %vm1054, %v1055, %v996
      %v1057 = vshrl.u32 %v1056, 4
      %v1058 = vand.u32 %v1056, 15
      %v1059 = vsub.s32 0, %v1058
      %v1060 = vsel %vm1054, %v1059, %v1058
      %vm1061 = vcmp.lt.s32.totalorder %v997, 0
      %v1062 = vsub.s32 0, %v997
      %v1063 = vsel %vm1061, %v1062, %v997
      %v1064 = vshrl.u32 %v1063, 4
      %v1065 = vand.u32 %v1063, 15
      %v1066 = vsub.s32 0, %v1065
      %v1067 = vsel %vm1061, %v1066, %v1065
      %vm1068 = vcmp.lt.s32.totalorder %v998, 0
      %v1069 = vsub.s32 0, %v998
      %v1070 = vsel %vm1068, %v1069, %v998
      %v1071 = vshrl.u32 %v1070, 4
      %v1072 = vand.u32 %v1070, 15
      %v1073 = vsub.s32 0, %v1072
      %v1074 = vsel %vm1068, %v1073, %v1072
      %vm1075 = vcmp.lt.s32.totalorder %v999, 0
      %v1076 = vsub.s32 0, %v999
      %v1077 = vsel %vm1075, %v1076, %v999
      %v1078 = vshrl.u32 %v1077, 4
      %v1079 = vand.u32 %v1077, 15
      %v1080 = vsub.s32 0, %v1079
      %v1081 = vsel %vm1075, %v1080, %v1079
      %vm1082 = vcmp.lt.s32.totalorder %v1000, 0
      %v1083 = vsub.s32 0, %v1000
      %v1084 = vsel %vm1082, %v1083, %v1000
      %v1085 = vshrl.u32 %v1084, 4
      %v1086 = vand.u32 %v1084, 15
      %v1087 = vsub.s32 0, %v1086
      %v1088 = vsel %vm1082, %v1087, %v1086
      %vm1089 = vcmp.lt.s32.totalorder %v1001, 0
      %v1090 = vsub.s32 0, %v1001
      %v1091 = vsel %vm1089, %v1090, %v1001
      %v1092 = vshrl.u32 %v1091, 4
      %v1093 = vand.u32 %v1091, 15
      %v1094 = vsub.s32 0, %v1093
      %v1095 = vsel %vm1089, %v1094, %v1093
      %vm1096 = vcmp.lt.s32.totalorder %v1002, 0
      %v1097 = vsub.s32 0, %v1002
      %v1098 = vsel %vm1096, %v1097, %v1002
      %v1099 = vshrl.u32 %v1098, 4
      %v1100 = vand.u32 %v1098, 15
      %v1101 = vsub.s32 0, %v1100
      %v1102 = vsel %vm1096, %v1101, %v1100
      %vm1103 = vcmp.lt.s32.totalorder %v1003, 0
      %v1104 = vsub.s32 0, %v1003
      %v1105 = vsel %vm1103, %v1104, %v1003
      %v1106 = vshrl.u32 %v1105, 4
      %v1107 = vand.u32 %v1105, 15
      %v1108 = vsub.s32 0, %v1107
      %v1109 = vsel %vm1103, %v1108, %v1107
      %vm1110 = vcmp.lt.s32.totalorder %v1004, 0
      %v1111 = vsub.s32 0, %v1004
      %v1112 = vsel %vm1110, %v1111, %v1004
      %v1113 = vshrl.u32 %v1112, 4
      %v1114 = vand.u32 %v1112, 15
      %v1115 = vsub.s32 0, %v1114
      %v1116 = vsel %vm1110, %v1115, %v1114
      %vm1117 = vcmp.ne.s32.totalorder %v1011, 0
      %vm1118 = vcmp.ne.s32.totalorder %v1018, 0
      %vm1119 = vcmp.ne.s32.totalorder %v1025, 0
      %vm1120 = vcmp.ne.s32.totalorder %v1032, 0
      %vm1121 = vcmp.ne.s32.totalorder %v1039, 0
      %vm1122 = vcmp.ne.s32.totalorder %v1046, 0
      %vm1123 = vcmp.ne.s32.totalorder %v1053, 0
      %vm1124 = vcmp.ne.s32.totalorder %v1060, 0
      %vm1125 = vcmp.ne.s32.totalorder %v1067, 0
      %vm1126 = vcmp.ne.s32.totalorder %v1074, 0
      %vm1127 = vcmp.ne.s32.totalorder %v1081, 0
      %vm1128 = vcmp.ne.s32.totalorder %v1088, 0
      %vm1129 = vcmp.ne.s32.totalorder %v1095, 0
      %vm1130 = vcmp.ne.s32.totalorder %v1102, 0
      %vm1131 = vcmp.ne.s32.totalorder %v1109, 0
      %vm1132 = vcmp.ne.s32.totalorder %v1116, 0
      %vm1133 = vcmp.lt.s32.totalorder %v1011, 0
      %vm1134 = vcmp.lt.s32.totalorder %v1018, 0
      %vm1135 = vcmp.lt.s32.totalorder %v1025, 0
      %vm1136 = vcmp.lt.s32.totalorder %v1032, 0
      %vm1137 = vcmp.lt.s32.totalorder %v1039, 0
      %vm1138 = vcmp.lt.s32.totalorder %v1046, 0
      %vm1139 = vcmp.lt.s32.totalorder %v1053, 0
      %vm1140 = vcmp.lt.s32.totalorder %v1060, 0
      %vm1141 = vcmp.lt.s32.totalorder %v1067, 0
      %vm1142 = vcmp.lt.s32.totalorder %v1074, 0
      %vm1143 = vcmp.lt.s32.totalorder %v1081, 0
      %vm1144 = vcmp.lt.s32.totalorder %v1088, 0
      %vm1145 = vcmp.lt.s32.totalorder %v1095, 0
      %vm1146 = vcmp.lt.s32.totalorder %v1102, 0
      %vm1147 = vcmp.lt.s32.totalorder %v1109, 0
      %vm1148 = vcmp.lt.s32.totalorder %v1116, 0
      %vm1149 = vmand %vm1133, %vm1117
      %vm1150 = vmand %vm1134, %vm1118
      %vm1151 = vmand %vm1135, %vm1119
      %vm1152 = vmand %vm1136, %vm1120
      %vm1153 = vmand %vm1137, %vm1121
      %vm1154 = vmand %vm1138, %vm1122
      %vm1155 = vmand %vm1139, %vm1123
      %vm1156 = vmand %vm1140, %vm1124
      %vm1157 = vmand %vm1141, %vm1125
      %vm1158 = vmand %vm1142, %vm1126
      %vm1159 = vmand %vm1143, %vm1127
      %vm1160 = vmand %vm1144, %vm1128
      %vm1161 = vmand %vm1145, %vm1129
      %vm1162 = vmand %vm1146, %vm1130
      %vm1163 = vmand %vm1147, %vm1131
      %vm1164 = vmand %vm1148, %vm1132
      %v1165 = vadd.s32 %v1011, 16
      %v1166 = vadd.s32 %v1018, 16
      %v1167 = vadd.s32 %v1025, 16
      %v1168 = vadd.s32 %v1032, 16
      %v1169 = vadd.s32 %v1039, 16
      %v1170 = vadd.s32 %v1046, 16
      %v1171 = vadd.s32 %v1053, 16
      %v1172 = vadd.s32 %v1060, 16
      %v1173 = vadd.s32 %v1067, 16
      %v1174 = vadd.s32 %v1074, 16
      %v1175 = vadd.s32 %v1081, 16
      %v1176 = vadd.s32 %v1088, 16
      %v1177 = vadd.s32 %v1095, 16
      %v1178 = vadd.s32 %v1102, 16
      %v1179 = vadd.s32 %v1109, 16
      %v1180 = vadd.s32 %v1116, 16
      %v1181 = vsel %vm1149, %v1165, %v1011
      %v1182 = vsel %vm1150, %v1166, %v1018
      %v1183 = vsel %vm1151, %v1167, %v1025
      %v1184 = vsel %vm1152, %v1168, %v1032
      %v1185 = vsel %vm1153, %v1169, %v1039
      %v1186 = vsel %vm1154, %v1170, %v1046
      %v1187 = vsel %vm1155, %v1171, %v1053
      %v1188 = vsel %vm1156, %v1172, %v1060
      %v1189 = vsel %vm1157, %v1173, %v1067
      %v1190 = vsel %vm1158, %v1174, %v1074
      %v1191 = vsel %vm1159, %v1175, %v1081
      %v1192 = vsel %vm1160, %v1176, %v1088
      %v1193 = vsel %vm1161, %v1177, %v1095
      %v1194 = vsel %vm1162, %v1178, %v1102
      %v1195 = vsel %vm1163, %v1179, %v1109
      %v1196 = vsel %vm1164, %v1180, %v1116
      %v1197 = vld [vmem:[%s6] sm:$0xf]
      %v1198 = vld [vmem:[%s6 + $0x4] sm:$0xf]
      %v1199 = vld [vmem:[%s6 + $0x8] sm:$0xf]
      %v1200 = vld [vmem:[%s6 + $0xc] sm:$0xf]
      %v1201 = vld [vmem:[%s6 + $0x10] sm:$0xf]
      %v1202 = vld [vmem:[%s6 + $0x14] sm:$0xf]
      %v1203 = vld [vmem:[%s6 + $0x18] sm:$0xf]
      %v1204 = vld [vmem:[%s6 + $0x1c] sm:$0xf]
      %v1205 = vld [vmem:[%s6 + $0x20] sm:$0xf]
      %v1206 = vld [vmem:[%s6 + $0x24] sm:$0xf]
      %v1207 = vld [vmem:[%s6 + $0x28] sm:$0xf]
      %v1208 = vld [vmem:[%s6 + $0x2c] sm:$0xf]
      %v1209 = vld [vmem:[%s6 + $0x30] sm:$0xf]
      %v1210 = vld [vmem:[%s6 + $0x34] sm:$0xf]
      %v1211 = vld [vmem:[%s6 + $0x38] sm:$0xf]
      %v1212 = vld [vmem:[%s6 + $0x3c] sm:$0xf]
      %s1213 = scalar_lea.vmem %s6, 192
      %v1214 = vld [vmem:[%s1213] sm:$0xf]
      %v1215 = vld [vmem:[%s1213 + $0x4] sm:$0xf]
      %v1216 = vld [vmem:[%s1213 + $0x8] sm:$0xf]
      %v1217 = vld [vmem:[%s1213 + $0xc] sm:$0xf]
      %v1218 = vld [vmem:[%s1213 + $0x10] sm:$0xf]
      %v1219 = vld [vmem:[%s1213 + $0x14] sm:$0xf]
      %v1220 = vld [vmem:[%s1213 + $0x18] sm:$0xf]
      %v1221 = vld [vmem:[%s1213 + $0x1c] sm:$0xf]
      %v1222 = vld [vmem:[%s1213 + $0x20] sm:$0xf]
      %v1223 = vld [vmem:[%s1213 + $0x24] sm:$0xf]
      %v1224 = vld [vmem:[%s1213 + $0x28] sm:$0xf]
      %v1225 = vld [vmem:[%s1213 + $0x2c] sm:$0xf]
      %v1226 = vld [vmem:[%s1213 + $0x30] sm:$0xf]
      %v1227 = vld [vmem:[%s1213 + $0x34] sm:$0xf]
      %v1228 = vld [vmem:[%s1213 + $0x38] sm:$0xf]
      %v1229 = vld [vmem:[%s1213 + $0x3c] sm:$0xf]
      %vm1230 = vsmask.f32 4352
      %v1231 = vshrl.u32 %v983, 16
      %v1233 = vrot.slane %v1231, 3
      %v1234 = vshll.u32 %v983, 16
      %v1236 = vrot.slane %v1234, 4
      %v1237 = vor.u32 %v1233, %v1236
      %v1239 = vshrl.u32 %v963, 16
      %v1241 = vrot.slane %v1239, 3
      %v1242 = vshll.u32 %v963, 16
      %v1244 = vrot.slane %v1242, 4
      %v1245 = vor.u32 %v1241, %v1244
      %v1246 = vsel %vm1230, %v1237, %v1245
      %v1248 = vshrl.u32 %v965, 16
      %v1250 = vrot.slane %v1248, 3
      %v1251 = vshll.u32 %v965, 16
      %v1253 = vrot.slane %v1251, 4
      %v1254 = vor.u32 %v1250, %v1253
      %v1255 = vsel %vm1230, %v1245, %v1254
      %v1257 = vshrl.u32 %v967, 16
      %v1259 = vrot.slane %v1257, 3
      %v1260 = vshll.u32 %v967, 16
      %v1262 = vrot.slane %v1260, 4
      %v1263 = vor.u32 %v1259, %v1262
      %v1264 = vsel %vm1230, %v1254, %v1263
      %v1266 = vshrl.u32 %v969, 16
      %v1268 = vrot.slane %v1266, 3
      %v1269 = vshll.u32 %v969, 16
      %v1271 = vrot.slane %v1269, 4
      %v1272 = vor.u32 %v1268, %v1271
      %v1273 = vsel %vm1230, %v1263, %v1272
      %v1275 = vshrl.u32 %v971, 16
      %v1277 = vrot.slane %v1275, 3
      %v1278 = vshll.u32 %v971, 16
      %v1280 = vrot.slane %v1278, 4
      %v1281 = vor.u32 %v1277, %v1280
      %v1282 = vsel %vm1230, %v1272, %v1281
      %v1284 = vshrl.u32 %v973, 16
      %v1286 = vrot.slane %v1284, 3
      %v1287 = vshll.u32 %v973, 16
      %v1289 = vrot.slane %v1287, 4
      %v1290 = vor.u32 %v1286, %v1289
      %v1291 = vsel %vm1230, %v1281, %v1290
      %v1293 = vshrl.u32 %v975, 16
      %v1295 = vrot.slane %v1293, 3
      %v1296 = vshll.u32 %v975, 16
      %v1298 = vrot.slane %v1296, 4
      %v1299 = vor.u32 %v1295, %v1298
      %v1300 = vsel %vm1230, %v1290, %v1299
      %v1301 = vshrl.u32 %v986, 16
      %v1303 = vrot.slane %v1301, 3
      %v1304 = vshll.u32 %v986, 16
      %v1306 = vrot.slane %v1304, 4
      %v1307 = vor.u32 %v1303, %v1306
      %v1308 = vsel %vm1230, %v1299, %v1307
      %v1333 = vunpack.c.l.b16 %v1214
      %v1334 = vunpack.c.l.b16 %v1215
      %v1335 = vunpack.c.l.b16 %v1216
      %v1336 = vunpack.c.l.b16 %v1217
      %v1337 = vunpack.c.l.b16 %v1218
      %v1338 = vunpack.c.l.b16 %v1219
      %v1339 = vunpack.c.l.b16 %v1220
      %v1340 = vunpack.c.l.b16 %v1221
      %v1341 = vunpack.c.l.b16 %v1222
      %v1342 = vunpack.c.l.b16 %v1223
      %v1343 = vunpack.c.l.b16 %v1224
      %v1344 = vunpack.c.l.b16 %v1225
      %v1345 = vunpack.c.l.b16 %v1226
      %v1346 = vunpack.c.l.b16 %v1227
      %v1347 = vunpack.c.l.b16 %v1228
      %v1348 = vunpack.c.l.b16 %v1229
      %v1349 = vpack.c.b16 %v1334, %v1333
      %v1350 = vpack.c.b16 %v1336, %v1335
      %v1351 = vpack.c.b16 %v1338, %v1337
      %v1352 = vpack.c.b16 %v1340, %v1339
      %v1353 = vpack.c.b16 %v1342, %v1341
      %v1354 = vpack.c.b16 %v1344, %v1343
      %v1355 = vpack.c.b16 %v1346, %v1345
      %v1356 = vpack.c.b16 %v1348, %v1347
      %1365 = vmatprep.subr.bf16.mxu0 0
      %1366 = vmatpush1.bf16.msra.mxu0 %v1349
      %1367 = vmatprep.subr.bf16.mxu0 0
      %1368 = vmatpush1.bf16.msra.mxu0 %v1350
      %1369 = vmatprep.subr.bf16.mxu0 0
      %1370 = vmatpush1.bf16.msra.mxu0 %v1351
      %1371 = vmatprep.subr.bf16.mxu0 0
      %1372 = vmatpush1.bf16.msra.mxu0 %v1352
      %1373 = vmatprep.subr.bf16.mxu0 0
      %1374 = vmatpush1.bf16.msra.mxu0 %v1353
      %1375 = vmatprep.subr.bf16.mxu0 0
      %1376 = vmatpush1.bf16.msra.mxu0 %v1354
      %1377 = vmatprep.subr.bf16.mxu0 0
      %1378 = vmatpush1.bf16.msra.mxu0 %v1355
      %1379 = vmatprep.subr.bf16.mxu0 0
      %1380 = vmatpush1.bf16.msra.mxu0 %v1356
      %1381 = vmatprep.subr.bf16.mxu0 0
      %1382 = vmatpush1.bf16.msra.mxu0 0
      %1383 = vmatprep.subr.bf16.mxu0 0
      %1384 = vmatpush1.bf16.msra.mxu0 0
      %1385 = vmatprep.subr.bf16.mxu0 0
      %1386 = vmatpush1.bf16.msra.mxu0 0
      %1387 = vmatprep.subr.bf16.mxu0 0
      %1388 = vmatpush1.bf16.msra.mxu0 0
      %1389 = vmatprep.subr.bf16.mxu0 0
      %1390 = vmatpush1.bf16.msra.mxu0 0
      %1391 = vmatprep.subr.bf16.mxu0 0
      %1392 = vmatpush1.bf16.msra.mxu0 0
      %1393 = vmatprep.subr.bf16.mxu0 0
      %1394 = vmatpush1.bf16.msra.mxu0 0
      %1395 = vmatprep.subr.bf16.mxu0 0
      %1396 = vmatpush1.bf16.msra.mxu0 0
      %1397 = vmatprep.mubr.bf16.mxu0 0
      %1398 = vmatmul.mubr.bf16.gmra.mrb[0].mxu0 %v1246
      %v1399 = vpop.f32.mrb[0].mxu0
      %v1400 = vadd.f32 0.0, %v1399
      %v1401 = vpop.f32.mrb[0].mxu0
      %v1402 = vpop.f32.mrb[0].mxu0
      %v1403 = vadd.f32 0.0, %v1402
      %v1404 = vpop.f32.mrb[0].mxu0
      %1405 = vmatprep.mubr.bf16.mxu0 0
      %1406 = vmatmul.mubr.bf16.gmra.mrb[0].mxu0 %v1255
      %v1407 = vpop.f32.mrb[0].mxu0
      %v1408 = vadd.f32 0.0, %v1407
      %v1409 = vpop.f32.mrb[0].mxu0
      %v1410 = vpop.f32.mrb[0].mxu0
      %v1411 = vadd.f32 0.0, %v1410
      %v1412 = vpop.f32.mrb[0].mxu0
      %1413 = vmatprep.mubr.bf16.mxu0 0
      %1414 = vmatmul.mubr.bf16.gmra.mrb[0].mxu0 %v1264
      %v1415 = vpop.f32.mrb[0].mxu0
      %v1416 = vadd.f32 0.0, %v1415
      %v1417 = vpop.f32.mrb[0].mxu0
      %v1418 = vpop.f32.mrb[0].mxu0
      %v1419 = vadd.f32 0.0, %v1418
      %v1420 = vpop.f32.mrb[0].mxu0
      %1421 = vmatprep.mubr.bf16.mxu0 0
      %1422 = vmatmul.mubr.bf16.gmra.mrb[0].mxu0 %v1273
      %v1423 = vpop.f32.mrb[0].mxu0
      %v1424 = vadd.f32 0.0, %v1423
      %v1425 = vpop.f32.mrb[0].mxu0
      %v1426 = vpop.f32.mrb[0].mxu0
      %v1427 = vadd.f32 0.0, %v1426
      %v1428 = vpop.f32.mrb[0].mxu0
      %1429 = vmatprep.mubr.bf16.mxu0 0
      %1430 = vmatmul.mubr.bf16.gmra.mrb[0].mxu0 %v1282
      %v1431 = vpop.f32.mrb[0].mxu0
      %v1432 = vadd.f32 0.0, %v1431
      %v1433 = vpop.f32.mrb[0].mxu0
      %v1434 = vpop.f32.mrb[0].mxu0
      %v1435 = vadd.f32 0.0, %v1434
      %v1436 = vpop.f32.mrb[0].mxu0
      %1437 = vmatprep.mubr.bf16.mxu0 0
      %1438 = vmatmul.mubr.bf16.gmra.mrb[0].mxu0 %v1291
      %v1439 = vpop.f32.mrb[0].mxu0
      %v1440 = vadd.f32 0.0, %v1439
      %v1441 = vpop.f32.mrb[0].mxu0
      %v1442 = vpop.f32.mrb[0].mxu0
      %v1443 = vadd.f32 0.0, %v1442
      %v1444 = vpop.f32.mrb[0].mxu0
      %1445 = vmatprep.mubr.bf16.mxu0 0
      %1446 = vmatmul.mubr.bf16.gmra.mrb[0].mxu0 %v1300
      %v1447 = vpop.f32.mrb[0].mxu0
      %v1448 = vadd.f32 0.0, %v1447
      %v1449 = vpop.f32.mrb[0].mxu0
      %v1450 = vpop.f32.mrb[0].mxu0
      %v1451 = vadd.f32 0.0, %v1450
      %v1452 = vpop.f32.mrb[0].mxu0
      %1453 = vmatprep.mubr.bf16.mxu0 0
      %1454 = vmatmul.mubr.bf16.gmra.mrb[0].mxu0 %v1308
      %v1455 = vpop.f32.mrb[0].mxu0
      %v1456 = vadd.f32 0.0, %v1455
      %v1457 = vpop.f32.mrb[0].mxu0
      %v1458 = vpop.f32.mrb[0].mxu0
      %v1459 = vadd.f32 0.0, %v1458
      %v1460 = vpop.f32.mrb[0].mxu0
      %1461 = vdwg.mxu0
      %v1462 = vshrl.u32 %v981, 16
      %v1464 = vrot.slane %v1462, 3
      %v1465 = vshll.u32 %v981, 16
      %v1467 = vrot.slane %v1465, 4
      %v1468 = vor.u32 %v1464, %v1467
      %v1469 = vsel %vm1230, %v1468, %v1237
      %v1487 = vunpack.c.l.b16 %v1197
      %v1488 = vunpack.c.l.b16 %v1198
      %v1489 = vunpack.c.l.b16 %v1199
      %v1490 = vunpack.c.l.b16 %v1200
      %v1491 = vunpack.c.l.b16 %v1201
      %v1492 = vunpack.c.l.b16 %v1202
      %v1493 = vunpack.c.l.b16 %v1203
      %v1494 = vunpack.c.l.b16 %v1204
      %v1495 = vunpack.c.l.b16 %v1205
      %v1496 = vunpack.c.l.b16 %v1206
      %v1497 = vunpack.c.l.b16 %v1207
      %v1498 = vunpack.c.l.b16 %v1208
      %v1499 = vunpack.c.l.b16 %v1209
      %v1500 = vunpack.c.l.b16 %v1210
      %v1501 = vunpack.c.l.b16 %v1211
      %v1502 = vunpack.c.l.b16 %v1212
      %v1503 = vpack.c.b16 %v1488, %v1487
      %v1504 = vpack.c.b16 %v1490, %v1489
      %v1505 = vpack.c.b16 %v1492, %v1491
      %v1506 = vpack.c.b16 %v1494, %v1493
      %v1507 = vpack.c.b16 %v1496, %v1495
      %v1508 = vpack.c.b16 %v1498, %v1497
      %v1509 = vpack.c.b16 %v1500, %v1499
      %v1510 = vpack.c.b16 %v1502, %v1501
      %1519 = vmatprep.subr.bf16.mxu0 0
      %1520 = vmatpush1.bf16.msra.mxu0 %v1503
      %1521 = vmatprep.subr.bf16.mxu0 0
      %1522 = vmatpush1.bf16.msra.mxu0 %v1504
      %1523 = vmatprep.subr.bf16.mxu0 0
      %1524 = vmatpush1.bf16.msra.mxu0 %v1505
      %1525 = vmatprep.subr.bf16.mxu0 0
      %1526 = vmatpush1.bf16.msra.mxu0 %v1506
      %1527 = vmatprep.subr.bf16.mxu0 0
      %1528 = vmatpush1.bf16.msra.mxu0 %v1507
      %1529 = vmatprep.subr.bf16.mxu0 0
      %1530 = vmatpush1.bf16.msra.mxu0 %v1508
      %1531 = vmatprep.subr.bf16.mxu0 0
      %1532 = vmatpush1.bf16.msra.mxu0 %v1509
      %1533 = vmatprep.subr.bf16.mxu0 0
      %1534 = vmatpush1.bf16.msra.mxu0 %v1510
      %1535 = vmatprep.subr.bf16.mxu0 0
      %1536 = vmatpush1.bf16.msra.mxu0 0
      %1537 = vmatprep.subr.bf16.mxu0 0
      %1538 = vmatpush1.bf16.msra.mxu0 0
      %1539 = vmatprep.subr.bf16.mxu0 0
      %1540 = vmatpush1.bf16.msra.mxu0 0
      %1541 = vmatprep.subr.bf16.mxu0 0
      %1542 = vmatpush1.bf16.msra.mxu0 0
      %1543 = vmatprep.subr.bf16.mxu0 0
      %1544 = vmatpush1.bf16.msra.mxu0 0
      %1545 = vmatprep.subr.bf16.mxu0 0
      %1546 = vmatpush1.bf16.msra.mxu0 0
      %1547 = vmatprep.subr.bf16.mxu0 0
      %1548 = vmatpush1.bf16.msra.mxu0 0
      %1549 = vmatprep.subr.bf16.mxu0 0
      %1550 = vmatpush1.bf16.msra.mxu0 0
      %1551 = vmatprep.mubr.bf16.mxu0 0
      %1552 = vmatmul.mubr.bf16.gmra.mrb[0].mxu0 %v1469
      %v1553 = vpop.f32.mrb[0].mxu0
      %v1554 = vadd.f32 %v1400, %v1553
      %v1555 = vpop.f32.mrb[0].mxu0
      %v1556 = vpop.f32.mrb[0].mxu0
      %v1557 = vadd.f32 %v1403, %v1556
      %v1558 = vpop.f32.mrb[0].mxu0
      %1559 = vmatprep.mubr.bf16.mxu0 0
      %1560 = vmatmul.mubr.bf16.gmra.mrb[0].mxu0 %v1246
      %v1561 = vpop.f32.mrb[0].mxu0
      %v1562 = vadd.f32 %v1408, %v1561
      %v1563 = vpop.f32.mrb[0].mxu0
      %v1564 = vpop.f32.mrb[0].mxu0
      %v1565 = vadd.f32 %v1411, %v1564
      %v1566 = vpop.f32.mrb[0].mxu0
      %1567 = vmatprep.mubr.bf16.mxu0 0
      %1568 = vmatmul.mubr.bf16.gmra.mrb[0].mxu0 %v1255
      %v1569 = vpop.f32.mrb[0].mxu0
      %v1570 = vadd.f32 %v1416, %v1569
      %v1571 = vpop.f32.mrb[0].mxu0
      %v1572 = vpop.f32.mrb[0].mxu0
      %v1573 = vadd.f32 %v1419, %v1572
      %v1574 = vpop.f32.mrb[0].mxu0
      %1575 = vmatprep.mubr.bf16.mxu0 0
      %1576 = vmatmul.mubr.bf16.gmra.mrb[0].mxu0 %v1264
      %v1577 = vpop.f32.mrb[0].mxu0
      %v1578 = vadd.f32 %v1424, %v1577
      %v1579 = vpop.f32.mrb[0].mxu0
      %v1580 = vpop.f32.mrb[0].mxu0
      %v1581 = vadd.f32 %v1427, %v1580
      %v1582 = vpop.f32.mrb[0].mxu0
      %1583 = vmatprep.mubr.bf16.mxu0 0
      %1584 = vmatmul.mubr.bf16.gmra.mrb[0].mxu0 %v1273
      %v1585 = vpop.f32.mrb[0].mxu0
      %v1586 = vadd.f32 %v1432, %v1585
      %v1587 = vpop.f32.mrb[0].mxu0
      %v1588 = vpop.f32.mrb[0].mxu0
      %v1589 = vadd.f32 %v1435, %v1588
      %v1590 = vpop.f32.mrb[0].mxu0
      %1591 = vmatprep.mubr.bf16.mxu0 0
      %1592 = vmatmul.mubr.bf16.gmra.mrb[0].mxu0 %v1282
      %v1593 = vpop.f32.mrb[0].mxu0
      %v1594 = vadd.f32 %v1440, %v1593
      %v1595 = vpop.f32.mrb[0].mxu0
      %v1596 = vpop.f32.mrb[0].mxu0
      %v1597 = vadd.f32 %v1443, %v1596
      %v1598 = vpop.f32.mrb[0].mxu0
      %1599 = vmatprep.mubr.bf16.mxu0 0
      %1600 = vmatmul.mubr.bf16.gmra.mrb[0].mxu0 %v1291
      %v1601 = vpop.f32.mrb[0].mxu0
      %v1602 = vadd.f32 %v1448, %v1601
      %v1603 = vpop.f32.mrb[0].mxu0
      %v1604 = vpop.f32.mrb[0].mxu0
      %v1605 = vadd.f32 %v1451, %v1604
      %v1606 = vpop.f32.mrb[0].mxu0
      %1607 = vmatprep.mubr.bf16.mxu0 0
      %1608 = vmatmul.mubr.bf16.gmra.mrb[0].mxu0 %v1300
      %v1609 = vpop.f32.mrb[0].mxu0
      %v1610 = vadd.f32 %v1456, %v1609
      %v1611 = vpop.f32.mrb[0].mxu0
      %v1612 = vpop.f32.mrb[0].mxu0
      %v1613 = vadd.f32 %v1459, %v1612
      %v1614 = vpop.f32.mrb[0].mxu0
      %1615 = vdwg.mxu0
      %s1616 = scalar_lea.vmem %s6, 384
      %v1617 = vld [vmem:[%s1616] sm:$0xf]
      %v1618 = vld [vmem:[%s1616 + $0x4] sm:$0xf]
      %v1619 = vld [vmem:[%s1616 + $0x8] sm:$0xf]
      %v1620 = vld [vmem:[%s1616 + $0xc] sm:$0xf]
      %v1621 = vld [vmem:[%s1616 + $0x10] sm:$0xf]
      %v1622 = vld [vmem:[%s1616 + $0x14] sm:$0xf]
      %v1623 = vld [vmem:[%s1616 + $0x18] sm:$0xf]
      %v1624 = vld [vmem:[%s1616 + $0x1c] sm:$0xf]
      %v1625 = vld [vmem:[%s1616 + $0x20] sm:$0xf]
      %v1626 = vld [vmem:[%s1616 + $0x24] sm:$0xf]
      %v1627 = vld [vmem:[%s1616 + $0x28] sm:$0xf]
      %v1628 = vld [vmem:[%s1616 + $0x2c] sm:$0xf]
      %v1629 = vld [vmem:[%s1616 + $0x30] sm:$0xf]
      %v1630 = vld [vmem:[%s1616 + $0x34] sm:$0xf]
      %v1631 = vld [vmem:[%s1616 + $0x38] sm:$0xf]
      %v1632 = vld [vmem:[%s1616 + $0x3c] sm:$0xf]
      %v1633 = vshrl.u32 %v987, 16
      %v1635 = vrot.slane %v1633, 3
      %v1636 = vshll.u32 %v987, 16
      %v1638 = vrot.slane %v1636, 4
      %v1639 = vor.u32 %v1635, %v1638
      %v1640 = vsel %vm1230, %v1307, %v1639
      %v1658 = vunpack.c.l.b16 %v1617
      %v1659 = vunpack.c.l.b16 %v1618
      %v1660 = vunpack.c.l.b16 %v1619
      %v1661 = vunpack.c.l.b16 %v1620
      %v1662 = vunpack.c.l.b16 %v1621
      %v1663 = vunpack.c.l.b16 %v1622
      %v1664 = vunpack.c.l.b16 %v1623
      %v1665 = vunpack.c.l.b16 %v1624
      %v1666 = vunpack.c.l.b16 %v1625
      %v1667 = vunpack.c.l.b16 %v1626
      %v1668 = vunpack.c.l.b16 %v1627
      %v1669 = vunpack.c.l.b16 %v1628
      %v1670 = vunpack.c.l.b16 %v1629
      %v1671 = vunpack.c.l.b16 %v1630
      %v1672 = vunpack.c.l.b16 %v1631
      %v1673 = vunpack.c.l.b16 %v1632
      %v1674 = vpack.c.b16 %v1659, %v1658
      %v1675 = vpack.c.b16 %v1661, %v1660
      %v1676 = vpack.c.b16 %v1663, %v1662
      %v1677 = vpack.c.b16 %v1665, %v1664
      %v1678 = vpack.c.b16 %v1667, %v1666
      %v1679 = vpack.c.b16 %v1669, %v1668
      %v1680 = vpack.c.b16 %v1671, %v1670
      %v1681 = vpack.c.b16 %v1673, %v1672
      %1690 = vmatprep.subr.bf16.mxu0 0
      %1691 = vmatpush1.bf16.msra.mxu0 %v1674
      %1692 = vmatprep.subr.bf16.mxu0 0
      %1693 = vmatpush1.bf16.msra.mxu0 %v1675
      %1694 = vmatprep.subr.bf16.mxu0 0
      %1695 = vmatpush1.bf16.msra.mxu0 %v1676
      %1696 = vmatprep.subr.bf16.mxu0 0
      %1697 = vmatpush1.bf16.msra.mxu0 %v1677
      %1698 = vmatprep.subr.bf16.mxu0 0
      %1699 = vmatpush1.bf16.msra.mxu0 %v1678
      %1700 = vmatprep.subr.bf16.mxu0 0
      %1701 = vmatpush1.bf16.msra.mxu0 %v1679
      %1702 = vmatprep.subr.bf16.mxu0 0
      %1703 = vmatpush1.bf16.msra.mxu0 %v1680
      %1704 = vmatprep.subr.bf16.mxu0 0
      %1705 = vmatpush1.bf16.msra.mxu0 %v1681
      %1706 = vmatprep.subr.bf16.mxu0 0
      %1707 = vmatpush1.bf16.msra.mxu0 0
      %1708 = vmatprep.subr.bf16.mxu0 0
      %1709 = vmatpush1.bf16.msra.mxu0 0
      %1710 = vmatprep.subr.bf16.mxu0 0
      %1711 = vmatpush1.bf16.msra.mxu0 0
      %1712 = vmatprep.subr.bf16.mxu0 0
      %1713 = vmatpush1.bf16.msra.mxu0 0
      %1714 = vmatprep.subr.bf16.mxu0 0
      %1715 = vmatpush1.bf16.msra.mxu0 0
      %1716 = vmatprep.subr.bf16.mxu0 0
      %1717 = vmatpush1.bf16.msra.mxu0 0
      %1718 = vmatprep.subr.bf16.mxu0 0
      %1719 = vmatpush1.bf16.msra.mxu0 0
      %1720 = vmatprep.subr.bf16.mxu0 0
      %1721 = vmatpush1.bf16.msra.mxu0 0
      %1722 = vmatprep.mubr.bf16.mxu0 0
      %1723 = vmatmul.mubr.bf16.gmra.mrb[0].mxu0 %v1255
      %v1724 = vpop.f32.mrb[0].mxu0
      %v1725 = vadd.f32 0.0, %v1724
      %v1726 = vpop.f32.mrb[0].mxu0
      %v1727 = vpop.f32.mrb[0].mxu0
      %v1728 = vadd.f32 0.0, %v1727
      %v1729 = vpop.f32.mrb[0].mxu0
      %1730 = vmatprep.mubr.bf16.mxu0 0
      %1731 = vmatmul.mubr.bf16.gmra.mrb[0].mxu0 %v1264
      %v1732 = vpop.f32.mrb[0].mxu0
      %v1733 = vadd.f32 0.0, %v1732
      %v1734 = vpop.f32.mrb[0].mxu0
      %v1735 = vpop.f32.mrb[0].mxu0
      %v1736 = vadd.f32 0.0, %v1735
      %v1737 = vpop.f32.mrb[0].mxu0
      %1738 = vmatprep.mubr.bf16.mxu0 0
      %1739 = vmatmul.mubr.bf16.gmra.mrb[0].mxu0 %v1273
      %v1740 = vpop.f32.mrb[0].mxu0
      %v1741 = vadd.f32 0.0, %v1740
      %v1742 = vpop.f32.mrb[0].mxu0
      %v1743 = vpop.f32.mrb[0].mxu0
      %v1744 = vadd.f32 0.0, %v1743
      %v1745 = vpop.f32.mrb[0].mxu0
      %1746 = vmatprep.mubr.bf16.mxu0 0
      %1747 = vmatmul.mubr.bf16.gmra.mrb[0].mxu0 %v1282
      %v1748 = vpop.f32.mrb[0].mxu0
      %v1749 = vadd.f32 0.0, %v1748
      %v1750 = vpop.f32.mrb[0].mxu0
      %v1751 = vpop.f32.mrb[0].mxu0
      %v1752 = vadd.f32 0.0, %v1751
      %v1753 = vpop.f32.mrb[0].mxu0
      %1754 = vmatprep.mubr.bf16.mxu0 0
      %1755 = vmatmul.mubr.bf16.gmra.mrb[0].mxu0 %v1291
      %v1756 = vpop.f32.mrb[0].mxu0
      %v1757 = vadd.f32 0.0, %v1756
      %v1758 = vpop.f32.mrb[0].mxu0
      %v1759 = vpop.f32.mrb[0].mxu0
      %v1760 = vadd.f32 0.0, %v1759
      %v1761 = vpop.f32.mrb[0].mxu0
      %1762 = vmatprep.mubr.bf16.mxu0 0
      %1763 = vmatmul.mubr.bf16.gmra.mrb[0].mxu0 %v1300
      %v1764 = vpop.f32.mrb[0].mxu0
      %v1765 = vadd.f32 0.0, %v1764
      %v1766 = vpop.f32.mrb[0].mxu0
      %v1767 = vpop.f32.mrb[0].mxu0
      %v1768 = vadd.f32 0.0, %v1767
      %v1769 = vpop.f32.mrb[0].mxu0
      %1770 = vmatprep.mubr.bf16.mxu0 0
      %1771 = vmatmul.mubr.bf16.gmra.mrb[0].mxu0 %v1308
      %v1772 = vpop.f32.mrb[0].mxu0
      %v1773 = vadd.f32 0.0, %v1772
      %v1774 = vpop.f32.mrb[0].mxu0
      %v1775 = vpop.f32.mrb[0].mxu0
      %v1776 = vadd.f32 0.0, %v1775
      %v1777 = vpop.f32.mrb[0].mxu0
      %1778 = vmatprep.mubr.bf16.mxu0 0
      %1779 = vmatmul.mubr.bf16.gmra.mrb[0].mxu0 %v1640
      %v1780 = vpop.f32.mrb[0].mxu0
      %v1781 = vadd.f32 0.0, %v1780
      %v1782 = vpop.f32.mrb[0].mxu0
      %v1783 = vpop.f32.mrb[0].mxu0
      %v1784 = vadd.f32 0.0, %v1783
      %v1785 = vpop.f32.mrb[0].mxu0
      %1786 = vdwg.mxu0
      %v1787 = vadd.f32 %v1554, %v1725
      %v1788 = vadd.f32 %v1557, %v1728
      %v1789 = vadd.f32 %v1562, %v1733
      %v1790 = vadd.f32 %v1565, %v1736
      %v1791 = vadd.f32 %v1570, %v1741
      %v1792 = vadd.f32 %v1573, %v1744
      %v1793 = vadd.f32 %v1578, %v1749
      %v1794 = vadd.f32 %v1581, %v1752
      %v1795 = vadd.f32 %v1586, %v1757
      %v1796 = vadd.f32 %v1589, %v1760
      %v1797 = vadd.f32 %v1594, %v1765
      %v1798 = vadd.f32 %v1597, %v1768
      %v1799 = vadd.f32 %v1602, %v1773
      %v1800 = vadd.f32 %v1605, %v1776
      %v1801 = vadd.f32 %v1610, %v1781
      %v1802 = vadd.f32 %v1613, %v1784
      %vm1803 = vcmp.eq.s32.totalorder %v1181, 0
      %vm1804 = vcmp.eq.s32.totalorder %v1182, 0
      %vm1805 = vcmp.eq.s32.totalorder %v1183, 0
      %vm1806 = vcmp.eq.s32.totalorder %v1184, 0
      %vm1807 = vcmp.eq.s32.totalorder %v1185, 0
      %vm1808 = vcmp.eq.s32.totalorder %v1186, 0
      %vm1809 = vcmp.eq.s32.totalorder %v1187, 0
      %vm1810 = vcmp.eq.s32.totalorder %v1188, 0
      %vm1811 = vcmp.eq.s32.totalorder %v1189, 0
      %vm1812 = vcmp.eq.s32.totalorder %v1190, 0
      %vm1813 = vcmp.eq.s32.totalorder %v1191, 0
      %vm1814 = vcmp.eq.s32.totalorder %v1192, 0
      %vm1815 = vcmp.eq.s32.totalorder %v1193, 0
      %vm1816 = vcmp.eq.s32.totalorder %v1194, 0
      %vm1817 = vcmp.eq.s32.totalorder %v1195, 0
      %vm1818 = vcmp.eq.s32.totalorder %v1196, 0
      %v1819 = vsel %vm1803, 1, 0
      %v1820 = vsel %vm1804, 1, 0
      %v1821 = vsel %vm1805, 1, 0
      %v1822 = vsel %vm1806, 1, 0
      %v1823 = vsel %vm1807, 1, 0
      %v1824 = vsel %vm1808, 1, 0
      %v1825 = vsel %vm1809, 1, 0
      %v1826 = vsel %vm1810, 1, 0
      %v1827 = vsel %vm1811, 1, 0
      %v1828 = vsel %vm1812, 1, 0
      %v1829 = vsel %vm1813, 1, 0
      %v1830 = vsel %vm1814, 1, 0
      %v1831 = vsel %vm1815, 1, 0
      %v1832 = vsel %vm1816, 1, 0
      %v1833 = vsel %vm1817, 1, 0
      %v1834 = vsel %vm1818, 1, 0
      %vm1835 = vcmp.eq.s32.totalorder %v1819, 1
      %vm1836 = vcmp.eq.s32.totalorder %v1820, 1
      %vm1837 = vcmp.eq.s32.totalorder %v1821, 1
      %vm1838 = vcmp.eq.s32.totalorder %v1822, 1
      %vm1839 = vcmp.eq.s32.totalorder %v1823, 1
      %vm1840 = vcmp.eq.s32.totalorder %v1824, 1
      %vm1841 = vcmp.eq.s32.totalorder %v1825, 1
      %vm1842 = vcmp.eq.s32.totalorder %v1826, 1
      %vm1843 = vcmp.eq.s32.totalorder %v1827, 1
      %vm1844 = vcmp.eq.s32.totalorder %v1828, 1
      %vm1845 = vcmp.eq.s32.totalorder %v1829, 1
      %vm1846 = vcmp.eq.s32.totalorder %v1830, 1
      %vm1847 = vcmp.eq.s32.totalorder %v1831, 1
      %vm1848 = vcmp.eq.s32.totalorder %v1832, 1
      %vm1849 = vcmp.eq.s32.totalorder %v1833, 1
      %vm1850 = vcmp.eq.s32.totalorder %v1834, 1
      %v1851 = vsel %vm1835, 0.0, %v1787
      %v1852 = vsel %vm1836, 0.0, %v1788
      %v1853 = vsel %vm1837, 0.0, %v1789
      %v1854 = vsel %vm1838, 0.0, %v1790
      %v1855 = vsel %vm1839, 0.0, %v1791
      %v1856 = vsel %vm1840, 0.0, %v1792
      %v1857 = vsel %vm1841, 0.0, %v1793
      %v1858 = vsel %vm1842, 0.0, %v1794
      %v1859 = vsel %vm1843, 0.0, %v1795
      %v1860 = vsel %vm1844, 0.0, %v1796
      %v1861 = vsel %vm1845, 0.0, %v1797
      %v1862 = vsel %vm1846, 0.0, %v1798
      %v1863 = vsel %vm1847, 0.0, %v1799
      %v1864 = vsel %vm1848, 0.0, %v1800
      %v1865 = vsel %vm1849, 0.0, %v1801
      %v1866 = vsel %vm1850, 0.0, %v1802
      %v1867 = vadd.f32 %v1851, 0.0
      %v1868 = vadd.f32 %v1852, 0.0
      %v1869 = vadd.f32 %v1853, 0.0
      %v1870 = vadd.f32 %v1854, 0.0
      %v1871 = vadd.f32 %v1855, 0.0
      %v1872 = vadd.f32 %v1856, 0.0
      %v1873 = vadd.f32 %v1857, 0.0
      %v1874 = vadd.f32 %v1858, 0.0
      %v1875 = vadd.f32 %v1859, 0.0
      %v1876 = vadd.f32 %v1860, 0.0
      %v1877 = vadd.f32 %v1861, 0.0
      %v1878 = vadd.f32 %v1862, 0.0
      %v1879 = vadd.f32 %v1863, 0.0
      %v1880 = vadd.f32 %v1864, 0.0
      %v1881 = vadd.f32 %v1865, 0.0
      %v1882 = vadd.f32 %v1866, 0.0
      %s1883 = scalar_lea.vmem %s6, 64
      %v1884 = vld [vmem:[%s1883] sm:$0xf]
      %v1885 = vld [vmem:[%s1883 + $0x4] sm:$0xf]
      %v1886 = vld [vmem:[%s1883 + $0x8] sm:$0xf]
      %v1887 = vld [vmem:[%s1883 + $0xc] sm:$0xf]
      %v1888 = vld [vmem:[%s1883 + $0x10] sm:$0xf]
      %v1889 = vld [vmem:[%s1883 + $0x14] sm:$0xf]
      %v1890 = vld [vmem:[%s1883 + $0x18] sm:$0xf]
      %v1891 = vld [vmem:[%s1883 + $0x1c] sm:$0xf]
      %v1892 = vld [vmem:[%s1883 + $0x20] sm:$0xf]
      %v1893 = vld [vmem:[%s1883 + $0x24] sm:$0xf]
      %v1894 = vld [vmem:[%s1883 + $0x28] sm:$0xf]
      %v1895 = vld [vmem:[%s1883 + $0x2c] sm:$0xf]
      %v1896 = vld [vmem:[%s1883 + $0x30] sm:$0xf]
      %v1897 = vld [vmem:[%s1883 + $0x34] sm:$0xf]
      %v1898 = vld [vmem:[%s1883 + $0x38] sm:$0xf]
      %v1899 = vld [vmem:[%s1883 + $0x3c] sm:$0xf]
      %s1900 = scalar_lea.vmem %s6, 256
      %v1901 = vld [vmem:[%s1900] sm:$0xf]
      %v1902 = vld [vmem:[%s1900 + $0x4] sm:$0xf]
      %v1903 = vld [vmem:[%s1900 + $0x8] sm:$0xf]
      %v1904 = vld [vmem:[%s1900 + $0xc] sm:$0xf]
      %v1905 = vld [vmem:[%s1900 + $0x10] sm:$0xf]
      %v1906 = vld [vmem:[%s1900 + $0x14] sm:$0xf]
      %v1907 = vld [vmem:[%s1900 + $0x18] sm:$0xf]
      %v1908 = vld [vmem:[%s1900 + $0x1c] sm:$0xf]
      %v1909 = vld [vmem:[%s1900 + $0x20] sm:$0xf]
      %v1910 = vld [vmem:[%s1900 + $0x24] sm:$0xf]
      %v1911 = vld [vmem:[%s1900 + $0x28] sm:$0xf]
      %v1912 = vld [vmem:[%s1900 + $0x2c] sm:$0xf]
      %v1913 = vld [vmem:[%s1900 + $0x30] sm:$0xf]
      %v1914 = vld [vmem:[%s1900 + $0x34] sm:$0xf]
      %v1915 = vld [vmem:[%s1900 + $0x38] sm:$0xf]
      %v1916 = vld [vmem:[%s1900 + $0x3c] sm:$0xf]
      %v1919 = vrot.slane %v983, 4
      %v1920 = vrot.slane %v963, 4
      %v1921 = vsel %vm960, %v1919, %v1920
      %v1922 = vrot.slane %v965, 4
      %v1923 = vsel %vm960, %v1920, %v1922
      %v1924 = vrot.slane %v967, 4
      %v1925 = vsel %vm960, %v1922, %v1924
      %v1926 = vrot.slane %v969, 4
      %v1927 = vsel %vm960, %v1924, %v1926
      %v1928 = vrot.slane %v971, 4
      %v1929 = vsel %vm960, %v1926, %v1928
      %v1930 = vrot.slane %v973, 4
      %v1931 = vsel %vm960, %v1928, %v1930
      %v1932 = vrot.slane %v975, 4
      %v1933 = vsel %vm960, %v1930, %v1932
      %v1934 = vrot.slane %v986, 4
      %v1935 = vsel %vm960, %v1932, %v1934
      %v1960 = vunpack.c.l.b16 %v1901
      %v1961 = vunpack.c.l.b16 %v1902
      %v1962 = vunpack.c.l.b16 %v1903
      %v1963 = vunpack.c.l.b16 %v1904
      %v1964 = vunpack.c.l.b16 %v1905
      %v1965 = vunpack.c.l.b16 %v1906
      %v1966 = vunpack.c.l.b16 %v1907
      %v1967 = vunpack.c.l.b16 %v1908
      %v1968 = vunpack.c.l.b16 %v1909
      %v1969 = vunpack.c.l.b16 %v1910
      %v1970 = vunpack.c.l.b16 %v1911
      %v1971 = vunpack.c.l.b16 %v1912
      %v1972 = vunpack.c.l.b16 %v1913
      %v1973 = vunpack.c.l.b16 %v1914
      %v1974 = vunpack.c.l.b16 %v1915
      %v1975 = vunpack.c.l.b16 %v1916
      %v1976 = vpack.c.b16 %v1961, %v1960
      %v1977 = vpack.c.b16 %v1963, %v1962
      %v1978 = vpack.c.b16 %v1965, %v1964
      %v1979 = vpack.c.b16 %v1967, %v1966
      %v1980 = vpack.c.b16 %v1969, %v1968
      %v1981 = vpack.c.b16 %v1971, %v1970
      %v1982 = vpack.c.b16 %v1973, %v1972
      %v1983 = vpack.c.b16 %v1975, %v1974
      %1992 = vmatprep.subr.bf16.mxu0 0
      %1993 = vmatpush1.bf16.msra.mxu0 %v1976
      %1994 = vmatprep.subr.bf16.mxu0 0
      %1995 = vmatpush1.bf16.msra.mxu0 %v1977
      %1996 = vmatprep.subr.bf16.mxu0 0
      %1997 = vmatpush1.bf16.msra.mxu0 %v1978
      %1998 = vmatprep.subr.bf16.mxu0 0
      %1999 = vmatpush1.bf16.msra.mxu0 %v1979
      %2000 = vmatprep.subr.bf16.mxu0 0
      %2001 = vmatpush1.bf16.msra.mxu0 %v1980
      %2002 = vmatprep.subr.bf16.mxu0 0
      %2003 = vmatpush1.bf16.msra.mxu0 %v1981
      %2004 = vmatprep.subr.bf16.mxu0 0
      %2005 = vmatpush1.bf16.msra.mxu0 %v1982
      %2006 = vmatprep.subr.bf16.mxu0 0
      %2007 = vmatpush1.bf16.msra.mxu0 %v1983
      %2008 = vmatprep.subr.bf16.mxu0 0
      %2009 = vmatpush1.bf16.msra.mxu0 0
      %2010 = vmatprep.subr.bf16.mxu0 0
      %2011 = vmatpush1.bf16.msra.mxu0 0
      %2012 = vmatprep.subr.bf16.mxu0 0
      %2013 = vmatpush1.bf16.msra.mxu0 0
      %2014 = vmatprep.subr.bf16.mxu0 0
      %2015 = vmatpush1.bf16.msra.mxu0 0
      %2016 = vmatprep.subr.bf16.mxu0 0
      %2017 = vmatpush1.bf16.msra.mxu0 0
      %2018 = vmatprep.subr.bf16.mxu0 0
      %2019 = vmatpush1.bf16.msra.mxu0 0
      %2020 = vmatprep.subr.bf16.mxu0 0
      %2021 = vmatpush1.bf16.msra.mxu0 0
      %2022 = vmatprep.subr.bf16.mxu0 0
      %2023 = vmatpush1.bf16.msra.mxu0 0
      %2024 = vmatprep.mubr.bf16.mxu0 0
      %2025 = vmatmul.mubr.bf16.gmra.mrb[0].mxu0 %v1921
      %v2026 = vpop.f32.mrb[0].mxu0
      %v2027 = vadd.f32 0.0, %v2026
      %v2028 = vpop.f32.mrb[0].mxu0
      %v2029 = vpop.f32.mrb[0].mxu0
      %v2030 = vadd.f32 0.0, %v2029
      %v2031 = vpop.f32.mrb[0].mxu0
      %2032 = vmatprep.mubr.bf16.mxu0 0
      %2033 = vmatmul.mubr.bf16.gmra.mrb[0].mxu0 %v1923
      %v2034 = vpop.f32.mrb[0].mxu0
      %v2035 = vadd.f32 0.0, %v2034
      %v2036 = vpop.f32.mrb[0].mxu0
      %v2037 = vpop.f32.mrb[0].mxu0
      %v2038 = vadd.f32 0.0, %v2037
      %v2039 = vpop.f32.mrb[0].mxu0
      %2040 = vmatprep.mubr.bf16.mxu0 0
      %2041 = vmatmul.mubr.bf16.gmra.mrb[0].mxu0 %v1925
      %v2042 = vpop.f32.mrb[0].mxu0
      %v2043 = vadd.f32 0.0, %v2042
      %v2044 = vpop.f32.mrb[0].mxu0
      %v2045 = vpop.f32.mrb[0].mxu0
      %v2046 = vadd.f32 0.0, %v2045
      %v2047 = vpop.f32.mrb[0].mxu0
      %2048 = vmatprep.mubr.bf16.mxu0 0
      %2049 = vmatmul.mubr.bf16.gmra.mrb[0].mxu0 %v1927
      %v2050 = vpop.f32.mrb[0].mxu0
      %v2051 = vadd.f32 0.0, %v2050
      %v2052 = vpop.f32.mrb[0].mxu0
      %v2053 = vpop.f32.mrb[0].mxu0
      %v2054 = vadd.f32 0.0, %v2053
      %v2055 = vpop.f32.mrb[0].mxu0
      %2056 = vmatprep.mubr.bf16.mxu0 0
      %2057 = vmatmul.mubr.bf16.gmra.mrb[0].mxu0 %v1929
      %v2058 = vpop.f32.mrb[0].mxu0
      %v2059 = vadd.f32 0.0, %v2058
      %v2060 = vpop.f32.mrb[0].mxu0
      %v2061 = vpop.f32.mrb[0].mxu0
      %v2062 = vadd.f32 0.0, %v2061
      %v2063 = vpop.f32.mrb[0].mxu0
      %2064 = vmatprep.mubr.bf16.mxu0 0
      %2065 = vmatmul.mubr.bf16.gmra.mrb[0].mxu0 %v1931
      %v2066 = vpop.f32.mrb[0].mxu0
      %v2067 = vadd.f32 0.0, %v2066
      %v2068 = vpop.f32.mrb[0].mxu0
      %v2069 = vpop.f32.mrb[0].mxu0
      %v2070 = vadd.f32 0.0, %v2069
      %v2071 = vpop.f32.mrb[0].mxu0
      %2072 = vmatprep.mubr.bf16.mxu0 0
      %2073 = vmatmul.mubr.bf16.gmra.mrb[0].mxu0 %v1933
      %v2074 = vpop.f32.mrb[0].mxu0
      %v2075 = vadd.f32 0.0, %v2074
      %v2076 = vpop.f32.mrb[0].mxu0
      %v2077 = vpop.f32.mrb[0].mxu0
      %v2078 = vadd.f32 0.0, %v2077
      %v2079 = vpop.f32.mrb[0].mxu0
      %2080 = vmatprep.mubr.bf16.mxu0 0
      %2081 = vmatmul.mubr.bf16.gmra.mrb[0].mxu0 %v1935
      %v2082 = vpop.f32.mrb[0].mxu0
      %v2083 = vadd.f32 0.0, %v2082
      %v2084 = vpop.f32.mrb[0].mxu0
      %v2085 = vpop.f32.mrb[0].mxu0
      %v2086 = vadd.f32 0.0, %v2085
      %v2087 = vpop.f32.mrb[0].mxu0
      %2088 = vdwg.mxu0
      %v2090 = vrot.slane %v981, 4
      %v2091 = vsel %vm960, %v2090, %v1919
      %v2109 = vunpack.c.l.b16 %v1884
      %v2110 = vunpack.c.l.b16 %v1885
      %v2111 = vunpack.c.l.b16 %v1886
      %v2112 = vunpack.c.l.b16 %v1887
      %v2113 = vunpack.c.l.b16 %v1888
      %v2114 = vunpack.c.l.b16 %v1889
      %v2115 = vunpack.c.l.b16 %v1890
      %v2116 = vunpack.c.l.b16 %v1891
      %v2117 = vunpack.c.l.b16 %v1892
      %v2118 = vunpack.c.l.b16 %v1893
      %v2119 = vunpack.c.l.b16 %v1894
      %v2120 = vunpack.c.l.b16 %v1895
      %v2121 = vunpack.c.l.b16 %v1896
      %v2122 = vunpack.c.l.b16 %v1897
      %v2123 = vunpack.c.l.b16 %v1898
      %v2124 = vunpack.c.l.b16 %v1899
      %v2125 = vpack.c.b16 %v2110, %v2109
      %v2126 = vpack.c.b16 %v2112, %v2111
      %v2127 = vpack.c.b16 %v2114, %v2113
      %v2128 = vpack.c.b16 %v2116, %v2115
      %v2129 = vpack.c.b16 %v2118, %v2117
      %v2130 = vpack.c.b16 %v2120, %v2119
      %v2131 = vpack.c.b16 %v2122, %v2121
      %v2132 = vpack.c.b16 %v2124, %v2123
      %2141 = vmatprep.subr.bf16.mxu0 0
      %2142 = vmatpush1.bf16.msra.mxu0 %v2125
      %2143 = vmatprep.subr.bf16.mxu0 0
      %2144 = vmatpush1.bf16.msra.mxu0 %v2126
      %2145 = vmatprep.subr.bf16.mxu0 0
      %2146 = vmatpush1.bf16.msra.mxu0 %v2127
      %2147 = vmatprep.subr.bf16.mxu0 0
      %2148 = vmatpush1.bf16.msra.mxu0 %v2128
      %2149 = vmatprep.subr.bf16.mxu0 0
      %2150 = vmatpush1.bf16.msra.mxu0 %v2129
      %2151 = vmatprep.subr.bf16.mxu0 0
      %2152 = vmatpush1.bf16.msra.mxu0 %v2130
      %2153 = vmatprep.subr.bf16.mxu0 0
      %2154 = vmatpush1.bf16.msra.mxu0 %v2131
      %2155 = vmatprep.subr.bf16.mxu0 0
      %2156 = vmatpush1.bf16.msra.mxu0 %v2132
      %2157 = vmatprep.subr.bf16.mxu0 0
      %2158 = vmatpush1.bf16.msra.mxu0 0
      %2159 = vmatprep.subr.bf16.mxu0 0
      %2160 = vmatpush1.bf16.msra.mxu0 0
      %2161 = vmatprep.subr.bf16.mxu0 0
      %2162 = vmatpush1.bf16.msra.mxu0 0
      %2163 = vmatprep.subr.bf16.mxu0 0
      %2164 = vmatpush1.bf16.msra.mxu0 0
      %2165 = vmatprep.subr.bf16.mxu0 0
      %2166 = vmatpush1.bf16.msra.mxu0 0
      %2167 = vmatprep.subr.bf16.mxu0 0
      %2168 = vmatpush1.bf16.msra.mxu0 0
      %2169 = vmatprep.subr.bf16.mxu0 0
      %2170 = vmatpush1.bf16.msra.mxu0 0
      %2171 = vmatprep.subr.bf16.mxu0 0
      %2172 = vmatpush1.bf16.msra.mxu0 0
      %2173 = vmatprep.mubr.bf16.mxu0 0
      %2174 = vmatmul.mubr.bf16.gmra.mrb[0].mxu0 %v2091
      %v2175 = vpop.f32.mrb[0].mxu0
      %v2176 = vadd.f32 %v2027, %v2175
      %v2177 = vpop.f32.mrb[0].mxu0
      %v2178 = vpop.f32.mrb[0].mxu0
      %v2179 = vadd.f32 %v2030, %v2178
      %v2180 = vpop.f32.mrb[0].mxu0
      %2181 = vmatprep.mubr.bf16.mxu0 0
      %2182 = vmatmul.mubr.bf16.gmra.mrb[0].mxu0 %v1921
      %v2183 = vpop.f32.mrb[0].mxu0
      %v2184 = vadd.f32 %v2035, %v2183
      %v2185 = vpop.f32.mrb[0].mxu0
      %v2186 = vpop.f32.mrb[0].mxu0
      %v2187 = vadd.f32 %v2038, %v2186
      %v2188 = vpop.f32.mrb[0].mxu0
      %2189 = vmatprep.mubr.bf16.mxu0 0
      %2190 = vmatmul.mubr.bf16.gmra.mrb[0].mxu0 %v1923
      %v2191 = vpop.f32.mrb[0].mxu0
      %v2192 = vadd.f32 %v2043, %v2191
      %v2193 = vpop.f32.mrb[0].mxu0
      %v2194 = vpop.f32.mrb[0].mxu0
      %v2195 = vadd.f32 %v2046, %v2194
      %v2196 = vpop.f32.mrb[0].mxu0
      %2197 = vmatprep.mubr.bf16.mxu0 0
      %2198 = vmatmul.mubr.bf16.gmra.mrb[0].mxu0 %v1925
      %v2199 = vpop.f32.mrb[0].mxu0
      %v2200 = vadd.f32 %v2051, %v2199
      %v2201 = vpop.f32.mrb[0].mxu0
      %v2202 = vpop.f32.mrb[0].mxu0
      %v2203 = vadd.f32 %v2054, %v2202
      %v2204 = vpop.f32.mrb[0].mxu0
      %2205 = vmatprep.mubr.bf16.mxu0 0
      %2206 = vmatmul.mubr.bf16.gmra.mrb[0].mxu0 %v1927
      %v2207 = vpop.f32.mrb[0].mxu0
      %v2208 = vadd.f32 %v2059, %v2207
      %v2209 = vpop.f32.mrb[0].mxu0
      %v2210 = vpop.f32.mrb[0].mxu0
      %v2211 = vadd.f32 %v2062, %v2210
      %v2212 = vpop.f32.mrb[0].mxu0
      %2213 = vmatprep.mubr.bf16.mxu0 0
      %2214 = vmatmul.mubr.bf16.gmra.mrb[0].mxu0 %v1929
      %v2215 = vpop.f32.mrb[0].mxu0
      %v2216 = vadd.f32 %v2067, %v2215
      %v2217 = vpop.f32.mrb[0].mxu0
      %v2218 = vpop.f32.mrb[0].mxu0
      %v2219 = vadd.f32 %v2070, %v2218
      %v2220 = vpop.f32.mrb[0].mxu0
      %2221 = vmatprep.mubr.bf16.mxu0 0
      %2222 = vmatmul.mubr.bf16.gmra.mrb[0].mxu0 %v1931
      %v2223 = vpop.f32.mrb[0].mxu0
      %v2224 = vadd.f32 %v2075, %v2223
      %v2225 = vpop.f32.mrb[0].mxu0
      %v2226 = vpop.f32.mrb[0].mxu0
      %v2227 = vadd.f32 %v2078, %v2226
      %v2228 = vpop.f32.mrb[0].mxu0
      %2229 = vmatprep.mubr.bf16.mxu0 0
      %2230 = vmatmul.mubr.bf16.gmra.mrb[0].mxu0 %v1933
      %v2231 = vpop.f32.mrb[0].mxu0
      %v2232 = vadd.f32 %v2083, %v2231
      %v2233 = vpop.f32.mrb[0].mxu0
      %v2234 = vpop.f32.mrb[0].mxu0
      %v2235 = vadd.f32 %v2086, %v2234
      %v2236 = vpop.f32.mrb[0].mxu0
      %2237 = vdwg.mxu0
      %s2238 = scalar_lea.vmem %s6, 448
      %v2239 = vld [vmem:[%s2238] sm:$0xf]
      %v2240 = vld [vmem:[%s2238 + $0x4] sm:$0xf]
      %v2241 = vld [vmem:[%s2238 + $0x8] sm:$0xf]
      %v2242 = vld [vmem:[%s2238 + $0xc] sm:$0xf]
      %v2243 = vld [vmem:[%s2238 + $0x10] sm:$0xf]
      %v2244 = vld [vmem:[%s2238 + $0x14] sm:$0xf]
      %v2245 = vld [vmem:[%s2238 + $0x18] sm:$0xf]
      %v2246 = vld [vmem:[%s2238 + $0x1c] sm:$0xf]
      %v2247 = vld [vmem:[%s2238 + $0x20] sm:$0xf]
      %v2248 = vld [vmem:[%s2238 + $0x24] sm:$0xf]
      %v2249 = vld [vmem:[%s2238 + $0x28] sm:$0xf]
      %v2250 = vld [vmem:[%s2238 + $0x2c] sm:$0xf]
      %v2251 = vld [vmem:[%s2238 + $0x30] sm:$0xf]
      %v2252 = vld [vmem:[%s2238 + $0x34] sm:$0xf]
      %v2253 = vld [vmem:[%s2238 + $0x38] sm:$0xf]
      %v2254 = vld [vmem:[%s2238 + $0x3c] sm:$0xf]
      %v2256 = vrot.slane %v987, 4
      %v2257 = vsel %vm960, %v1934, %v2256
      %v2275 = vunpack.c.l.b16 %v2239
      %v2276 = vunpack.c.l.b16 %v2240
      %v2277 = vunpack.c.l.b16 %v2241
      %v2278 = vunpack.c.l.b16 %v2242
      %v2279 = vunpack.c.l.b16 %v2243
      %v2280 = vunpack.c.l.b16 %v2244
      %v2281 = vunpack.c.l.b16 %v2245
      %v2282 = vunpack.c.l.b16 %v2246
      %v2283 = vunpack.c.l.b16 %v2247
      %v2284 = vunpack.c.l.b16 %v2248
      %v2285 = vunpack.c.l.b16 %v2249
      %v2286 = vunpack.c.l.b16 %v2250
      %v2287 = vunpack.c.l.b16 %v2251
      %v2288 = vunpack.c.l.b16 %v2252
      %v2289 = vunpack.c.l.b16 %v2253
      %v2290 = vunpack.c.l.b16 %v2254
      %v2291 = vpack.c.b16 %v2276, %v2275
      %v2292 = vpack.c.b16 %v2278, %v2277
      %v2293 = vpack.c.b16 %v2280, %v2279
      %v2294 = vpack.c.b16 %v2282, %v2281
      %v2295 = vpack.c.b16 %v2284, %v2283
      %v2296 = vpack.c.b16 %v2286, %v2285
      %v2297 = vpack.c.b16 %v2288, %v2287
      %v2298 = vpack.c.b16 %v2290, %v2289
      %2307 = vmatprep.subr.bf16.mxu0 0
      %2308 = vmatpush1.bf16.msra.mxu0 %v2291
      %2309 = vmatprep.subr.bf16.mxu0 0
      %2310 = vmatpush1.bf16.msra.mxu0 %v2292
      %2311 = vmatprep.subr.bf16.mxu0 0
      %2312 = vmatpush1.bf16.msra.mxu0 %v2293
      %2313 = vmatprep.subr.bf16.mxu0 0
      %2314 = vmatpush1.bf16.msra.mxu0 %v2294
      %2315 = vmatprep.subr.bf16.mxu0 0
      %2316 = vmatpush1.bf16.msra.mxu0 %v2295
      %2317 = vmatprep.subr.bf16.mxu0 0
      %2318 = vmatpush1.bf16.msra.mxu0 %v2296
      %2319 = vmatprep.subr.bf16.mxu0 0
      %2320 = vmatpush1.bf16.msra.mxu0 %v2297
      %2321 = vmatprep.subr.bf16.mxu0 0
      %2322 = vmatpush1.bf16.msra.mxu0 %v2298
      %2323 = vmatprep.subr.bf16.mxu0 0
      %2324 = vmatpush1.bf16.msra.mxu0 0
      %2325 = vmatprep.subr.bf16.mxu0 0
      %2326 = vmatpush1.bf16.msra.mxu0 0
      %2327 = vmatprep.subr.bf16.mxu0 0
      %2328 = vmatpush1.bf16.msra.mxu0 0
      %2329 = vmatprep.subr.bf16.mxu0 0
      %2330 = vmatpush1.bf16.msra.mxu0 0
      %2331 = vmatprep.subr.bf16.mxu0 0
      %2332 = vmatpush1.bf16.msra.mxu0 0
      %2333 = vmatprep.subr.bf16.mxu0 0
      %2334 = vmatpush1.bf16.msra.mxu0 0
      %2335 = vmatprep.subr.bf16.mxu0 0
      %2336 = vmatpush1.bf16.msra.mxu0 0
      %2337 = vmatprep.subr.bf16.mxu0 0
      %2338 = vmatpush1.bf16.msra.mxu0 0
      %2339 = vmatprep.mubr.bf16.mxu0 0
      %2340 = vmatmul.mubr.bf16.gmra.mrb[0].mxu0 %v1923
      %v2341 = vpop.f32.mrb[0].mxu0
      %v2342 = vadd.f32 0.0, %v2341
      %v2343 = vpop.f32.mrb[0].mxu0
      %v2344 = vpop.f32.mrb[0].mxu0
      %v2345 = vadd.f32 0.0, %v2344
      %v2346 = vpop.f32.mrb[0].mxu0
      %2347 = vmatprep.mubr.bf16.mxu0 0
      %2348 = vmatmul.mubr.bf16.gmra.mrb[0].mxu0 %v1925
      %v2349 = vpop.f32.mrb[0].mxu0
      %v2350 = vadd.f32 0.0, %v2349
      %v2351 = vpop.f32.mrb[0].mxu0
      %v2352 = vpop.f32.mrb[0].mxu0
      %v2353 = vadd.f32 0.0, %v2352
      %v2354 = vpop.f32.mrb[0].mxu0
      %2355 = vmatprep.mubr.bf16.mxu0 0
      %2356 = vmatmul.mubr.bf16.gmra.mrb[0].mxu0 %v1927
      %v2357 = vpop.f32.mrb[0].mxu0
      %v2358 = vadd.f32 0.0, %v2357
      %v2359 = vpop.f32.mrb[0].mxu0
      %v2360 = vpop.f32.mrb[0].mxu0
      %v2361 = vadd.f32 0.0, %v2360
      %v2362 = vpop.f32.mrb[0].mxu0
      %2363 = vmatprep.mubr.bf16.mxu0 0
      %2364 = vmatmul.mubr.bf16.gmra.mrb[0].mxu0 %v1929
      %v2365 = vpop.f32.mrb[0].mxu0
      %v2366 = vadd.f32 0.0, %v2365
      %v2367 = vpop.f32.mrb[0].mxu0
      %v2368 = vpop.f32.mrb[0].mxu0
      %v2369 = vadd.f32 0.0, %v2368
      %v2370 = vpop.f32.mrb[0].mxu0
      %2371 = vmatprep.mubr.bf16.mxu0 0
      %2372 = vmatmul.mubr.bf16.gmra.mrb[0].mxu0 %v1931
      %v2373 = vpop.f32.mrb[0].mxu0
      %v2374 = vadd.f32 0.0, %v2373
      %v2375 = vpop.f32.mrb[0].mxu0
      %v2376 = vpop.f32.mrb[0].mxu0
      %v2377 = vadd.f32 0.0, %v2376
      %v2378 = vpop.f32.mrb[0].mxu0
      %2379 = vmatprep.mubr.bf16.mxu0 0
      %2380 = vmatmul.mubr.bf16.gmra.mrb[0].mxu0 %v1933
      %v2381 = vpop.f32.mrb[0].mxu0
      %v2382 = vadd.f32 0.0, %v2381
      %v2383 = vpop.f32.mrb[0].mxu0
      %v2384 = vpop.f32.mrb[0].mxu0
      %v2385 = vadd.f32 0.0, %v2384
      %v2386 = vpop.f32.mrb[0].mxu0
      %2387 = vmatprep.mubr.bf16.mxu0 0
      %2388 = vmatmul.mubr.bf16.gmra.mrb[0].mxu0 %v1935
      %v2389 = vpop.f32.mrb[0].mxu0
      %v2390 = vadd.f32 0.0, %v2389
      %v2391 = vpop.f32.mrb[0].mxu0
      %v2392 = vpop.f32.mrb[0].mxu0
      %v2393 = vadd.f32 0.0, %v2392
      %v2394 = vpop.f32.mrb[0].mxu0
      %2395 = vmatprep.mubr.bf16.mxu0 0
      %2396 = vmatmul.mubr.bf16.gmra.mrb[0].mxu0 %v2257
      %v2397 = vpop.f32.mrb[0].mxu0
      %v2398 = vadd.f32 0.0, %v2397
      %v2399 = vpop.f32.mrb[0].mxu0
      %v2400 = vpop.f32.mrb[0].mxu0
      %v2401 = vadd.f32 0.0, %v2400
      %v2402 = vpop.f32.mrb[0].mxu0
      %2403 = vdwg.mxu0
      %v2404 = vadd.f32 %v2176, %v2342
      %v2405 = vadd.f32 %v2179, %v2345
      %v2406 = vadd.f32 %v2184, %v2350
      %v2407 = vadd.f32 %v2187, %v2353
      %v2408 = vadd.f32 %v2192, %v2358
      %v2409 = vadd.f32 %v2195, %v2361
      %v2410 = vadd.f32 %v2200, %v2366
      %v2411 = vadd.f32 %v2203, %v2369
      %v2412 = vadd.f32 %v2208, %v2374
      %v2413 = vadd.f32 %v2211, %v2377
      %v2414 = vadd.f32 %v2216, %v2382
      %v2415 = vadd.f32 %v2219, %v2385
      %v2416 = vadd.f32 %v2224, %v2390
      %v2417 = vadd.f32 %v2227, %v2393
      %v2418 = vadd.f32 %v2232, %v2398
      %v2419 = vadd.f32 %v2235, %v2401
      %v2420 = vadd.f32 %v1867, %v2404
      %v2421 = vadd.f32 %v1868, %v2405
      %v2422 = vadd.f32 %v1869, %v2406
      %v2423 = vadd.f32 %v1870, %v2407
      %v2424 = vadd.f32 %v1871, %v2408
      %v2425 = vadd.f32 %v1872, %v2409
      %v2426 = vadd.f32 %v1873, %v2410
      %v2427 = vadd.f32 %v1874, %v2411
      %v2428 = vadd.f32 %v1875, %v2412
      %v2429 = vadd.f32 %v1876, %v2413
      %v2430 = vadd.f32 %v1877, %v2414
      %v2431 = vadd.f32 %v1878, %v2415
      %v2432 = vadd.f32 %v1879, %v2416
      %v2433 = vadd.f32 %v1880, %v2417
      %v2434 = vadd.f32 %v1881, %v2418
      %v2435 = vadd.f32 %v1882, %v2419
      %s2436 = scalar_lea.vmem %s6, 128
      %v2437 = vld [vmem:[%s2436] sm:$0xf]
      %v2438 = vld [vmem:[%s2436 + $0x4] sm:$0xf]
      %v2439 = vld [vmem:[%s2436 + $0x8] sm:$0xf]
      %v2440 = vld [vmem:[%s2436 + $0xc] sm:$0xf]
      %v2441 = vld [vmem:[%s2436 + $0x10] sm:$0xf]
      %v2442 = vld [vmem:[%s2436 + $0x14] sm:$0xf]
      %v2443 = vld [vmem:[%s2436 + $0x18] sm:$0xf]
      %v2444 = vld [vmem:[%s2436 + $0x1c] sm:$0xf]
      %v2445 = vld [vmem:[%s2436 + $0x20] sm:$0xf]
      %v2446 = vld [vmem:[%s2436 + $0x24] sm:$0xf]
      %v2447 = vld [vmem:[%s2436 + $0x28] sm:$0xf]
      %v2448 = vld [vmem:[%s2436 + $0x2c] sm:$0xf]
      %v2449 = vld [vmem:[%s2436 + $0x30] sm:$0xf]
      %v2450 = vld [vmem:[%s2436 + $0x34] sm:$0xf]
      %v2451 = vld [vmem:[%s2436 + $0x38] sm:$0xf]
      %v2452 = vld [vmem:[%s2436 + $0x3c] sm:$0xf]
      %s2453 = scalar_lea.vmem %s6, 320
      %v2454 = vld [vmem:[%s2453] sm:$0xf]
      %v2455 = vld [vmem:[%s2453 + $0x4] sm:$0xf]
      %v2456 = vld [vmem:[%s2453 + $0x8] sm:$0xf]
      %v2457 = vld [vmem:[%s2453 + $0xc] sm:$0xf]
      %v2458 = vld [vmem:[%s2453 + $0x10] sm:$0xf]
      %v2459 = vld [vmem:[%s2453 + $0x14] sm:$0xf]
      %v2460 = vld [vmem:[%s2453 + $0x18] sm:$0xf]
      %v2461 = vld [vmem:[%s2453 + $0x1c] sm:$0xf]
      %v2462 = vld [vmem:[%s2453 + $0x20] sm:$0xf]
      %v2463 = vld [vmem:[%s2453 + $0x24] sm:$0xf]
      %v2464 = vld [vmem:[%s2453 + $0x28] sm:$0xf]
      %v2465 = vld [vmem:[%s2453 + $0x2c] sm:$0xf]
      %v2466 = vld [vmem:[%s2453 + $0x30] sm:$0xf]
      %v2467 = vld [vmem:[%s2453 + $0x34] sm:$0xf]
      %v2468 = vld [vmem:[%s2453 + $0x38] sm:$0xf]
      %v2469 = vld [vmem:[%s2453 + $0x3c] sm:$0xf]
      %vm2470 = vsmask.f32 3328
      %v2471 = vrot.slane %v1231, 4
      %v2472 = vrot.slane %v1234, 5
      %v2473 = vor.u32 %v2471, %v2472
      %v2474 = vrot.slane %v1239, 4
      %v2475 = vrot.slane %v1242, 5
      %v2476 = vor.u32 %v2474, %v2475
      %v2477 = vsel %vm2470, %v2473, %v2476
      %v2478 = vrot.slane %v1248, 4
      %v2479 = vrot.slane %v1251, 5
      %v2480 = vor.u32 %v2478, %v2479
      %v2481 = vsel %vm2470, %v2476, %v2480
      %v2482 = vrot.slane %v1257, 4
      %v2483 = vrot.slane %v1260, 5
      %v2484 = vor.u32 %v2482, %v2483
      %v2485 = vsel %vm2470, %v2480, %v2484
      %v2486 = vrot.slane %v1266, 4
      %v2487 = vrot.slane %v1269, 5
      %v2488 = vor.u32 %v2486, %v2487
      %v2489 = vsel %vm2470, %v2484, %v2488
      %v2490 = vrot.slane %v1275, 4
      %v2491 = vrot.slane %v1278, 5
      %v2492 = vor.u32 %v2490, %v2491
      %v2493 = vsel %vm2470, %v2488, %v2492
      %v2494 = vrot.slane %v1284, 4
      %v2495 = vrot.slane %v1287, 5
      %v2496 = vor.u32 %v2494, %v2495
      %v2497 = vsel %vm2470, %v2492, %v2496
      %v2498 = vrot.slane %v1293, 4
      %v2499 = vrot.slane %v1296, 5
      %v2500 = vor.u32 %v2498, %v2499
      %v2501 = vsel %vm2470, %v2496, %v2500
      %v2502 = vrot.slane %v1301, 4
      %v2503 = vrot.slane %v1304, 5
      %v2504 = vor.u32 %v2502, %v2503
      %v2505 = vsel %vm2470, %v2500, %v2504
      %v2530 = vunpack.c.l.b16 %v2454
      %v2531 = vunpack.c.l.b16 %v2455
      %v2532 = vunpack.c.l.b16 %v2456
      %v2533 = vunpack.c.l.b16 %v2457
      %v2534 = vunpack.c.l.b16 %v2458
      %v2535 = vunpack.c.l.b16 %v2459
      %v2536 = vunpack.c.l.b16 %v2460
      %v2537 = vunpack.c.l.b16 %v2461
      %v2538 = vunpack.c.l.b16 %v2462
      %v2539 = vunpack.c.l.b16 %v2463
      %v2540 = vunpack.c.l.b16 %v2464
      %v2541 = vunpack.c.l.b16 %v2465
      %v2542 = vunpack.c.l.b16 %v2466
      %v2543 = vunpack.c.l.b16 %v2467
      %v2544 = vunpack.c.l.b16 %v2468
      %v2545 = vunpack.c.l.b16 %v2469
      %v2546 = vpack.c.b16 %v2531, %v2530
      %v2547 = vpack.c.b16 %v2533, %v2532
      %v2548 = vpack.c.b16 %v2535, %v2534
      %v2549 = vpack.c.b16 %v2537, %v2536
      %v2550 = vpack.c.b16 %v2539, %v2538
      %v2551 = vpack.c.b16 %v2541, %v2540
      %v2552 = vpack.c.b16 %v2543, %v2542
      %v2553 = vpack.c.b16 %v2545, %v2544
      %2562 = vmatprep.subr.bf16.mxu0 0
      %2563 = vmatpush1.bf16.msra.mxu0 %v2546
      %2564 = vmatprep.subr.bf16.mxu0 0
      %2565 = vmatpush1.bf16.msra.mxu0 %v2547
      %2566 = vmatprep.subr.bf16.mxu0 0
      %2567 = vmatpush1.bf16.msra.mxu0 %v2548
      %2568 = vmatprep.subr.bf16.mxu0 0
      %2569 = vmatpush1.bf16.msra.mxu0 %v2549
      %2570 = vmatprep.subr.bf16.mxu0 0
      %2571 = vmatpush1.bf16.msra.mxu0 %v2550
      %2572 = vmatprep.subr.bf16.mxu0 0
      %2573 = vmatpush1.bf16.msra.mxu0 %v2551
      %2574 = vmatprep.subr.bf16.mxu0 0
      %2575 = vmatpush1.bf16.msra.mxu0 %v2552
      %2576 = vmatprep.subr.bf16.mxu0 0
      %2577 = vmatpush1.bf16.msra.mxu0 %v2553
      %2578 = vmatprep.subr.bf16.mxu0 0
      %2579 = vmatpush1.bf16.msra.mxu0 0
      %2580 = vmatprep.subr.bf16.mxu0 0
      %2581 = vmatpush1.bf16.msra.mxu0 0
      %2582 = vmatprep.subr.bf16.mxu0 0
      %2583 = vmatpush1.bf16.msra.mxu0 0
      %2584 = vmatprep.subr.bf16.mxu0 0
      %2585 = vmatpush1.bf16.msra.mxu0 0
      %2586 = vmatprep.subr.bf16.mxu0 0
      %2587 = vmatpush1.bf16.msra.mxu0 0
      %2588 = vmatprep.subr.bf16.mxu0 0
      %2589 = vmatpush1.bf16.msra.mxu0 0
      %2590 = vmatprep.subr.bf16.mxu0 0
      %2591 = vmatpush1.bf16.msra.mxu0 0
      %2592 = vmatprep.subr.bf16.mxu0 0
      %2593 = vmatpush1.bf16.msra.mxu0 0
      %2594 = vmatprep.mubr.bf16.mxu0 0
      %2595 = vmatmul.mubr.bf16.gmra.mrb[0].mxu0 %v2477
      %v2596 = vpop.f32.mrb[0].mxu0
      %v2597 = vadd.f32 0.0, %v2596
      %v2598 = vpop.f32.mrb[0].mxu0
      %v2599 = vpop.f32.mrb[0].mxu0
      %v2600 = vadd.f32 0.0, %v2599
      %v2601 = vpop.f32.mrb[0].mxu0
      %2602 = vmatprep.mubr.bf16.mxu0 0
      %2603 = vmatmul.mubr.bf16.gmra.mrb[0].mxu0 %v2481
      %v2604 = vpop.f32.mrb[0].mxu0
      %v2605 = vadd.f32 0.0, %v2604
      %v2606 = vpop.f32.mrb[0].mxu0
      %v2607 = vpop.f32.mrb[0].mxu0
      %v2608 = vadd.f32 0.0, %v2607
      %v2609 = vpop.f32.mrb[0].mxu0
      %2610 = vmatprep.mubr.bf16.mxu0 0
      %2611 = vmatmul.mubr.bf16.gmra.mrb[0].mxu0 %v2485
      %v2612 = vpop.f32.mrb[0].mxu0
      %v2613 = vadd.f32 0.0, %v2612
      %v2614 = vpop.f32.mrb[0].mxu0
      %v2615 = vpop.f32.mrb[0].mxu0
      %v2616 = vadd.f32 0.0, %v2615
      %v2617 = vpop.f32.mrb[0].mxu0
      %2618 = vmatprep.mubr.bf16.mxu0 0
      %2619 = vmatmul.mubr.bf16.gmra.mrb[0].mxu0 %v2489
      %v2620 = vpop.f32.mrb[0].mxu0
      %v2621 = vadd.f32 0.0, %v2620
      %v2622 = vpop.f32.mrb[0].mxu0
      %v2623 = vpop.f32.mrb[0].mxu0
      %v2624 = vadd.f32 0.0, %v2623
      %v2625 = vpop.f32.mrb[0].mxu0
      %2626 = vmatprep.mubr.bf16.mxu0 0
      %2627 = vmatmul.mubr.bf16.gmra.mrb[0].mxu0 %v2493
      %v2628 = vpop.f32.mrb[0].mxu0
      %v2629 = vadd.f32 0.0, %v2628
      %v2630 = vpop.f32.mrb[0].mxu0
      %v2631 = vpop.f32.mrb[0].mxu0
      %v2632 = vadd.f32 0.0, %v2631
      %v2633 = vpop.f32.mrb[0].mxu0
      %2634 = vmatprep.mubr.bf16.mxu0 0
      %2635 = vmatmul.mubr.bf16.gmra.mrb[0].mxu0 %v2497
      %v2636 = vpop.f32.mrb[0].mxu0
      %v2637 = vadd.f32 0.0, %v2636
      %v2638 = vpop.f32.mrb[0].mxu0
      %v2639 = vpop.f32.mrb[0].mxu0
      %v2640 = vadd.f32 0.0, %v2639
      %v2641 = vpop.f32.mrb[0].mxu0
      %2642 = vmatprep.mubr.bf16.mxu0 0
      %2643 = vmatmul.mubr.bf16.gmra.mrb[0].mxu0 %v2501
      %v2644 = vpop.f32.mrb[0].mxu0
      %v2645 = vadd.f32 0.0, %v2644
      %v2646 = vpop.f32.mrb[0].mxu0
      %v2647 = vpop.f32.mrb[0].mxu0
      %v2648 = vadd.f32 0.0, %v2647
      %v2649 = vpop.f32.mrb[0].mxu0
      %2650 = vmatprep.mubr.bf16.mxu0 0
      %2651 = vmatmul.mubr.bf16.gmra.mrb[0].mxu0 %v2505
      %v2652 = vpop.f32.mrb[0].mxu0
      %v2653 = vadd.f32 0.0, %v2652
      %v2654 = vpop.f32.mrb[0].mxu0
      %v2655 = vpop.f32.mrb[0].mxu0
      %v2656 = vadd.f32 0.0, %v2655
      %v2657 = vpop.f32.mrb[0].mxu0
      %2658 = vdwg.mxu0
      %v2659 = vrot.slane %v1462, 4
      %v2660 = vrot.slane %v1465, 5
      %v2661 = vor.u32 %v2659, %v2660
      %v2662 = vsel %vm2470, %v2661, %v2473
      %v2680 = vunpack.c.l.b16 %v2437
      %v2681 = vunpack.c.l.b16 %v2438
      %v2682 = vunpack.c.l.b16 %v2439
      %v2683 = vunpack.c.l.b16 %v2440
      %v2684 = vunpack.c.l.b16 %v2441
      %v2685 = vunpack.c.l.b16 %v2442
      %v2686 = vunpack.c.l.b16 %v2443
      %v2687 = vunpack.c.l.b16 %v2444
      %v2688 = vunpack.c.l.b16 %v2445
      %v2689 = vunpack.c.l.b16 %v2446
      %v2690 = vunpack.c.l.b16 %v2447
      %v2691 = vunpack.c.l.b16 %v2448
      %v2692 = vunpack.c.l.b16 %v2449
      %v2693 = vunpack.c.l.b16 %v2450
      %v2694 = vunpack.c.l.b16 %v2451
      %v2695 = vunpack.c.l.b16 %v2452
      %v2696 = vpack.c.b16 %v2681, %v2680
      %v2697 = vpack.c.b16 %v2683, %v2682
      %v2698 = vpack.c.b16 %v2685, %v2684
      %v2699 = vpack.c.b16 %v2687, %v2686
      %v2700 = vpack.c.b16 %v2689, %v2688
      %v2701 = vpack.c.b16 %v2691, %v2690
      %v2702 = vpack.c.b16 %v2693, %v2692
      %v2703 = vpack.c.b16 %v2695, %v2694
      %2712 = vmatprep.subr.bf16.mxu0 0
      %2713 = vmatpush1.bf16.msra.mxu0 %v2696
      %2714 = vmatprep.subr.bf16.mxu0 0
      %2715 = vmatpush1.bf16.msra.mxu0 %v2697
      %2716 = vmatprep.subr.bf16.mxu0 0
      %2717 = vmatpush1.bf16.msra.mxu0 %v2698
      %2718 = vmatprep.subr.bf16.mxu0 0
      %2719 = vmatpush1.bf16.msra.mxu0 %v2699
      %2720 = vmatprep.subr.bf16.mxu0 0
      %2721 = vmatpush1.bf16.msra.mxu0 %v2700
      %2722 = vmatprep.subr.bf16.mxu0 0
      %2723 = vmatpush1.bf16.msra.mxu0 %v2701
      %2724 = vmatprep.subr.bf16.mxu0 0
      %2725 = vmatpush1.bf16.msra.mxu0 %v2702
      %2726 = vmatprep.subr.bf16.mxu0 0
      %2727 = vmatpush1.bf16.msra.mxu0 %v2703
      %2728 = vmatprep.subr.bf16.mxu0 0
      %2729 = vmatpush1.bf16.msra.mxu0 0
      %2730 = vmatprep.subr.bf16.mxu0 0
      %2731 = vmatpush1.bf16.msra.mxu0 0
      %2732 = vmatprep.subr.bf16.mxu0 0
      %2733 = vmatpush1.bf16.msra.mxu0 0
      %2734 = vmatprep.subr.bf16.mxu0 0
      %2735 = vmatpush1.bf16.msra.mxu0 0
      %2736 = vmatprep.subr.bf16.mxu0 0
      %2737 = vmatpush1.bf16.msra.mxu0 0
      %2738 = vmatprep.subr.bf16.mxu0 0
      %2739 = vmatpush1.bf16.msra.mxu0 0
      %2740 = vmatprep.subr.bf16.mxu0 0
      %2741 = vmatpush1.bf16.msra.mxu0 0
      %2742 = vmatprep.subr.bf16.mxu0 0
      %2743 = vmatpush1.bf16.msra.mxu0 0
      %2744 = vmatprep.mubr.bf16.mxu0 0
      %2745 = vmatmul.mubr.bf16.gmra.mrb[0].mxu0 %v2662
      %v2746 = vpop.f32.mrb[0].mxu0
      %v2747 = vadd.f32 %v2597, %v2746
      %v2748 = vpop.f32.mrb[0].mxu0
      %v2749 = vpop.f32.mrb[0].mxu0
      %v2750 = vadd.f32 %v2600, %v2749
      %v2751 = vpop.f32.mrb[0].mxu0
      %2752 = vmatprep.mubr.bf16.mxu0 0
      %2753 = vmatmul.mubr.bf16.gmra.mrb[0].mxu0 %v2477
      %v2754 = vpop.f32.mrb[0].mxu0
      %v2755 = vadd.f32 %v2605, %v2754
      %v2756 = vpop.f32.mrb[0].mxu0
      %v2757 = vpop.f32.mrb[0].mxu0
      %v2758 = vadd.f32 %v2608, %v2757
      %v2759 = vpop.f32.mrb[0].mxu0
      %2760 = vmatprep.mubr.bf16.mxu0 0
      %2761 = vmatmul.mubr.bf16.gmra.mrb[0].mxu0 %v2481
      %v2762 = vpop.f32.mrb[0].mxu0
      %v2763 = vadd.f32 %v2613, %v2762
      %v2764 = vpop.f32.mrb[0].mxu0
      %v2765 = vpop.f32.mrb[0].mxu0
      %v2766 = vadd.f32 %v2616, %v2765
      %v2767 = vpop.f32.mrb[0].mxu0
      %2768 = vmatprep.mubr.bf16.mxu0 0
      %2769 = vmatmul.mubr.bf16.gmra.mrb[0].mxu0 %v2485
      %v2770 = vpop.f32.mrb[0].mxu0
      %v2771 = vadd.f32 %v2621, %v2770
      %v2772 = vpop.f32.mrb[0].mxu0
      %v2773 = vpop.f32.mrb[0].mxu0
      %v2774 = vadd.f32 %v2624, %v2773
      %v2775 = vpop.f32.mrb[0].mxu0
      %2776 = vmatprep.mubr.bf16.mxu0 0
      %2777 = vmatmul.mubr.bf16.gmra.mrb[0].mxu0 %v2489
      %v2778 = vpop.f32.mrb[0].mxu0
      %v2779 = vadd.f32 %v2629, %v2778
      %v2780 = vpop.f32.mrb[0].mxu0
      %v2781 = vpop.f32.mrb[0].mxu0
      %v2782 = vadd.f32 %v2632, %v2781
      %v2783 = vpop.f32.mrb[0].mxu0
      %2784 = vmatprep.mubr.bf16.mxu0 0
      %2785 = vmatmul.mubr.bf16.gmra.mrb[0].mxu0 %v2493
      %v2786 = vpop.f32.mrb[0].mxu0
      %v2787 = vadd.f32 %v2637, %v2786
      %v2788 = vpop.f32.mrb[0].mxu0
      %v2789 = vpop.f32.mrb[0].mxu0
      %v2790 = vadd.f32 %v2640, %v2789
      %v2791 = vpop.f32.mrb[0].mxu0
      %2792 = vmatprep.mubr.bf16.mxu0 0
      %2793 = vmatmul.mubr.bf16.gmra.mrb[0].mxu0 %v2497
      %v2794 = vpop.f32.mrb[0].mxu0
      %v2795 = vadd.f32 %v2645, %v2794
      %v2796 = vpop.f32.mrb[0].mxu0
      %v2797 = vpop.f32.mrb[0].mxu0
      %v2798 = vadd.f32 %v2648, %v2797
      %v2799 = vpop.f32.mrb[0].mxu0
      %2800 = vmatprep.mubr.bf16.mxu0 0
      %2801 = vmatmul.mubr.bf16.gmra.mrb[0].mxu0 %v2501
      %v2802 = vpop.f32.mrb[0].mxu0
      %v2803 = vadd.f32 %v2653, %v2802
      %v2804 = vpop.f32.mrb[0].mxu0
      %v2805 = vpop.f32.mrb[0].mxu0
      %v2806 = vadd.f32 %v2656, %v2805
      %v2807 = vpop.f32.mrb[0].mxu0
      %2808 = vdwg.mxu0
      %s2809 = scalar_lea.vmem %s6, 512
      %v2810 = vld [vmem:[%s2809] sm:$0xf]
      %v2811 = vld [vmem:[%s2809 + $0x4] sm:$0xf]
      %v2812 = vld [vmem:[%s2809 + $0x8] sm:$0xf]
      %v2813 = vld [vmem:[%s2809 + $0xc] sm:$0xf]
      %v2814 = vld [vmem:[%s2809 + $0x10] sm:$0xf]
      %v2815 = vld [vmem:[%s2809 + $0x14] sm:$0xf]
      %v2816 = vld [vmem:[%s2809 + $0x18] sm:$0xf]
      %v2817 = vld [vmem:[%s2809 + $0x1c] sm:$0xf]
      %v2818 = vld [vmem:[%s2809 + $0x20] sm:$0xf]
      %v2819 = vld [vmem:[%s2809 + $0x24] sm:$0xf]
      %v2820 = vld [vmem:[%s2809 + $0x28] sm:$0xf]
      %v2821 = vld [vmem:[%s2809 + $0x2c] sm:$0xf]
      %v2822 = vld [vmem:[%s2809 + $0x30] sm:$0xf]
      %v2823 = vld [vmem:[%s2809 + $0x34] sm:$0xf]
      %v2824 = vld [vmem:[%s2809 + $0x38] sm:$0xf]
      %v2825 = vld [vmem:[%s2809 + $0x3c] sm:$0xf]
      %v2826 = vrot.slane %v1633, 4
      %v2827 = vrot.slane %v1636, 5
      %v2828 = vor.u32 %v2826, %v2827
      %v2829 = vsel %vm2470, %v2504, %v2828
      %v2847 = vunpack.c.l.b16 %v2810
      %v2848 = vunpack.c.l.b16 %v2811
      %v2849 = vunpack.c.l.b16 %v2812
      %v2850 = vunpack.c.l.b16 %v2813
      %v2851 = vunpack.c.l.b16 %v2814
      %v2852 = vunpack.c.l.b16 %v2815
      %v2853 = vunpack.c.l.b16 %v2816
      %v2854 = vunpack.c.l.b16 %v2817
      %v2855 = vunpack.c.l.b16 %v2818
      %v2856 = vunpack.c.l.b16 %v2819
      %v2857 = vunpack.c.l.b16 %v2820
      %v2858 = vunpack.c.l.b16 %v2821
      %v2859 = vunpack.c.l.b16 %v2822
      %v2860 = vunpack.c.l.b16 %v2823
      %v2861 = vunpack.c.l.b16 %v2824
      %v2862 = vunpack.c.l.b16 %v2825
      %v2863 = vpack.c.b16 %v2848, %v2847
      %v2864 = vpack.c.b16 %v2850, %v2849
      %v2865 = vpack.c.b16 %v2852, %v2851
      %v2866 = vpack.c.b16 %v2854, %v2853
      %v2867 = vpack.c.b16 %v2856, %v2855
      %v2868 = vpack.c.b16 %v2858, %v2857
      %v2869 = vpack.c.b16 %v2860, %v2859
      %v2870 = vpack.c.b16 %v2862, %v2861
      %2879 = vmatprep.subr.bf16.mxu0 0
      %2880 = vmatpush1.bf16.msra.mxu0 %v2863
      %2881 = vmatprep.subr.bf16.mxu0 0
      %2882 = vmatpush1.bf16.msra.mxu0 %v2864
      %2883 = vmatprep.subr.bf16.mxu0 0
      %2884 = vmatpush1.bf16.msra.mxu0 %v2865
      %2885 = vmatprep.subr.bf16.mxu0 0
      %2886 = vmatpush1.bf16.msra.mxu0 %v2866
      %2887 = vmatprep.subr.bf16.mxu0 0
      %2888 = vmatpush1.bf16.msra.mxu0 %v2867
      %2889 = vmatprep.subr.bf16.mxu0 0
      %2890 = vmatpush1.bf16.msra.mxu0 %v2868
      %2891 = vmatprep.subr.bf16.mxu0 0
      %2892 = vmatpush1.bf16.msra.mxu0 %v2869
      %2893 = vmatprep.subr.bf16.mxu0 0
      %2894 = vmatpush1.bf16.msra.mxu0 %v2870
      %2895 = vmatprep.subr.bf16.mxu0 0
      %2896 = vmatpush1.bf16.msra.mxu0 0
      %2897 = vmatprep.subr.bf16.mxu0 0
      %2898 = vmatpush1.bf16.msra.mxu0 0
      %2899 = vmatprep.subr.bf16.mxu0 0
      %2900 = vmatpush1.bf16.msra.mxu0 0
      %2901 = vmatprep.subr.bf16.mxu0 0
      %2902 = vmatpush1.bf16.msra.mxu0 0
      %2903 = vmatprep.subr.bf16.mxu0 0
      %2904 = vmatpush1.bf16.msra.mxu0 0
      %2905 = vmatprep.subr.bf16.mxu0 0
      %2906 = vmatpush1.bf16.msra.mxu0 0
      %2907 = vmatprep.subr.bf16.mxu0 0
      %2908 = vmatpush1.bf16.msra.mxu0 0
      %2909 = vmatprep.subr.bf16.mxu0 0
      %2910 = vmatpush1.bf16.msra.mxu0 0
      %2911 = vmatprep.mubr.bf16.mxu0 0
      %2912 = vmatmul.mubr.bf16.gmra.mrb[0].mxu0 %v2481
      %v2913 = vpop.f32.mrb[0].mxu0
      %v2914 = vadd.f32 0.0, %v2913
      %v2915 = vpop.f32.mrb[0].mxu0
      %v2916 = vpop.f32.mrb[0].mxu0
      %v2917 = vadd.f32 0.0, %v2916
      %v2918 = vpop.f32.mrb[0].mxu0
      %2919 = vmatprep.mubr.bf16.mxu0 0
      %2920 = vmatmul.mubr.bf16.gmra.mrb[0].mxu0 %v2485
      %v2921 = vpop.f32.mrb[0].mxu0
      %v2922 = vadd.f32 0.0, %v2921
      %v2923 = vpop.f32.mrb[0].mxu0
      %v2924 = vpop.f32.mrb[0].mxu0
      %v2925 = vadd.f32 0.0, %v2924
      %v2926 = vpop.f32.mrb[0].mxu0
      %2927 = vmatprep.mubr.bf16.mxu0 0
      %2928 = vmatmul.mubr.bf16.gmra.mrb[0].mxu0 %v2489
      %v2929 = vpop.f32.mrb[0].mxu0
      %v2930 = vadd.f32 0.0, %v2929
      %v2931 = vpop.f32.mrb[0].mxu0
      %v2932 = vpop.f32.mrb[0].mxu0
      %v2933 = vadd.f32 0.0, %v2932
      %v2934 = vpop.f32.mrb[0].mxu0
      %2935 = vmatprep.mubr.bf16.mxu0 0
      %2936 = vmatmul.mubr.bf16.gmra.mrb[0].mxu0 %v2493
      %v2937 = vpop.f32.mrb[0].mxu0
      %v2938 = vadd.f32 0.0, %v2937
      %v2939 = vpop.f32.mrb[0].mxu0
      %v2940 = vpop.f32.mrb[0].mxu0
      %v2941 = vadd.f32 0.0, %v2940
      %v2942 = vpop.f32.mrb[0].mxu0
      %2943 = vmatprep.mubr.bf16.mxu0 0
      %2944 = vmatmul.mubr.bf16.gmra.mrb[0].mxu0 %v2497
      %v2945 = vpop.f32.mrb[0].mxu0
      %v2946 = vadd.f32 0.0, %v2945
      %v2947 = vpop.f32.mrb[0].mxu0
      %v2948 = vpop.f32.mrb[0].mxu0
      %v2949 = vadd.f32 0.0, %v2948
      %v2950 = vpop.f32.mrb[0].mxu0
      %2951 = vmatprep.mubr.bf16.mxu0 0
      %2952 = vmatmul.mubr.bf16.gmra.mrb[0].mxu0 %v2501
      %v2953 = vpop.f32.mrb[0].mxu0
      %v2954 = vadd.f32 0.0, %v2953
      %v2955 = vpop.f32.mrb[0].mxu0
      %v2956 = vpop.f32.mrb[0].mxu0
      %v2957 = vadd.f32 0.0, %v2956
      %v2958 = vpop.f32.mrb[0].mxu0
      %2959 = vmatprep.mubr.bf16.mxu0 0
      %2960 = vmatmul.mubr.bf16.gmra.mrb[0].mxu0 %v2505
      %v2961 = vpop.f32.mrb[0].mxu0
      %v2962 = vadd.f32 0.0, %v2961
      %v2963 = vpop.f32.mrb[0].mxu0
      %v2964 = vpop.f32.mrb[0].mxu0
      %v2965 = vadd.f32 0.0, %v2964
      %v2966 = vpop.f32.mrb[0].mxu0
      %2967 = vmatprep.mubr.bf16.mxu0 0
      %2968 = vmatmul.mubr.bf16.gmra.mrb[0].mxu0 %v2829
      %v2969 = vpop.f32.mrb[0].mxu0
      %v2970 = vadd.f32 0.0, %v2969
      %v2971 = vpop.f32.mrb[0].mxu0
      %v2972 = vpop.f32.mrb[0].mxu0
      %v2973 = vadd.f32 0.0, %v2972
      %v2974 = vpop.f32.mrb[0].mxu0
      %2975 = vdwg.mxu0
      %v2976 = vadd.f32 %v2747, %v2914
      %v2977 = vadd.f32 %v2750, %v2917
      %v2978 = vadd.f32 %v2755, %v2922
      %v2979 = vadd.f32 %v2758, %v2925
      %v2980 = vadd.f32 %v2763, %v2930
      %v2981 = vadd.f32 %v2766, %v2933
      %v2982 = vadd.f32 %v2771, %v2938
      %v2983 = vadd.f32 %v2774, %v2941
      %v2984 = vadd.f32 %v2779, %v2946
      %v2985 = vadd.f32 %v2782, %v2949
      %v2986 = vadd.f32 %v2787, %v2954
      %v2987 = vadd.f32 %v2790, %v2957
      %v2988 = vadd.f32 %v2795, %v2962
      %v2989 = vadd.f32 %v2798, %v2965
      %v2990 = vadd.f32 %v2803, %v2970
      %v2991 = vadd.f32 %v2806, %v2973
      %vm2992 = vcmp.eq.s32.totalorder %v1181, 15
      %vm2993 = vcmp.eq.s32.totalorder %v1182, 15
      %vm2994 = vcmp.eq.s32.totalorder %v1183, 15
      %vm2995 = vcmp.eq.s32.totalorder %v1184, 15
      %vm2996 = vcmp.eq.s32.totalorder %v1185, 15
      %vm2997 = vcmp.eq.s32.totalorder %v1186, 15
      %vm2998 = vcmp.eq.s32.totalorder %v1187, 15
      %vm2999 = vcmp.eq.s32.totalorder %v1188, 15
      %vm3000 = vcmp.eq.s32.totalorder %v1189, 15
      %vm3001 = vcmp.eq.s32.totalorder %v1190, 15
      %vm3002 = vcmp.eq.s32.totalorder %v1191, 15
      %vm3003 = vcmp.eq.s32.totalorder %v1192, 15
      %vm3004 = vcmp.eq.s32.totalorder %v1193, 15
      %vm3005 = vcmp.eq.s32.totalorder %v1194, 15
      %vm3006 = vcmp.eq.s32.totalorder %v1195, 15
      %vm3007 = vcmp.eq.s32.totalorder %v1196, 15
      %v3008 = vsel %vm2992, 1, 0
      %v3009 = vsel %vm2993, 1, 0
      %v3010 = vsel %vm2994, 1, 0
      %v3011 = vsel %vm2995, 1, 0
      %v3012 = vsel %vm2996, 1, 0
      %v3013 = vsel %vm2997, 1, 0
      %v3014 = vsel %vm2998, 1, 0
      %v3015 = vsel %vm2999, 1, 0
      %v3016 = vsel %vm3000, 1, 0
      %v3017 = vsel %vm3001, 1, 0
      %v3018 = vsel %vm3002, 1, 0
      %v3019 = vsel %vm3003, 1, 0
      %v3020 = vsel %vm3004, 1, 0
      %v3021 = vsel %vm3005, 1, 0
      %v3022 = vsel %vm3006, 1, 0
      %v3023 = vsel %vm3007, 1, 0
      %vm3024 = vcmp.eq.s32.totalorder %v3008, 1
      %vm3025 = vcmp.eq.s32.totalorder %v3009, 1
      %vm3026 = vcmp.eq.s32.totalorder %v3010, 1
      %vm3027 = vcmp.eq.s32.totalorder %v3011, 1
      %vm3028 = vcmp.eq.s32.totalorder %v3012, 1
      %vm3029 = vcmp.eq.s32.totalorder %v3013, 1
      %vm3030 = vcmp.eq.s32.totalorder %v3014, 1
      %vm3031 = vcmp.eq.s32.totalorder %v3015, 1
      %vm3032 = vcmp.eq.s32.totalorder %v3016, 1
      %vm3033 = vcmp.eq.s32.totalorder %v3017, 1
      %vm3034 = vcmp.eq.s32.totalorder %v3018, 1
      %vm3035 = vcmp.eq.s32.totalorder %v3019, 1
      %vm3036 = vcmp.eq.s32.totalorder %v3020, 1
      %vm3037 = vcmp.eq.s32.totalorder %v3021, 1
      %vm3038 = vcmp.eq.s32.totalorder %v3022, 1
      %vm3039 = vcmp.eq.s32.totalorder %v3023, 1
      %v3040 = vsel %vm3024, 0.0, %v2976
      %v3041 = vsel %vm3025, 0.0, %v2977
      %v3042 = vsel %vm3026, 0.0, %v2978
      %v3043 = vsel %vm3027, 0.0, %v2979
      %v3044 = vsel %vm3028, 0.0, %v2980
      %v3045 = vsel %vm3029, 0.0, %v2981
      %v3046 = vsel %vm3030, 0.0, %v2982
      %v3047 = vsel %vm3031, 0.0, %v2983
      %v3048 = vsel %vm3032, 0.0, %v2984
      %v3049 = vsel %vm3033, 0.0, %v2985
      %v3050 = vsel %vm3034, 0.0, %v2986
      %v3051 = vsel %vm3035, 0.0, %v2987
      %v3052 = vsel %vm3036, 0.0, %v2988
      %v3053 = vsel %vm3037, 0.0, %v2989
      %v3054 = vsel %vm3038, 0.0, %v2990
      %v3055 = vsel %vm3039, 0.0, %v2991
      %v3056 = vadd.f32 %v2420, %v3040
      %v3057 = vadd.f32 %v2421, %v3041
      %v3058 = vadd.f32 %v2422, %v3042
      %v3059 = vadd.f32 %v2423, %v3043
      %v3060 = vadd.f32 %v2424, %v3044
      %v3061 = vadd.f32 %v2425, %v3045
      %v3062 = vadd.f32 %v2426, %v3046
      %v3063 = vadd.f32 %v2427, %v3047
      %v3064 = vadd.f32 %v2428, %v3048
      %v3065 = vadd.f32 %v2429, %v3049
      %v3066 = vadd.f32 %v2430, %v3050
      %v3067 = vadd.f32 %v2431, %v3051
      %v3068 = vadd.f32 %v2432, %v3052
      %v3069 = vadd.f32 %v2433, %v3053
      %v3070 = vadd.f32 %v2434, %v3054
      %v3071 = vadd.f32 %v2435, %v3055
      %v3072 = vld [vmem:[%s7] sm:$0x1]
      %v3074 = vlaneseq
      %v3075 = vshrl.u32 %v3074, 7
      %v3076 = vsub.s32 0, %v3075
      %v3077 = vrot.slane %v3072, %v3076
      %v3079 = vmul.f32 %v3056, %v3077
      %v3080 = vmul.f32 %v3057, %v3077
      %v3081 = vmul.f32 %v3058, %v3077
      %v3082 = vmul.f32 %v3059, %v3077
      %v3083 = vmul.f32 %v3060, %v3077
      %v3084 = vmul.f32 %v3061, %v3077
      %v3085 = vmul.f32 %v3062, %v3077
      %v3086 = vmul.f32 %v3063, %v3077
      %v3087 = vmul.f32 %v3064, %v3077
      %v3088 = vmul.f32 %v3065, %v3077
      %v3089 = vmul.f32 %v3066, %v3077
      %v3090 = vmul.f32 %v3067, %v3077
      %v3091 = vmul.f32 %v3068, %v3077
      %v3092 = vmul.f32 %v3069, %v3077
      %v3093 = vmul.f32 %v3070, %v3077
      %v3094 = vmul.f32 %v3071, %v3077
      %v3095 = vld [vmem:[%s8] sm:$0x1]
      %v3097 = vlaneseq
      %v3098 = vshrl.u32 %v3097, 7
      %v3099 = vsub.s32 0, %v3098
      %v3100 = vrot.slane %v3095, %v3099
      %v3102 = vadd.f32 %v3079, %v3100
      %v3103 = vadd.f32 %v3080, %v3100
      %v3104 = vadd.f32 %v3081, %v3100
      %v3105 = vadd.f32 %v3082, %v3100
      %v3106 = vadd.f32 %v3083, %v3100
      %v3107 = vadd.f32 %v3084, %v3100
      %v3108 = vadd.f32 %v3085, %v3100
      %v3109 = vadd.f32 %v3086, %v3100
      %v3110 = vadd.f32 %v3087, %v3100
      %v3111 = vadd.f32 %v3088, %v3100
      %v3112 = vadd.f32 %v3089, %v3100
      %v3113 = vadd.f32 %v3090, %v3100
      %v3114 = vadd.f32 %v3091, %v3100
      %v3115 = vadd.f32 %v3092, %v3100
      %v3116 = vadd.f32 %v3093, %v3100
      %v3117 = vadd.f32 %v3094, %v3100
      %v3118 = vmax.f32 %v3102, 0.0
      %v3119 = vmax.f32 %v3103, 0.0
      %v3120 = vmax.f32 %v3104, 0.0
      %v3121 = vmax.f32 %v3105, 0.0
      %v3122 = vmax.f32 %v3106, 0.0
      %v3123 = vmax.f32 %v3107, 0.0
      %v3124 = vmax.f32 %v3108, 0.0
      %v3125 = vmax.f32 %v3109, 0.0
      %v3126 = vmax.f32 %v3110, 0.0
      %v3127 = vmax.f32 %v3111, 0.0
      %v3128 = vmax.f32 %v3112, 0.0
      %v3129 = vmax.f32 %v3113, 0.0
      %v3130 = vmax.f32 %v3114, 0.0
      %v3131 = vmax.f32 %v3115, 0.0
      %v3132 = vmax.f32 %v3116, 0.0
      %v3133 = vmax.f32 %v3117, 0.0
      %v3134 = vpack.c.bf16 %v3119, %v3118
      %v3135 = vpack.c.bf16 %v3121, %v3120
      %v3136 = vpack.c.bf16 %v3123, %v3122
      %v3137 = vpack.c.bf16 %v3125, %v3124
      %v3138 = vpack.c.bf16 %v3127, %v3126
      %v3139 = vpack.c.bf16 %v3129, %v3128
      %v3140 = vpack.c.bf16 %v3131, %v3130
      %v3141 = vpack.c.bf16 %v3133, %v3132
      %v3142 = vld [vmem:[%s9] sm:$0xf]
      %v3143 = vld [vmem:[%s9 + $0x4] sm:$0xf]
      %v3144 = vld [vmem:[%s9 + $0x8] sm:$0xf]
      %v3145 = vld [vmem:[%s9 + $0xc] sm:$0xf]
      %v3146 = vld [vmem:[%s9 + $0x10] sm:$0xf]
      %v3147 = vld [vmem:[%s9 + $0x14] sm:$0xf]
      %v3148 = vld [vmem:[%s9 + $0x18] sm:$0xf]
      %v3149 = vld [vmem:[%s9 + $0x1c] sm:$0xf]
      %v3150 = vld [vmem:[%s9 + $0x20] sm:$0xf]
      %v3151 = vld [vmem:[%s9 + $0x24] sm:$0xf]
      %v3152 = vld [vmem:[%s9 + $0x28] sm:$0xf]
      %v3153 = vld [vmem:[%s9 + $0x2c] sm:$0xf]
      %v3154 = vld [vmem:[%s9 + $0x30] sm:$0xf]
      %v3155 = vld [vmem:[%s9 + $0x34] sm:$0xf]
      %v3156 = vld [vmem:[%s9 + $0x38] sm:$0xf]
      %v3157 = vld [vmem:[%s9 + $0x3c] sm:$0xf]
      %v3174 = vunpack.c.l.b16 %v3142
      %v3175 = vunpack.c.l.b16 %v3143
      %v3176 = vunpack.c.l.b16 %v3144
      %v3177 = vunpack.c.l.b16 %v3145
      %v3178 = vunpack.c.l.b16 %v3146
      %v3179 = vunpack.c.l.b16 %v3147
      %v3180 = vunpack.c.l.b16 %v3148
      %v3181 = vunpack.c.l.b16 %v3149
      %v3182 = vunpack.c.l.b16 %v3150
      %v3183 = vunpack.c.l.b16 %v3151
      %v3184 = vunpack.c.l.b16 %v3152
      %v3185 = vunpack.c.l.b16 %v3153
      %v3186 = vunpack.c.l.b16 %v3154
      %v3187 = vunpack.c.l.b16 %v3155
      %v3188 = vunpack.c.l.b16 %v3156
      %v3189 = vunpack.c.l.b16 %v3157
      %v3190 = vpack.c.b16 %v3175, %v3174
      %v3191 = vpack.c.b16 %v3177, %v3176
      %v3192 = vpack.c.b16 %v3179, %v3178
      %v3193 = vpack.c.b16 %v3181, %v3180
      %v3194 = vpack.c.b16 %v3183, %v3182
      %v3195 = vpack.c.b16 %v3185, %v3184
      %v3196 = vpack.c.b16 %v3187, %v3186
      %v3197 = vpack.c.b16 %v3189, %v3188
      %3206 = vmatprep.subr.bf16.mxu0 0
      %3207 = vmatpush1.bf16.msra.mxu0 %v3190
      %3208 = vmatprep.subr.bf16.mxu0 0
      %3209 = vmatpush1.bf16.msra.mxu0 %v3191
      %3210 = vmatprep.subr.bf16.mxu0 0
      %3211 = vmatpush1.bf16.msra.mxu0 %v3192
      %3212 = vmatprep.subr.bf16.mxu0 0
      %3213 = vmatpush1.bf16.msra.mxu0 %v3193
      %3214 = vmatprep.subr.bf16.mxu0 0
      %3215 = vmatpush1.bf16.msra.mxu0 %v3194
      %3216 = vmatprep.subr.bf16.mxu0 0
      %3217 = vmatpush1.bf16.msra.mxu0 %v3195
      %3218 = vmatprep.subr.bf16.mxu0 0
      %3219 = vmatpush1.bf16.msra.mxu0 %v3196
      %3220 = vmatprep.subr.bf16.mxu0 0
      %3221 = vmatpush1.bf16.msra.mxu0 %v3197
      %3222 = vmatprep.subr.bf16.mxu0 0
      %3223 = vmatpush1.bf16.msra.mxu0 0
      %3224 = vmatprep.subr.bf16.mxu0 0
      %3225 = vmatpush1.bf16.msra.mxu0 0
      %3226 = vmatprep.subr.bf16.mxu0 0
      %3227 = vmatpush1.bf16.msra.mxu0 0
      %3228 = vmatprep.subr.bf16.mxu0 0
      %3229 = vmatpush1.bf16.msra.mxu0 0
      %3230 = vmatprep.subr.bf16.mxu0 0
      %3231 = vmatpush1.bf16.msra.mxu0 0
      %3232 = vmatprep.subr.bf16.mxu0 0
      %3233 = vmatpush1.bf16.msra.mxu0 0
      %3234 = vmatprep.subr.bf16.mxu0 0
      %3235 = vmatpush1.bf16.msra.mxu0 0
      %3236 = vmatprep.subr.bf16.mxu0 0
      %3237 = vmatpush1.bf16.msra.mxu0 0
      %3238 = vmatprep.mubr.bf16.mxu0 0
      %3239 = vmatmul.mubr.bf16.gmra.mrb[0].mxu0 %v3134
      %v3240 = vpop.f32.mrb[0].mxu0
      %v3241 = vadd.f32 0.0, %v3240
      %v3242 = vpop.f32.mrb[0].mxu0
      %v3243 = vpop.f32.mrb[0].mxu0
      %v3244 = vadd.f32 0.0, %v3243
      %v3245 = vpop.f32.mrb[0].mxu0
      %3246 = vmatprep.mubr.bf16.mxu0 0
      %3247 = vmatmul.mubr.bf16.gmra.mrb[0].mxu0 %v3135
      %v3248 = vpop.f32.mrb[0].mxu0
      %v3249 = vadd.f32 0.0, %v3248
      %v3250 = vpop.f32.mrb[0].mxu0
      %v3251 = vpop.f32.mrb[0].mxu0
      %v3252 = vadd.f32 0.0, %v3251
      %v3253 = vpop.f32.mrb[0].mxu0
      %3254 = vmatprep.mubr.bf16.mxu0 0
      %3255 = vmatmul.mubr.bf16.gmra.mrb[0].mxu0 %v3136
      %v3256 = vpop.f32.mrb[0].mxu0
      %v3257 = vadd.f32 0.0, %v3256
      %v3258 = vpop.f32.mrb[0].mxu0
      %v3259 = vpop.f32.mrb[0].mxu0
      %v3260 = vadd.f32 0.0, %v3259
      %v3261 = vpop.f32.mrb[0].mxu0
      %3262 = vmatprep.mubr.bf16.mxu0 0
      %3263 = vmatmul.mubr.bf16.gmra.mrb[0].mxu0 %v3137
      %v3264 = vpop.f32.mrb[0].mxu0
      %v3265 = vadd.f32 0.0, %v3264
      %v3266 = vpop.f32.mrb[0].mxu0
      %v3267 = vpop.f32.mrb[0].mxu0
      %v3268 = vadd.f32 0.0, %v3267
      %v3269 = vpop.f32.mrb[0].mxu0
      %3270 = vmatprep.mubr.bf16.mxu0 0
      %3271 = vmatmul.mubr.bf16.gmra.mrb[0].mxu0 %v3138
      %v3272 = vpop.f32.mrb[0].mxu0
      %v3273 = vadd.f32 0.0, %v3272
      %v3274 = vpop.f32.mrb[0].mxu0
      %v3275 = vpop.f32.mrb[0].mxu0
      %v3276 = vadd.f32 0.0, %v3275
      %v3277 = vpop.f32.mrb[0].mxu0
      %3278 = vmatprep.mubr.bf16.mxu0 0
      %3279 = vmatmul.mubr.bf16.gmra.mrb[0].mxu0 %v3139
      %v3280 = vpop.f32.mrb[0].mxu0
      %v3281 = vadd.f32 0.0, %v3280
      %v3282 = vpop.f32.mrb[0].mxu0
      %v3283 = vpop.f32.mrb[0].mxu0
      %v3284 = vadd.f32 0.0, %v3283
      %v3285 = vpop.f32.mrb[0].mxu0
      %3286 = vmatprep.mubr.bf16.mxu0 0
      %3287 = vmatmul.mubr.bf16.gmra.mrb[0].mxu0 %v3140
      %v3288 = vpop.f32.mrb[0].mxu0
      %v3289 = vadd.f32 0.0, %v3288
      %v3290 = vpop.f32.mrb[0].mxu0
      %v3291 = vpop.f32.mrb[0].mxu0
      %v3292 = vadd.f32 0.0, %v3291
      %v3293 = vpop.f32.mrb[0].mxu0
      %3294 = vmatprep.mubr.bf16.mxu0 0
      %3295 = vmatmul.mubr.bf16.gmra.mrb[0].mxu0 %v3141
      %v3296 = vpop.f32.mrb[0].mxu0
      %v3297 = vadd.f32 0.0, %v3296
      %v3298 = vpop.f32.mrb[0].mxu0
      %v3299 = vpop.f32.mrb[0].mxu0
      %v3300 = vadd.f32 0.0, %v3299
      %v3301 = vpop.f32.mrb[0].mxu0
      %3302 = vdwg.mxu0
      %v3303 = vld [vmem:[%s10] sm:$0x1]
      %v3305 = vlaneseq
      %v3306 = vshrl.u32 %v3305, 7
      %v3307 = vsub.s32 0, %v3306
      %v3308 = vrot.slane %v3303, %v3307
      %v3310 = vmul.f32 %v3241, %v3308
      %v3311 = vmul.f32 %v3244, %v3308
      %v3312 = vmul.f32 %v3249, %v3308
      %v3313 = vmul.f32 %v3252, %v3308
      %v3314 = vmul.f32 %v3257, %v3308
      %v3315 = vmul.f32 %v3260, %v3308
      %v3316 = vmul.f32 %v3265, %v3308
      %v3317 = vmul.f32 %v3268, %v3308
      %v3318 = vmul.f32 %v3273, %v3308
      %v3319 = vmul.f32 %v3276, %v3308
      %v3320 = vmul.f32 %v3281, %v3308
      %v3321 = vmul.f32 %v3284, %v3308
      %v3322 = vmul.f32 %v3289, %v3308
      %v3323 = vmul.f32 %v3292, %v3308
      %v3324 = vmul.f32 %v3297, %v3308
      %v3325 = vmul.f32 %v3300, %v3308
      %v3326 = vld [vmem:[%s11] sm:$0x1]
      %v3328 = vlaneseq
      %v3329 = vshrl.u32 %v3328, 7
      %v3330 = vsub.s32 0, %v3329
      %v3331 = vrot.slane %v3326, %v3330
      %v3333 = vadd.f32 %v3310, %v3331
      %v3334 = vadd.f32 %v3311, %v3331
      %v3335 = vadd.f32 %v3312, %v3331
      %v3336 = vadd.f32 %v3313, %v3331
      %v3337 = vadd.f32 %v3314, %v3331
      %v3338 = vadd.f32 %v3315, %v3331
      %v3339 = vadd.f32 %v3316, %v3331
      %v3340 = vadd.f32 %v3317, %v3331
      %v3341 = vadd.f32 %v3318, %v3331
      %v3342 = vadd.f32 %v3319, %v3331
      %v3343 = vadd.f32 %v3320, %v3331
      %v3344 = vadd.f32 %v3321, %v3331
      %v3345 = vadd.f32 %v3322, %v3331
      %v3346 = vadd.f32 %v3323, %v3331
      %v3347 = vadd.f32 %v3324, %v3331
      %v3348 = vadd.f32 %v3325, %v3331
      %v3349 = vadd.f32 %v3333, %v587
      %v3350 = vadd.f32 %v3334, %v588
      %v3351 = vadd.f32 %v3335, %v589
      %v3352 = vadd.f32 %v3336, %v590
      %v3353 = vadd.f32 %v3337, %v591
      %v3354 = vadd.f32 %v3338, %v592
      %v3355 = vadd.f32 %v3339, %v593
      %v3356 = vadd.f32 %v3340, %v594
      %v3357 = vadd.f32 %v3341, %v595
      %v3358 = vadd.f32 %v3342, %v596
      %v3359 = vadd.f32 %v3343, %v597
      %v3360 = vadd.f32 %v3344, %v598
      %v3361 = vadd.f32 %v3345, %v599
      %v3362 = vadd.f32 %v3346, %v600
      %v3363 = vadd.f32 %v3347, %v601
      %v3364 = vadd.f32 %v3348, %v602
      %v3365 = vmax.f32 %v3349, 0.0
      %v3366 = vmax.f32 %v3350, 0.0
      %v3367 = vmax.f32 %v3351, 0.0
      %v3368 = vmax.f32 %v3352, 0.0
      %v3369 = vmax.f32 %v3353, 0.0
      %v3370 = vmax.f32 %v3354, 0.0
      %v3371 = vmax.f32 %v3355, 0.0
      %v3372 = vmax.f32 %v3356, 0.0
      %v3373 = vmax.f32 %v3357, 0.0
      %v3374 = vmax.f32 %v3358, 0.0
      %v3375 = vmax.f32 %v3359, 0.0
      %v3376 = vmax.f32 %v3360, 0.0
      %v3377 = vmax.f32 %v3361, 0.0
      %v3378 = vmax.f32 %v3362, 0.0
      %v3379 = vmax.f32 %v3363, 0.0
      %v3380 = vmax.f32 %v3364, 0.0
      %3381 = vst [vmem:[%s580] sm:$0xff] %v3365
      %3382 = vst [vmem:[%s580 + $0x8] sm:$0xff] %v3366
      %3383 = vst [vmem:[%s580 + $0x10] sm:$0xff] %v3367
      %3384 = vst [vmem:[%s580 + $0x18] sm:$0xff] %v3368
      %3385 = vst [vmem:[%s580 + $0x20] sm:$0xff] %v3369
      %3386 = vst [vmem:[%s580 + $0x28] sm:$0xff] %v3370
      %3387 = vst [vmem:[%s580 + $0x30] sm:$0xff] %v3371
      %3388 = vst [vmem:[%s580 + $0x38] sm:$0xff] %v3372
      %3389 = vst [vmem:[%s580 + $0x40] sm:$0xff] %v3373
      %3390 = vst [vmem:[%s580 + $0x48] sm:$0xff] %v3374
      %3391 = vst [vmem:[%s580 + $0x50] sm:$0xff] %v3375
      %3392 = vst [vmem:[%s580 + $0x58] sm:$0xff] %v3376
      %3393 = vst [vmem:[%s580 + $0x60] sm:$0xff] %v3377
      %3394 = vst [vmem:[%s580 + $0x68] sm:$0xff] %v3378
      %3395 = vst [vmem:[%s580 + $0x70] sm:$0xff] %v3379
      %3396 = vst [vmem:[%s580 + $0x78] sm:$0xff] %v3380
      %s3397 = smul.u32 8, %s28
      %p3398 = scmp.lt.s32.totalorder %s27, 1
      %s3399 = scalar_select %p3398, %s27, 1
      %p3400 = scmp.lt.s32.totalorder %s3397, 15
      %s3401 = scalar_select %p3400, %s3397, 15
      %s3402 = smul.addr %s3401, 2
      %s3403 = smul.addr %s3399, 32
      %s3404 = sadd.s32 %s3402, %s3403
      %s3405 = smul.addr %s3404, 8
      %s3406 = scalar_lea.vmem %s12, %s3405
      // Predicated region
      $region69: #{bottleneck_forward.1} parent=67 // pred_check
        %p3407 = pneg %p344
      $region70: #{bottleneck_forward.1} parent=67 // pred_check_branch
        %3409 = sbr.rel (%p3407) target = $region72
      $region71: #{bottleneck_forward.1} parent=67 // pred_region
        %s3410 = smul.u32 8, %s28
      $region72: #{bottleneck_forward.1} parent=67 // pred_fallthru
        _
    $region68: #{bottleneck_forward.1} parent=5 // pred_fallthru
      _
    %p3411 = scmp.le.s32.totalorder 2, %s18
    // Predicated region
    $region73: #{bottleneck_forward.1} parent=5 // pred_check
      %p3412 = pneg %p3411
    $region74: #{bottleneck_forward.1} parent=5 // pred_check_branch
      %3414 = sbr.rel (%p3412) target = $region76
    $region75: #{bottleneck_forward.1} parent=5 // pred_region
      %s3415 = ssub.s32 %s18, 2
      // Predicated region
      $region77: #{bottleneck_forward.1} parent=75 // pred_check
        %p3416 = pneg %p350
      $region78: #{bottleneck_forward.1} parent=75 // pred_check_branch
        %3418 = sbr.rel (%p3416) target = $region80
      $region79: #{bottleneck_forward.1} parent=75 // pred_region
        %s3419 = smul.u32 8, %s30
        %p3420 = scmp.lt.s32.totalorder %s29, 1
        %s3421 = scalar_select %p3420, %s29, 1
        %p3422 = scmp.lt.s32.totalorder %s3419, 15
        %s3423 = scalar_select %p3422, %s3419, 15
        %s3424 = smul.addr %s3423, 2
        %s3425 = smul.addr %s3421, 32
        %s3426 = sadd.s32 %s3424, %s3425
        %s3427 = smul.addr %s3426, 8
        %s3428 = scalar_lea.vmem %s12, %s3427
      $region80: #{bottleneck_forward.1} parent=75 // pred_fallthru
        _
    $region76: #{bottleneck_forward.1} parent=5 // pred_fallthru
      _
  $region6: #{bottleneck_forward.1} parent=0 // loop_footer
    %s22 = sadd.s32 1, %s18
  $region7: #{bottleneck_forward.1} parent=0 // loop_footer_branch
    %17 = sbr.rel target = $region3
  $region8: #{bottleneck_forward.1} parent=0 // loop_exit
    _

</llo_original>
